<compile_context>
chip_gen: v6e
topology: v6e:2x2x1
jax: 0.10.0
libtpu: 0.0.40
codegen_flags: <defaults>
</compile_context>

<pallas_src>
import functools

import numpy as np
import jax
import jax.numpy as jnp
from jax.experimental import pallas as pl
from jax.experimental.pallas import tpu as pltpu


# ---------------------------------------------------------------------------
# Constant-matrix construction (torchaudio defaults: sample_rate=16000,
# n_mels=128, f_min=0, f_max=sr//2, htk mel scale, norm=None, dct norm='ortho',
# power=2.0, AmplitudeToDB('power', top_db=80)).
# ---------------------------------------------------------------------------
def _hann_window(n_fft):
    n = np.arange(n_fft, dtype=np.float64)
    return 0.5 - 0.5 * np.cos(2.0 * np.pi * n / n_fft)


def _windowed_dft_matrix(n_fft, n_freq):
    """(n_fft, 2*n_freq) = [win*cos | -win*sin]; Hann window folded in."""
    win = _hann_window(n_fft)[:, None]
    n = np.arange(n_fft, dtype=np.float64)
    k = np.arange(n_freq, dtype=np.float64)
    angle = 2.0 * np.pi * np.outer(n, k) / float(n_fft)
    re = np.cos(angle) * win
    im = -np.sin(angle) * win
    return np.concatenate([re, im], axis=1).astype(np.float32)


def _mel_filterbank(n_freq_full, n_mels, sample_rate, f_min, f_max):
    def hz_to_mel(f):
        return 2595.0 * np.log10(1.0 + f / 700.0)

    def mel_to_hz(m):
        return 700.0 * (10.0 ** (m / 2595.0) - 1.0)

    all_freqs = np.linspace(0.0, sample_rate // 2, n_freq_full)
    m_pts = np.linspace(hz_to_mel(f_min), hz_to_mel(f_max), n_mels + 2)
    f_pts = mel_to_hz(m_pts)
    f_diff = f_pts[1:] - f_pts[:-1]
    slopes = f_pts[None, :] - all_freqs[:, None]
    down = (-1.0 * slopes[:, :-2]) / f_diff[:-1]
    up = slopes[:, 2:] / f_diff[1:]
    fb = np.maximum(0.0, np.minimum(down, up))
    return fb.astype(np.float32)                     # (n_freq_full, n_mels)


def _dct_matrix(n_mfcc, n_mels):
    n = np.arange(n_mels, dtype=np.float64)
    k = np.arange(n_mfcc, dtype=np.float64)[:, None]
    dct = np.cos(np.pi / float(n_mels) * (n + 0.5) * k)   # (n_mfcc, n_mels)
    dct[0] *= 1.0 / np.sqrt(2.0)
    dct *= np.sqrt(2.0 / float(n_mels))
    return dct.T.astype(np.float32)                  # (n_mels, n_mfcc)


def _frame_signal(audio_2d, n_fft, hop_length):
    # audio_2d: (B, T); torch.stft(center=True, pad_mode="reflect").
    pad = n_fft // 2
    padded = jnp.pad(audio_2d, ((0, 0), (pad, pad)), mode="reflect")
    T = audio_2d.shape[-1]
    n_frames = 1 + T // hop_length
    idx = (jnp.arange(n_frames)[:, None] * hop_length
           + jnp.arange(n_fft)[None, :])
    return padded[:, idx]                             # (B, n_frames, n_fft)


# ---------------------------------------------------------------------------
# Pallas kernel: one tile of Bt packed batch items (Bt*F_pad flat rows) per step.
# ---------------------------------------------------------------------------
def _mfcc_erosion_kernel(frames_ref, dft_ref, mel_ref, dct_ref, tag_ref, out_ref,
                         *, n_items, n_freq, ksize, top_db):
    rows = frames_ref.shape[0]                        # Bt * F_pad (static)

    # One-sided windowed DFT: single bf16 matmul against [win*cos | -win*sin].
    y = jnp.dot(frames_ref[...], dft_ref[...],
                preferred_element_type=jnp.float32)   # (rows, 2*n_freq) f32
    re = y[:, :n_freq]
    im = y[:, n_freq:]
    power = re * re + im * im                         # (rows, n_freq), power=2.0

    # Mel filterbank (bf16 operands, f32 accumulate).
    mel = jnp.dot(power.astype(jnp.bfloat16), mel_ref[...],
                  preferred_element_type=jnp.float32)  # (rows, n_mels)

    # AmplitudeToDB('power'): 10*log10(clamp(x, 1e-10)), then per-item top_db
    # clamp (max taken over each batch item's own (F, n_mels) rows only).
    db = 10.0 * jnp.log10(jnp.maximum(mel, 1e-10))

    tag = tag_ref[...]                                # (rows, 1) i32; -1 = pad frame
    row_max = jnp.max(db, axis=1, keepdims=True)      # (rows, 1)
    floor = jnp.full((rows, 1), -jnp.inf, dtype=jnp.float32)
    for item in range(n_items):
        in_item = tag == item
        item_max = jnp.max(jnp.where(in_item, row_max, -jnp.inf))
        floor = jnp.where(in_item, item_max - top_db, floor)
    db = jnp.maximum(db, floor)

    # DCT-II (ortho) -> MFCC, (rows, n_mfcc).  Kept f32 (tiny matmul).
    mfcc = jnp.dot(db, dct_ref[...], preferred_element_type=jnp.float32)

    # "Erosion" = max_pool1d over time frames (kernel=ksize, stride=1,
    # padding=ksize//2).  Masked with the item tag so it never reads across
    # packed-item boundaries or from zero-padded frame rows.
    out = mfcc
    pad = ksize // 2
    if pad > 0:
        n_c = mfcc.shape[1]
        neg = jnp.full((pad, n_c), -jnp.inf, dtype=mfcc.dtype)
        sentinel = jnp.full((pad, 1), -2, dtype=jnp.int32)
        mfcc_p = jnp.concatenate([neg, mfcc, neg], axis=0)      # (rows+2*pad, n_c)
        tag_p = jnp.concatenate([sentinel, tag, sentinel], axis=0)
        for off in range(-pad, pad + 1):
            if off == 0:
                continue
            shifted = mfcc_p[pad + off:pad + off + rows, :]
            tag_nb = tag_p[pad + off:pad + off + rows, :]
            valid = tag_nb == tag                               # (rows, 1) bool
            out = jnp.maximum(out, jnp.where(valid, shifted, -jnp.inf))

    out_ref[...] = out


# ---------------------------------------------------------------------------
# Wrapper (module equivalent).
# ---------------------------------------------------------------------------
def mfcc_erosion(audio_signal, seed=0, *, n_mfcc=13, n_fft=1024, hop_length=512,
                 erosion_kernel_size=3, sample_rate=16000, n_mels=128,
                 top_db=80.0):
    del seed  # torch.manual_seed has no effect on this deterministic pipeline.

    B, _, T = audio_signal.shape
    x = audio_signal.reshape(B, T).astype(jnp.float32)

    # TODO(synk): for very long audio, frame inside the kernel from the padded
    # signal (pl.ds with hop strides) to avoid the 2x HBM traffic of overlapping
    # frames, and tile F with a halo + two-pass top_db max.
    frames = _frame_signal(x, n_fft, hop_length)      # (B, F, n_fft)
    F = frames.shape[1]
    F_pad = -(-F // 8) * 8                            # frames per item, 8-aligned
    n_freq = n_fft // 2                               # Nyquist dropped (mel wt == 0)

    # Batch tile: pack ~256 matmul rows per grid step, but keep >= 2 grid steps
    # when B >= 2 so both v7x TensorCores get work.
    Bt = min(B, max(1, 256 // F_pad))
    if B >= 2 and -(-B // Bt) < 2:
        Bt = (B + 1) // 2
    B_pad = -(-B // Bt) * Bt
    num_tiles = B_pad // Bt
    rows_per_tile = Bt * F_pad
    total_rows = B_pad * F_pad

    frames = jnp.pad(frames, ((0, B_pad - B), (0, F_pad - F), (0, 0)))
    frames_flat = frames.reshape(total_rows, n_fft).astype(jnp.bfloat16)

    dft = jnp.asarray(_windowed_dft_matrix(n_fft, n_freq), dtype=jnp.bfloat16)
    mel_full = _mel_filterbank(n_fft // 2 + 1, n_mels, sample_rate, 0.0,
                               float(sample_rate // 2))
    mel_fb = jnp.asarray(mel_full[:n_freq], dtype=jnp.bfloat16)  # drop zero Nyquist row
    dct_mat = jnp.asarray(_dct_matrix(n_mfcc, n_mels))           # f32

    # Per-row item tag, identical for every grid tile: local item index for real
    # frames, -1 for zero-padded frame rows.
    tag_np = np.full((Bt, F_pad), -1, dtype=np.int32)
    tag_np[:, :F] = np.arange(Bt, dtype=np.int32)[:, None]
    tag = jnp.asarray(tag_np.reshape(rows_per_tile, 1))

    kernel = functools.partial(_mfcc_erosion_kernel, n_items=Bt, n_freq=n_freq,
                               ksize=erosion_kernel_size, top_db=top_db)

    flops = (2 * total_rows * n_fft * (2 * n_freq)
             + 2 * total_rows * n_freq * n_mels
             + 2 * total_rows * n_mels * n_mfcc)
    bytes_accessed = (total_rows * n_fft * 2 + dft.size * 2 + mel_fb.size * 2
                      + dct_mat.size * 4 + rows_per_tile * 4
                      + total_rows * n_mfcc * 4)

    out_flat = pl.pallas_call(
        kernel,
        out_shape=jax.ShapeDtypeStruct((total_rows, n_mfcc), jnp.float32),
        grid=(num_tiles,),
        in_specs=[
            pl.BlockSpec((rows_per_tile, n_fft), lambda i: (i, 0)),   # frames (bf16)
            pl.BlockSpec((n_fft, 2 * n_freq), lambda i: (0, 0)),      # windowed DFT (bf16)
            pl.BlockSpec((n_freq, n_mels), lambda i: (0, 0)),         # mel fb (bf16)
            pl.BlockSpec((n_mels, n_mfcc), lambda i: (0, 0)),         # DCT (f32)
            pl.BlockSpec((rows_per_tile, 1), lambda i: (0, 0)),       # item tag (i32)
        ],
        out_specs=pl.BlockSpec((rows_per_tile, n_mfcc), lambda i: (i, 0)),
        compiler_params=pltpu.CompilerParams(
            dimension_semantics=("parallel",),
            vmem_limit_bytes=32 * 1024 * 1024),
        cost_estimate=pl.CostEstimate(flops=flops,
                                      transcendentals=total_rows * n_mels,
                                      bytes_accessed=bytes_accessed),
    )(frames_flat, dft, mel_fb, dct_mat, tag)

    # (B_pad*F_pad, n_mfcc) -> (B, 1, n_mfcc, F): torchaudio MFCC output layout.
    # TODO(synk): for F >= 128, emit a lane-dense (n_mfcc, F) block from the kernel
    # instead of this wrapper-side transpose.
    out = out_flat.reshape(B_pad, F_pad, n_mfcc)[:B, :F, :]
    return jnp.transpose(out, (0, 2, 1))[:, None, :, :]


if __name__ == "__main__":
    key = jax.random.PRNGKey(0)
    B, T = 2, 4096  # (batch, 1, time_steps); F = 1 + T // 512 = 9 frames
    audio = jax.random.normal(key, (B, 1, T), dtype=jnp.float32)

    eroded = mfcc_erosion(audio, seed=0)
    eroded = jax.block_until_ready(eroded)

    assert eroded.shape == (B, 1, 13, 1 + T // 512), eroded.shape
    assert eroded.dtype == jnp.float32
    assert bool(jnp.all(jnp.isfinite(eroded)))
    print("KERNEL_OK")
</pallas_src>

<mosaic_0001>
module attributes {stable_mosaic.version = 11 : i64} {
  func.func @_mfcc_erosion_kernel(%arg0: i32, %arg1: memref<16x1024xbf16, #tpu.memory_space<vmem>>, %arg2: memref<1024x1024xbf16, #tpu.memory_space<vmem>>, %arg3: memref<512x128xbf16, #tpu.memory_space<vmem>>, %arg4: memref<128x13xf32, #tpu.memory_space<vmem>>, %arg5: memref<16x1xi32, #tpu.memory_space<vmem>>, %arg6: memref<16x13xf32, #tpu.memory_space<vmem>>) attributes {dimension_semantics = [#tpu.dimension_semantics<parallel>], iteration_bounds = array<i64: 2>, scalar_prefetch = 0 : i64, scratch_operands = 0 : i64, tpu.core_type = #tpu.core_type<tc>, window_params = [{transform_indices = @transform_0, window_bounds = array<i64: 16, 1024>}, {pipeline_mode = #tpu.pipeline_mode<synchronous>, transform_indices = @transform_1, window_bounds = array<i64: 1024, 1024>}, {pipeline_mode = #tpu.pipeline_mode<synchronous>, transform_indices = @transform_2, window_bounds = array<i64: 512, 128>}, {pipeline_mode = #tpu.pipeline_mode<synchronous>, transform_indices = @transform_3, window_bounds = array<i64: 128, 13>}, {pipeline_mode = #tpu.pipeline_mode<synchronous>, transform_indices = @transform_4, window_bounds = array<i64: 16, 1>}, {transform_indices = @transform_5, window_bounds = array<i64: 16, 13>}]} {
    %c0 = arith.constant 0 : index
    %c0_0 = arith.constant 0 : index
    %0 = vector.load %arg1[%c0, %c0_0] : memref<16x1024xbf16, #tpu.memory_space<vmem>>, vector<16x1024xbf16>
    %c0_1 = arith.constant 0 : index
    %c0_2 = arith.constant 0 : index
    %1 = vector.load %arg2[%c0_1, %c0_2] : memref<1024x1024xbf16, #tpu.memory_space<vmem>>, vector<1024x1024xbf16>
    %cst = arith.constant dense<0.000000e+00> : vector<16x1024xf32>
    %2 = tpu.matmul %0, %1, %cst {dimension_numbers = #tpu.dot_dimension_numbers<[1], [0], [0], [1], [0, 0, 1, 1], [], []>} : vector<16x1024xbf16>, vector<1024x1024xbf16>, vector<16x1024xf32> -> vector<16x1024xf32>
    %3 = vector.extract_strided_slice %2 {offsets = [0, 0], sizes = [16, 512], strides = [1, 1]} : vector<16x1024xf32> to vector<16x512xf32>
    %4 = vector.extract_strided_slice %2 {offsets = [0, 512], sizes = [16, 512], strides = [1, 1]} : vector<16x1024xf32> to vector<16x512xf32>
    %5 = arith.mulf %3, %3 : vector<16x512xf32>
    %6 = arith.mulf %4, %4 : vector<16x512xf32>
    %7 = arith.addf %5, %6 : vector<16x512xf32>
    %8 = arith.truncf %7 : vector<16x512xf32> to vector<16x512xbf16>
    %c0_3 = arith.constant 0 : index
    %c0_4 = arith.constant 0 : index
    %9 = vector.load %arg3[%c0_3, %c0_4] : memref<512x128xbf16, #tpu.memory_space<vmem>>, vector<512x128xbf16>
    %cst_5 = arith.constant dense<0.000000e+00> : vector<16x128xf32>
    %10 = tpu.matmul %8, %9, %cst_5 {dimension_numbers = #tpu.dot_dimension_numbers<[1], [0], [0], [1], [0, 0, 1, 1], [], []>} : vector<16x512xbf16>, vector<512x128xbf16>, vector<16x128xf32> -> vector<16x128xf32>
    %cst_6 = arith.constant 1.000000e-10 : f32
    %11 = vector.broadcast %cst_6 : f32 to vector<16x128xf32>
    %12 = arith.maximumf %10, %11 : vector<16x128xf32>
    %13 = math.log %12 : vector<16x128xf32>
    %cst_7 = arith.constant 0.434294492 : f32
    %14 = vector.broadcast %cst_7 : f32 to vector<16x128xf32>
    %15 = arith.mulf %13, %14 : vector<16x128xf32>
    %cst_8 = arith.constant 1.000000e+01 : f32
    %16 = vector.broadcast %cst_8 : f32 to vector<16x128xf32>
    %17 = arith.mulf %16, %15 : vector<16x128xf32>
    %c0_9 = arith.constant 0 : index
    %c0_10 = arith.constant 0 : index
    %18 = vector.load %arg5[%c0_9, %c0_10] : memref<16x1xi32, #tpu.memory_space<vmem>>, vector<16x1xi32>
    %cst_11 = arith.constant dense<0xFF800000> : vector<16xf32>
    %19 = vector.multi_reduction <maximumf>, %17, %cst_11 [1] : vector<16x128xf32> to vector<16xf32>
    %20 = vector.shape_cast %19 : vector<16xf32> to vector<16x1xf32>
    %cst_12 = arith.constant 0xFF800000 : f32
    %21 = vector.broadcast %cst_12 : f32 to vector<16x1xf32>
    %c0_i32 = arith.constant 0 : i32
    %22 = vector.broadcast %c0_i32 : i32 to vector<16x1xi32>
    %23 = arith.cmpi eq, %18, %22 : vector<16x1xi32>
    %cst_13 = arith.constant 0xFF800000 : f32
    %24 = vector.broadcast %cst_13 : f32 to vector<16x1xf32>
    %25 = arith.select %23, %20, %24 : vector<16x1xi1>, vector<16x1xf32>
    %26 = vector.shape_cast %25 : vector<16x1xf32> to vector<1x16x1xf32>
    %cst_14 = arith.constant dense<0xFF800000> : vector<1xf32>
    %27 = vector.multi_reduction <maximumf>, %26, %cst_14 [1, 2] : vector<1x16x1xf32> to vector<1xf32>
    %28 = vector.shape_cast %27 : vector<1xf32> to vector<1x1x1xf32>
    %29 = vector.extract %28[0, 0, 0] : f32 from vector<1x1x1xf32>
    %cst_15 = arith.constant 8.000000e+01 : f32
    %30 = arith.subf %29, %cst_15 : f32
    %31 = vector.broadcast %30 : f32 to vector<16x1xf32>
    %32 = arith.select %23, %31, %21 : vector<16x1xi1>, vector<16x1xf32>
    %33 = vector.broadcast %32 : vector<16x1xf32> to vector<16x128xf32>
    %34 = arith.maximumf %17, %33 : vector<16x128xf32>
    %c0_16 = arith.constant 0 : index
    %c0_17 = arith.constant 0 : index
    %35 = vector.load %arg4[%c0_16, %c0_17] : memref<128x13xf32, #tpu.memory_space<vmem>>, vector<128x13xf32>
    %cst_18 = arith.constant dense<0.000000e+00> : vector<16x13xf32>
    %36 = tpu.matmul %34, %35, %cst_18 {dimension_numbers = #tpu.dot_dimension_numbers<[1], [0], [0], [1], [0, 0, 1, 1], [], []>} : vector<16x128xf32>, vector<128x13xf32>, vector<16x13xf32> -> vector<16x13xf32>
    %cst_19 = arith.constant 0xFF800000 : f32
    %37 = vector.broadcast %cst_19 : f32 to vector<1x13xf32>
    %c-2_i32 = arith.constant -2 : i32
    %38 = vector.broadcast %c-2_i32 : i32 to vector<1x1xi32>
    %39 = tpu.concatenate %37, %36, %37 in 0 : vector<1x13xf32>, vector<16x13xf32>, vector<1x13xf32> -> vector<18x13xf32>
    %40 = tpu.concatenate %38, %18, %38 in 0 : vector<1x1xi32>, vector<16x1xi32>, vector<1x1xi32> -> vector<18x1xi32>
    %41 = vector.extract_strided_slice %39 {offsets = [0, 0], sizes = [16, 13], strides = [1, 1]} : vector<18x13xf32> to vector<16x13xf32>
    %42 = vector.extract_strided_slice %40 {offsets = [0, 0], sizes = [16, 1], strides = [1, 1]} : vector<18x1xi32> to vector<16x1xi32>
    %43 = arith.cmpi eq, %42, %18 : vector<16x1xi32>
    %cst_20 = arith.constant 0xFF800000 : f32
    %44 = vector.shape_cast %43 : vector<16x1xi1> to vector<16x1xi1>
    %45 = vector.broadcast %44 : vector<16x1xi1> to vector<16x13xi1>
    %46 = vector.broadcast %cst_20 : f32 to vector<16x13xf32>
    %47 = arith.select %45, %41, %46 : vector<16x13xi1>, vector<16x13xf32>
    %48 = arith.maximumf %36, %47 : vector<16x13xf32>
    %49 = vector.extract_strided_slice %39 {offsets = [2, 0], sizes = [16, 13], strides = [1, 1]} : vector<18x13xf32> to vector<16x13xf32>
    %50 = vector.extract_strided_slice %40 {offsets = [2, 0], sizes = [16, 1], strides = [1, 1]} : vector<18x1xi32> to vector<16x1xi32>
    %51 = arith.cmpi eq, %50, %18 : vector<16x1xi32>
    %cst_21 = arith.constant 0xFF800000 : f32
    %52 = vector.shape_cast %51 : vector<16x1xi1> to vector<16x1xi1>
    %53 = vector.broadcast %52 : vector<16x1xi1> to vector<16x13xi1>
    %54 = vector.broadcast %cst_21 : f32 to vector<16x13xf32>
    %55 = arith.select %53, %49, %54 : vector<16x13xi1>, vector<16x13xf32>
    %56 = arith.maximumf %48, %55 : vector<16x13xf32>
    %c0_22 = arith.constant 0 : index
    %c0_23 = arith.constant 0 : index
    %57 = vector.load %arg6[%c0_22, %c0_23] : memref<16x13xf32, #tpu.memory_space<vmem>>, vector<16x13xf32>
    tpu.vector_store %arg6[%c0_22, %c0_23], %56 {strides = array<i32>} : memref<16x13xf32, #tpu.memory_space<vmem>>, vector<16x13xf32>,
    return
  }
  func.func @transform_0(%arg0: i32) -> (i32, i32) {
    %c0_i32 = arith.constant 0 : i32
    %c0_i32_0 = arith.constant 0 : i32
    return %arg0, %c0_i32 : i32, i32
  }
  func.func @transform_1(%arg0: i32) -> (i32, i32) {
    %c0_i32 = arith.constant 0 : i32
    %c0_i32_0 = arith.constant 0 : i32
    %c0_i32_1 = arith.constant 0 : i32
    return %c0_i32, %c0_i32_0 : i32, i32
  }
  func.func @transform_2(%arg0: i32) -> (i32, i32) {
    %c0_i32 = arith.constant 0 : i32
    %c0_i32_0 = arith.constant 0 : i32
    %c0_i32_1 = arith.constant 0 : i32
    return %c0_i32, %c0_i32_0 : i32, i32
  }
  func.func @transform_3(%arg0: i32) -> (i32, i32) {
    %c0_i32 = arith.constant 0 : i32
    %c0_i32_0 = arith.constant 0 : i32
    %c0_i32_1 = arith.constant 0 : i32
    return %c0_i32, %c0_i32_0 : i32, i32
  }
  func.func @transform_4(%arg0: i32) -> (i32, i32) {
    %c0_i32 = arith.constant 0 : i32
    %c0_i32_0 = arith.constant 0 : i32
    %c0_i32_1 = arith.constant 0 : i32
    return %c0_i32, %c0_i32_0 : i32, i32
  }
  func.func @transform_5(%arg0: i32) -> (i32, i32) {
    %c0_i32 = arith.constant 0 : i32
    %c0_i32_0 = arith.constant 0 : i32
    return %arg0, %c0_i32 : i32, i32
  }
}

</mosaic_0001>

<llo_original>
// kernel: tpu_custom_call.1
$region0: #{tpu_custom_call.1}
  #allocation0 [shape = 'u32[]', space=smem, size = 0x4, offset = 0x4, fixed_abs, tag = 'smem constant byte address 0x4 - core index']
  #allocation1 [shape = 'u32[144,128]{1,0:T(1,128)}', space=vmem, size = 0x12000, scoped, tag = 'internal scratch']
  %s0 = inlined_call_operand.hbm [shape: bf16[32,1024], index: 0, kind: input, shape index: {}]
  %s1 = inlined_call_operand.hbm [shape: bf16[1024,1024], index: 1, kind: input, shape index: {}]
  %s2 = inlined_call_operand.hbm [shape: bf16[512,128], index: 2, kind: input, shape index: {}]
  %s3 = inlined_call_operand.vmem [shape: f32[128,13], index: 3, kind: input, shape index: {}]
  %s4 = inlined_call_operand.vmem [shape: s32[16,1], index: 4, kind: input, shape index: {}]
  %s5 = inlined_call_operand.vmem [shape: f32[32,13], index: 5, kind: output, shape index: {}]
  %s6 = sld [smem:[#allocation0]]
  $region65: #{tpu_custom_call.1} parent=0
    _
  %s8 = ssub.s32 1, %s6
  %s9 = scalar_select 0, %s8, %s6
  $region1: #{tpu_custom_call.1} parent=0
    #allocation2 [shape = 'u8[65536]{0}', space=vmem, size = 0x10000, scoped, tag = 'input window, operand 0']
    #allocation3 [shape = 's32[2]{0}', space=sflag, size = 0x8, scoped, tag = 'scoped memory for tpu_custom_call.1']
    #allocation4 [shape = 'u8[2097152]{0}', space=vmem, size = 0x200000, scoped, tag = 'input window, operand 1, single buffered']
    #allocation5 [shape = 's32[1]{0}', space=sflag, size = 0x4, scoped, tag = 'scoped memory for tpu_custom_call.1']
    #allocation6 [shape = 'u8[131072]{0}', space=vmem, size = 0x20000, scoped, tag = 'input window, operand 2, single buffered']
    %10 = vsyncpa [#allocation3], 0
    %s11 = scalar_lea.sflag [#allocation3], 1
    %12 = vsyncpa %s11, 0
    %13 = vsyncpa [#allocation5], 0
    loop: start=0, step=1, limit=4
    $region2: #{tpu_custom_call.1} parent=1 // loop_pre_header
      _
    $region3: #{tpu_custom_call.1} parent=1 // loop_header
      %s15 = sphi 0, %s19
      %p16 = scmp.ge.s32.totalorder %s15, 4
      %s25 = sphi 0, %s27
      %s28 = sphi 0, %s25
      %s29 = sphi 0, %s28
      %s45 = sphi 0, %s29
      %s49 = sphi 0, %s49
      %s51 = sphi 0, %s49
      %s52 = sphi 0, %s51
      %s66 = sphi 0, %s52
      %s70 = sphi 0, %s70
      %s72 = sphi 0, %s70
      %s73 = sphi 0, %s72
      %s87 = sphi 0, %s73
      %s91 = sphi 0, %s91
      %s93 = sphi 0, %s91
      %s94 = sphi 0, %s93
      %s108 = sphi 0, %s94
      %s112 = sphi 0, %s112
      %s114 = sphi 0, %s112
      %s115 = sphi 0, %s114
      %s129 = sphi 0, %s115
      %s135 = sphi 0, %s137
      %s138 = sphi 0, %s135
      %s139 = sphi 0, %s138
      %s155 = sphi 0, %s139
    $region4: #{tpu_custom_call.1} parent=1 // loop_header_branch
      %18 = sbr.rel (%p16) target = $region8
    $region5: #{tpu_custom_call.1} parent=1 // loop_body
      %s20 = ssub.s32 %s15, 1
      %s21 = ssub.s32 %s15, 2
      %s22 = sadd.s32 %s15, 1
      %s23 = ssub.s32 %s15, %s22
      %p24 = scmp.eq.s32.totalorder %s23, 0
      %s26 = sadd.s32 %s25, 1
      %s27 = scalar_select %p24, %s25, %s26
      %p30 = pneg %p24
      %p31 = scmp.eq.s32.totalorder %s15, 1
      %p32 = por %p30, %p31
      %p33 = scmp.ne.s32.totalorder %s25, %s28
      %p34 = scmp.eq.s32.totalorder %s15, 0
      %p35 = por %p33, %p34
      %p36 = scmp.ne.s32.totalorder %s25, %s28
      %p37 = scmp.eq.s32.totalorder %s20, 1
      %p38 = por %p36, %p37
      %p39 = scmp.ne.s32.totalorder %s28, %s29
      %p40 = scmp.eq.s32.totalorder %s20, 0
      %p41 = por %p39, %p40
      %p42 = scmp.ne.s32.totalorder %s28, %s29
      %p43 = scmp.eq.s32.totalorder %s21, 1
      %p44 = por %p42, %p43
      %p46 = scmp.ne.s32.totalorder %s29, %s45
      %p47 = scmp.eq.s32.totalorder %s21, 0
      %p48 = por %p46, %p47
      %s50 = sadd.s32 %s49, 1
      %p53 = scmp.eq.s32.totalorder %s15, 1
      %p54 = scmp.ne.s32.totalorder %s49, %s51
      %p55 = scmp.eq.s32.totalorder %s15, 0
      %p56 = por %p54, %p55
      %p57 = scmp.ne.s32.totalorder %s49, %s51
      %p58 = scmp.eq.s32.totalorder %s20, 1
      %p59 = por %p57, %p58
      %p60 = scmp.ne.s32.totalorder %s51, %s52
      %p61 = scmp.eq.s32.totalorder %s20, 0
      %p62 = por %p60, %p61
      %p63 = scmp.ne.s32.totalorder %s51, %s52
      %p64 = scmp.eq.s32.totalorder %s21, 1
      %p65 = por %p63, %p64
      %p67 = scmp.ne.s32.totalorder %s52, %s66
      %p68 = scmp.eq.s32.totalorder %s21, 0
      %p69 = por %p67, %p68
      %s71 = sadd.s32 %s70, 1
      %p74 = scmp.eq.s32.totalorder %s15, 1
      %p75 = scmp.ne.s32.totalorder %s70, %s72
      %p76 = scmp.eq.s32.totalorder %s15, 0
      %p77 = por %p75, %p76
      %p78 = scmp.ne.s32.totalorder %s70, %s72
      %p79 = scmp.eq.s32.totalorder %s20, 1
      %p80 = por %p78, %p79
      %p81 = scmp.ne.s32.totalorder %s72, %s73
      %p82 = scmp.eq.s32.totalorder %s20, 0
      %p83 = por %p81, %p82
      %p84 = scmp.ne.s32.totalorder %s72, %s73
      %p85 = scmp.eq.s32.totalorder %s21, 1
      %p86 = por %p84, %p85
      %p88 = scmp.ne.s32.totalorder %s73, %s87
      %p89 = scmp.eq.s32.totalorder %s21, 0
      %p90 = por %p88, %p89
      %s92 = sadd.s32 %s91, 1
      %p95 = scmp.eq.s32.totalorder %s15, 1
      %p96 = scmp.ne.s32.totalorder %s91, %s93
      %p97 = scmp.eq.s32.totalorder %s15, 0
      %p98 = por %p96, %p97
      %p99 = scmp.ne.s32.totalorder %s91, %s93
      %p100 = scmp.eq.s32.totalorder %s20, 1
      %p101 = por %p99, %p100
      %p102 = scmp.ne.s32.totalorder %s93, %s94
      %p103 = scmp.eq.s32.totalorder %s20, 0
      %p104 = por %p102, %p103
      %p105 = scmp.ne.s32.totalorder %s93, %s94
      %p106 = scmp.eq.s32.totalorder %s21, 1
      %p107 = por %p105, %p106
      %p109 = scmp.ne.s32.totalorder %s94, %s108
      %p110 = scmp.eq.s32.totalorder %s21, 0
      %p111 = por %p109, %p110
      %s113 = sadd.s32 %s112, 1
      %p116 = scmp.eq.s32.totalorder %s15, 1
      %p117 = scmp.ne.s32.totalorder %s112, %s114
      %p118 = scmp.eq.s32.totalorder %s15, 0
      %p119 = por %p117, %p118
      %p120 = scmp.ne.s32.totalorder %s112, %s114
      %p121 = scmp.eq.s32.totalorder %s20, 1
      %p122 = por %p120, %p121
      %p123 = scmp.ne.s32.totalorder %s114, %s115
      %p124 = scmp.eq.s32.totalorder %s20, 0
      %p125 = por %p123, %p124
      %p126 = scmp.ne.s32.totalorder %s114, %s115
      %p127 = scmp.eq.s32.totalorder %s21, 1
      %p128 = por %p126, %p127
      %p130 = scmp.ne.s32.totalorder %s115, %s129
      %p131 = scmp.eq.s32.totalorder %s21, 0
      %p132 = por %p130, %p131
      %s133 = ssub.s32 %s15, %s22
      %p134 = scmp.eq.s32.totalorder %s133, 0
      %s136 = sadd.s32 %s135, 1
      %s137 = scalar_select %p134, %s135, %s136
      %p140 = pneg %p134
      %p141 = scmp.eq.s32.totalorder %s15, 1
      %p142 = por %p140, %p141
      %p143 = scmp.ne.s32.totalorder %s135, %s138
      %p144 = scmp.eq.s32.totalorder %s15, 0
      %p145 = por %p143, %p144
      %p146 = scmp.ne.s32.totalorder %s135, %s138
      %p147 = scmp.eq.s32.totalorder %s20, 1
      %p148 = por %p146, %p147
      %p149 = scmp.ne.s32.totalorder %s138, %s139
      %p150 = scmp.eq.s32.totalorder %s20, 0
      %p151 = por %p149, %p150
      %p152 = scmp.ne.s32.totalorder %s138, %s139
      %p153 = scmp.eq.s32.totalorder %s21, 1
      %p154 = por %p152, %p153
      %p156 = scmp.ne.s32.totalorder %s139, %s155
      %p157 = scmp.eq.s32.totalorder %s21, 0
      %p158 = por %p156, %p157
      %p159 = scmp.le.s32.totalorder 1, %s15
      %p160 = scmp.lt.s32.totalorder %s15, 3
      %p161 = pnand %p159, %p160
      %p162 = pneg %p161
      // Predicated region
      $region9: #{tpu_custom_call.1} parent=5 // pred_check
        _
      $region10: #{tpu_custom_call.1} parent=5 // pred_check_branch
        %164 = sbr.rel (%p161) target = $region12
      $region11: #{tpu_custom_call.1} parent=5 // pred_region
        %s165 = ssub.s32 %s15, 1
        // Predicated region
        $region13: #{tpu_custom_call.1} parent=11 // pred_check
          %p166 = pneg %p62
        $region14: #{tpu_custom_call.1} parent=11 // pred_check_branch
          %168 = sbr.rel (%p166) target = $region16
        $region15: #{tpu_custom_call.1} parent=11 // pred_region
          %s170 = ssub.s32 65536, 65536
          %171 = vsyncadd [#allocation5], %s170
          %s172 = sshll.u32 [#allocation4], 4
          %s173 = int_to_ptr.vmem [resolvable:$true] %s172
          %178 = dma.hbm_to_vmem [thread:$0]  %s1, 65536, %s173, [#allocation5], 512, 512, 32
        $region16: #{tpu_custom_call.1} parent=11 // pred_fallthru
          _
        // Predicated region
        $region17: #{tpu_custom_call.1} parent=11 // pred_check
          %p179 = pneg %p83
        $region18: #{tpu_custom_call.1} parent=11 // pred_check_branch
          %181 = sbr.rel (%p179) target = $region20
        $region19: #{tpu_custom_call.1} parent=11 // pred_region
          %s183 = ssub.s32 4096, 4096
          %184 = vsyncadd [#allocation5], %s183
          %s185 = sshll.u32 [#allocation6], 4
          %s186 = int_to_ptr.vmem [resolvable:$true] %s185
          %191 = dma.hbm_to_vmem [thread:$0]  %s2, 4096, %s186, [#allocation5], 64, 64, 4
        $region20: #{tpu_custom_call.1} parent=11 // pred_fallthru
          _
        // Predicated region
        $region21: #{tpu_custom_call.1} parent=11 // pred_check
          %p192 = pneg %p104
        $region22: #{tpu_custom_call.1} parent=11 // pred_check_branch
          %194 = sbr.rel (%p192) target = $region24
        $region23: #{tpu_custom_call.1} parent=11 // pred_region
          _
        $region24: #{tpu_custom_call.1} parent=11 // pred_fallthru
          _
        // Predicated region
        $region25: #{tpu_custom_call.1} parent=11 // pred_check
          %p195 = pneg %p125
        $region26: #{tpu_custom_call.1} parent=11 // pred_check_branch
          %197 = sbr.rel (%p195) target = $region28
        $region27: #{tpu_custom_call.1} parent=11 // pred_region
          _
        $region28: #{tpu_custom_call.1} parent=11 // pred_fallthru
          _
      $region12: #{tpu_custom_call.1} parent=5 // pred_fallthru
        _
      %p198 = scmp.lt.s32.totalorder %s15, 2
      // Predicated region
      $region29: #{tpu_custom_call.1} parent=5 // pred_check
        %p199 = pneg %p198
      $region30: #{tpu_custom_call.1} parent=5 // pred_check_branch
        %201 = sbr.rel (%p199) target = $region32
      $region31: #{tpu_custom_call.1} parent=5 // pred_region
        // Predicated region
        $region33: #{tpu_custom_call.1} parent=31 // pred_check
          %p202 = pneg %p35
        $region34: #{tpu_custom_call.1} parent=31 // pred_check_branch
          %204 = sbr.rel (%p202) target = $region36
        $region35: #{tpu_custom_call.1} parent=31 // pred_region
          %s205 = sand.u32 %s25, 1
          %s206 = scalar_lea.sflag [#allocation3], %s205
          %s207 = sand.u32 %s25, 1
          %s208 = smul.addr %s207, 64
          %s209 = scalar_lea.vmem [#allocation2], %s208
          %s210 = smul.u32 2, %s15
          %s212 = ssub.s32 1024, 1024
          %213 = vsyncadd %s206, %s212
          %s214 = smul.addr %s210, 8
          %s215 = smul.addr %s214, 64
          %s216 = scalar_lea.hbm %s0, %s215
          %s217 = sshll.u32 %s209, 4
          %s218 = int_to_ptr.vmem [resolvable:$true] %s217
          %223 = dma.hbm_to_vmem [thread:$0]  %s216, 1024, %s218, %s206, 512, 512, 32
        $region36: #{tpu_custom_call.1} parent=31 // pred_fallthru
          _
      $region32: #{tpu_custom_call.1} parent=5 // pred_fallthru
        _
      %p224 = scmp.le.s32.totalorder 1, %s15
      %p225 = scmp.lt.s32.totalorder %s15, 3
      %p226 = pnand %p224, %p225
      %p227 = pneg %p226
      // Predicated region
      $region37: #{tpu_custom_call.1} parent=5 // pred_check
        _
      $region38: #{tpu_custom_call.1} parent=5 // pred_check_branch
        %229 = sbr.rel (%p226) target = $region40
      $region39: #{tpu_custom_call.1} parent=5 // pred_region
        %s230 = ssub.s32 %s15, 1
        %s231 = sand.u32 %s28, 1
        %s232 = scalar_lea.sflag [#allocation3], %s231
        %s233 = sand.u32 %s28, 1
        %s234 = smul.addr %s233, 64
        %s235 = scalar_lea.vmem [#allocation2], %s234
        // Predicated region
        $region41: #{tpu_custom_call.1} parent=39 // pred_check
          %p236 = pneg %p41
        $region42: #{tpu_custom_call.1} parent=39 // pred_check_branch
          %238 = sbr.rel (%p236) target = $region44
        $region43: #{tpu_custom_call.1} parent=39 // pred_region
          %239 = dma.done %s232, 1024
        $region44: #{tpu_custom_call.1} parent=39 // pred_fallthru
          _
        // Predicated region
        $region45: #{tpu_custom_call.1} parent=39 // pred_check
          %p240 = pneg %p62
        $region46: #{tpu_custom_call.1} parent=39 // pred_check_branch
          %242 = sbr.rel (%p240) target = $region48
        $region47: #{tpu_custom_call.1} parent=39 // pred_region
          %243 = dma.done [#allocation5], 65536
        $region48: #{tpu_custom_call.1} parent=39 // pred_fallthru
          _
        // Predicated region
        $region49: #{tpu_custom_call.1} parent=39 // pred_check
          %p244 = pneg %p83
        $region50: #{tpu_custom_call.1} parent=39 // pred_check_branch
          %246 = sbr.rel (%p244) target = $region52
        $region51: #{tpu_custom_call.1} parent=39 // pred_region
          %247 = dma.done [#allocation5], 4096
        $region52: #{tpu_custom_call.1} parent=39 // pred_fallthru
          _
        %s248 = sand.u32 %s28, 1
        %s249 = scalar_lea.sflag [#allocation3], %s248
        %s250 = sand.u32 %s28, 1
        %s251 = smul.addr %s250, 64
        %s252 = scalar_lea.vmem [#allocation2], %s251
        %p253 = pneg %p41
        %p254 = pneg %p38
        %p255 = pneg %p62
        %p256 = pneg %p59
        %p257 = pneg %p83
        %p258 = pneg %p80
        %p259 = pneg %p104
        %p260 = pneg %p101
        %p261 = pneg %p125
        %p262 = pneg %p122
        %p263 = pneg %p151
        %p264 = pneg %p148
        %s265 = smul.u32 2, %s20
        %p266 = scmp.lt.s32.totalorder %s265, 3
        %s267 = scalar_select %p266, %s265, 3
        %s268 = smul.addr %s267, 8
        %s269 = scalar_lea.vmem %s5, %s268
        %s270 = smul.u32 2, %s20
        %s271 = smul.u32 2, %s20
        %p272 = scmp.lt.s32.totalorder %s271, 3
        %s273 = scalar_select %p272, %s271, 3
        %s274 = smul.addr %s273, 8
        %s275 = scalar_lea.vmem %s5, %s274
        %s276 = smul.u32 2, %s20
        %v278 = vld [vmem:[%s235] sm:$0xff]
        %v279 = vld [vmem:[%s235 + $0x8] sm:$0xff]
        %v280 = vld [vmem:[%s235 + $0x10] sm:$0xff]
        %v281 = vld [vmem:[%s235 + $0x18] sm:$0xff]
        %v282 = vld [vmem:[%s235 + $0x20] sm:$0xff]
        %v283 = vld [vmem:[%s235 + $0x28] sm:$0xff]
        %v284 = vld [vmem:[%s235 + $0x30] sm:$0xff]
        %v285 = vld [vmem:[%s235 + $0x38] sm:$0xff]
        %v286 = vld [vmem:[#allocation4] sm:$0xff]
        %v287 = vld [vmem:[#allocation4 + $0x8] sm:$0xff]
        %v288 = vld [vmem:[#allocation4 + $0x10] sm:$0xff]
        %v289 = vld [vmem:[#allocation4 + $0x18] sm:$0xff]
        %v290 = vld [vmem:[#allocation4 + $0x20] sm:$0xff]
        %v291 = vld [vmem:[#allocation4 + $0x28] sm:$0xff]
        %v292 = vld [vmem:[#allocation4 + $0x30] sm:$0xff]
        %v293 = vld [vmem:[#allocation4 + $0x38] sm:$0xff]
        %v294 = vld [vmem:[#allocation4 + $0x40] sm:$0xff]
        %v295 = vld [vmem:[#allocation4 + $0x48] sm:$0xff]
        %v296 = vld [vmem:[#allocation4 + $0x50] sm:$0xff]
        %v297 = vld [vmem:[#allocation4 + $0x58] sm:$0xff]
        %v298 = vld [vmem:[#allocation4 + $0x60] sm:$0xff]
        %v299 = vld [vmem:[#allocation4 + $0x68] sm:$0xff]
        %v300 = vld [vmem:[#allocation4 + $0x70] sm:$0xff]
        %v301 = vld [vmem:[#allocation4 + $0x78] sm:$0xff]
        %v302 = vld [vmem:[#allocation4 + $0x80] sm:$0xff]
        %v303 = vld [vmem:[#allocation4 + $0x88] sm:$0xff]
        %v304 = vld [vmem:[#allocation4 + $0x90] sm:$0xff]
        %v305 = vld [vmem:[#allocation4 + $0x98] sm:$0xff]
        %v306 = vld [vmem:[#allocation4 + $0xa0] sm:$0xff]
        %v307 = vld [vmem:[#allocation4 + $0xa8] sm:$0xff]
        %v308 = vld [vmem:[#allocation4 + $0xb0] sm:$0xff]
        %v309 = vld [vmem:[#allocation4 + $0xb8] sm:$0xff]
        %v310 = vld [vmem:[#allocation4 + $0xc0] sm:$0xff]
        %v311 = vld [vmem:[#allocation4 + $0xc8] sm:$0xff]
        %v312 = vld [vmem:[#allocation4 + $0xd0] sm:$0xff]
        %v313 = vld [vmem:[#allocation4 + $0xd8] sm:$0xff]
        %v314 = vld [vmem:[#allocation4 + $0xe0] sm:$0xff]
        %v315 = vld [vmem:[#allocation4 + $0xe8] sm:$0xff]
        %v316 = vld [vmem:[#allocation4 + $0xf0] sm:$0xff]
        %v317 = vld [vmem:[#allocation4 + $0xf8] sm:$0xff]
        %v318 = vld [vmem:[#allocation4 + $0x100] sm:$0xff]
        %v319 = vld [vmem:[#allocation4 + $0x108] sm:$0xff]
        %v320 = vld [vmem:[#allocation4 + $0x110] sm:$0xff]
        %v321 = vld [vmem:[#allocation4 + $0x118] sm:$0xff]
        %v322 = vld [vmem:[#allocation4 + $0x120] sm:$0xff]
        %v323 = vld [vmem:[#allocation4 + $0x128] sm:$0xff]
        %v324 = vld [vmem:[#allocation4 + $0x130] sm:$0xff]
        %v325 = vld [vmem:[#allocation4 + $0x138] sm:$0xff]
        %v326 = vld [vmem:[#allocation4 + $0x140] sm:$0xff]
        %v327 = vld [vmem:[#allocation4 + $0x148] sm:$0xff]
        %v328 = vld [vmem:[#allocation4 + $0x150] sm:$0xff]
        %v329 = vld [vmem:[#allocation4 + $0x158] sm:$0xff]
        %v330 = vld [vmem:[#allocation4 + $0x160] sm:$0xff]
        %v331 = vld [vmem:[#allocation4 + $0x168] sm:$0xff]
        %v332 = vld [vmem:[#allocation4 + $0x170] sm:$0xff]
        %v333 = vld [vmem:[#allocation4 + $0x178] sm:$0xff]
        %v334 = vld [vmem:[#allocation4 + $0x180] sm:$0xff]
        %v335 = vld [vmem:[#allocation4 + $0x188] sm:$0xff]
        %v336 = vld [vmem:[#allocation4 + $0x190] sm:$0xff]
        %v337 = vld [vmem:[#allocation4 + $0x198] sm:$0xff]
        %v338 = vld [vmem:[#allocation4 + $0x1a0] sm:$0xff]
        %v339 = vld [vmem:[#allocation4 + $0x1a8] sm:$0xff]
        %v340 = vld [vmem:[#allocation4 + $0x1b0] sm:$0xff]
        %v341 = vld [vmem:[#allocation4 + $0x1b8] sm:$0xff]
        %v342 = vld [vmem:[#allocation4 + $0x1c0] sm:$0xff]
        %v343 = vld [vmem:[#allocation4 + $0x1c8] sm:$0xff]
        %v344 = vld [vmem:[#allocation4 + $0x1d0] sm:$0xff]
        %v345 = vld [vmem:[#allocation4 + $0x1d8] sm:$0xff]
        %v346 = vld [vmem:[#allocation4 + $0x1e0] sm:$0xff]
        %v347 = vld [vmem:[#allocation4 + $0x1e8] sm:$0xff]
        %v348 = vld [vmem:[#allocation4 + $0x1f0] sm:$0xff]
        %v349 = vld [vmem:[#allocation4 + $0x1f8] sm:$0xff]
        %v350 = vld [vmem:[#allocation4 + $0x200] sm:$0xff]
        %v351 = vld [vmem:[#allocation4 + $0x208] sm:$0xff]
        %v352 = vld [vmem:[#allocation4 + $0x210] sm:$0xff]
        %v353 = vld [vmem:[#allocation4 + $0x218] sm:$0xff]
        %v354 = vld [vmem:[#allocation4 + $0x220] sm:$0xff]
        %v355 = vld [vmem:[#allocation4 + $0x228] sm:$0xff]
        %v356 = vld [vmem:[#allocation4 + $0x230] sm:$0xff]
        %v357 = vld [vmem:[#allocation4 + $0x238] sm:$0xff]
        %v358 = vld [vmem:[#allocation4 + $0x240] sm:$0xff]
        %v359 = vld [vmem:[#allocation4 + $0x248] sm:$0xff]
        %v360 = vld [vmem:[#allocation4 + $0x250] sm:$0xff]
        %v361 = vld [vmem:[#allocation4 + $0x258] sm:$0xff]
        %v362 = vld [vmem:[#allocation4 + $0x260] sm:$0xff]
        %v363 = vld [vmem:[#allocation4 + $0x268] sm:$0xff]
        %v364 = vld [vmem:[#allocation4 + $0x270] sm:$0xff]
        %v365 = vld [vmem:[#allocation4 + $0x278] sm:$0xff]
        %v366 = vld [vmem:[#allocation4 + $0x280] sm:$0xff]
        %v367 = vld [vmem:[#allocation4 + $0x288] sm:$0xff]
        %v368 = vld [vmem:[#allocation4 + $0x290] sm:$0xff]
        %v369 = vld [vmem:[#allocation4 + $0x298] sm:$0xff]
        %v370 = vld [vmem:[#allocation4 + $0x2a0] sm:$0xff]
        %v371 = vld [vmem:[#allocation4 + $0x2a8] sm:$0xff]
        %v372 = vld [vmem:[#allocation4 + $0x2b0] sm:$0xff]
        %v373 = vld [vmem:[#allocation4 + $0x2b8] sm:$0xff]
        %v374 = vld [vmem:[#allocation4 + $0x2c0] sm:$0xff]
        %v375 = vld [vmem:[#allocation4 + $0x2c8] sm:$0xff]
        %v376 = vld [vmem:[#allocation4 + $0x2d0] sm:$0xff]
        %v377 = vld [vmem:[#allocation4 + $0x2d8] sm:$0xff]
        %v378 = vld [vmem:[#allocation4 + $0x2e0] sm:$0xff]
        %v379 = vld [vmem:[#allocation4 + $0x2e8] sm:$0xff]
        %v380 = vld [vmem:[#allocation4 + $0x2f0] sm:$0xff]
        %v381 = vld [vmem:[#allocation4 + $0x2f8] sm:$0xff]
        %v382 = vld [vmem:[#allocation4 + $0x300] sm:$0xff]
        %v383 = vld [vmem:[#allocation4 + $0x308] sm:$0xff]
        %v384 = vld [vmem:[#allocation4 + $0x310] sm:$0xff]
        %v385 = vld [vmem:[#allocation4 + $0x318] sm:$0xff]
        %v386 = vld [vmem:[#allocation4 + $0x320] sm:$0xff]
        %v387 = vld [vmem:[#allocation4 + $0x328] sm:$0xff]
        %v388 = vld [vmem:[#allocation4 + $0x330] sm:$0xff]
        %v389 = vld [vmem:[#allocation4 + $0x338] sm:$0xff]
        %v390 = vld [vmem:[#allocation4 + $0x340] sm:$0xff]
        %v391 = vld [vmem:[#allocation4 + $0x348] sm:$0xff]
        %v392 = vld [vmem:[#allocation4 + $0x350] sm:$0xff]
        %v393 = vld [vmem:[#allocation4 + $0x358] sm:$0xff]
        %v394 = vld [vmem:[#allocation4 + $0x360] sm:$0xff]
        %v395 = vld [vmem:[#allocation4 + $0x368] sm:$0xff]
        %v396 = vld [vmem:[#allocation4 + $0x370] sm:$0xff]
        %v397 = vld [vmem:[#allocation4 + $0x378] sm:$0xff]
        %v398 = vld [vmem:[#allocation4 + $0x380] sm:$0xff]
        %v399 = vld [vmem:[#allocation4 + $0x388] sm:$0xff]
        %v400 = vld [vmem:[#allocation4 + $0x390] sm:$0xff]
        %v401 = vld [vmem:[#allocation4 + $0x398] sm:$0xff]
        %v402 = vld [vmem:[#allocation4 + $0x3a0] sm:$0xff]
        %v403 = vld [vmem:[#allocation4 + $0x3a8] sm:$0xff]
        %v404 = vld [vmem:[#allocation4 + $0x3b0] sm:$0xff]
        %v405 = vld [vmem:[#allocation4 + $0x3b8] sm:$0xff]
        %v406 = vld [vmem:[#allocation4 + $0x3c0] sm:$0xff]
        %v407 = vld [vmem:[#allocation4 + $0x3c8] sm:$0xff]
        %v408 = vld [vmem:[#allocation4 + $0x3d0] sm:$0xff]
        %v409 = vld [vmem:[#allocation4 + $0x3d8] sm:$0xff]
        %v410 = vld [vmem:[#allocation4 + $0x3e0] sm:$0xff]
        %v411 = vld [vmem:[#allocation4 + $0x3e8] sm:$0xff]
        %v412 = vld [vmem:[#allocation4 + $0x3f0] sm:$0xff]
        %v413 = vld [vmem:[#allocation4 + $0x3f8] sm:$0xff]
        %v414 = vld [vmem:[#allocation4 + $0x400] sm:$0xff]
        %v415 = vld [vmem:[#allocation4 + $0x408] sm:$0xff]
        %v416 = vld [vmem:[#allocation4 + $0x410] sm:$0xff]
        %v417 = vld [vmem:[#allocation4 + $0x418] sm:$0xff]
        %v418 = vld [vmem:[#allocation4 + $0x420] sm:$0xff]
        %v419 = vld [vmem:[#allocation4 + $0x428] sm:$0xff]
        %v420 = vld [vmem:[#allocation4 + $0x430] sm:$0xff]
        %v421 = vld [vmem:[#allocation4 + $0x438] sm:$0xff]
        %v422 = vld [vmem:[#allocation4 + $0x440] sm:$0xff]
        %v423 = vld [vmem:[#allocation4 + $0x448] sm:$0xff]
        %v424 = vld [vmem:[#allocation4 + $0x450] sm:$0xff]
        %v425 = vld [vmem:[#allocation4 + $0x458] sm:$0xff]
        %v426 = vld [vmem:[#allocation4 + $0x460] sm:$0xff]
        %v427 = vld [vmem:[#allocation4 + $0x468] sm:$0xff]
        %v428 = vld [vmem:[#allocation4 + $0x470] sm:$0xff]
        %v429 = vld [vmem:[#allocation4 + $0x478] sm:$0xff]
        %v430 = vld [vmem:[#allocation4 + $0x480] sm:$0xff]
        %v431 = vld [vmem:[#allocation4 + $0x488] sm:$0xff]
        %v432 = vld [vmem:[#allocation4 + $0x490] sm:$0xff]
        %v433 = vld [vmem:[#allocation4 + $0x498] sm:$0xff]
        %v434 = vld [vmem:[#allocation4 + $0x4a0] sm:$0xff]
        %v435 = vld [vmem:[#allocation4 + $0x4a8] sm:$0xff]
        %v436 = vld [vmem:[#allocation4 + $0x4b0] sm:$0xff]
        %v437 = vld [vmem:[#allocation4 + $0x4b8] sm:$0xff]
        %v438 = vld [vmem:[#allocation4 + $0x4c0] sm:$0xff]
        %v439 = vld [vmem:[#allocation4 + $0x4c8] sm:$0xff]
        %v440 = vld [vmem:[#allocation4 + $0x4d0] sm:$0xff]
        %v441 = vld [vmem:[#allocation4 + $0x4d8] sm:$0xff]
        %v442 = vld [vmem:[#allocation4 + $0x4e0] sm:$0xff]
        %v443 = vld [vmem:[#allocation4 + $0x4e8] sm:$0xff]
        %v444 = vld [vmem:[#allocation4 + $0x4f0] sm:$0xff]
        %v445 = vld [vmem:[#allocation4 + $0x4f8] sm:$0xff]
        %v446 = vld [vmem:[#allocation4 + $0x500] sm:$0xff]
        %v447 = vld [vmem:[#allocation4 + $0x508] sm:$0xff]
        %v448 = vld [vmem:[#allocation4 + $0x510] sm:$0xff]
        %v449 = vld [vmem:[#allocation4 + $0x518] sm:$0xff]
        %v450 = vld [vmem:[#allocation4 + $0x520] sm:$0xff]
        %v451 = vld [vmem:[#allocation4 + $0x528] sm:$0xff]
        %v452 = vld [vmem:[#allocation4 + $0x530] sm:$0xff]
        %v453 = vld [vmem:[#allocation4 + $0x538] sm:$0xff]
        %v454 = vld [vmem:[#allocation4 + $0x540] sm:$0xff]
        %v455 = vld [vmem:[#allocation4 + $0x548] sm:$0xff]
        %v456 = vld [vmem:[#allocation4 + $0x550] sm:$0xff]
        %v457 = vld [vmem:[#allocation4 + $0x558] sm:$0xff]
        %v458 = vld [vmem:[#allocation4 + $0x560] sm:$0xff]
        %v459 = vld [vmem:[#allocation4 + $0x568] sm:$0xff]
        %v460 = vld [vmem:[#allocation4 + $0x570] sm:$0xff]
        %v461 = vld [vmem:[#allocation4 + $0x578] sm:$0xff]
        %v462 = vld [vmem:[#allocation4 + $0x580] sm:$0xff]
        %v463 = vld [vmem:[#allocation4 + $0x588] sm:$0xff]
        %v464 = vld [vmem:[#allocation4 + $0x590] sm:$0xff]
        %v465 = vld [vmem:[#allocation4 + $0x598] sm:$0xff]
        %v466 = vld [vmem:[#allocation4 + $0x5a0] sm:$0xff]
        %v467 = vld [vmem:[#allocation4 + $0x5a8] sm:$0xff]
        %v468 = vld [vmem:[#allocation4 + $0x5b0] sm:$0xff]
        %v469 = vld [vmem:[#allocation4 + $0x5b8] sm:$0xff]
        %v470 = vld [vmem:[#allocation4 + $0x5c0] sm:$0xff]
        %v471 = vld [vmem:[#allocation4 + $0x5c8] sm:$0xff]
        %v472 = vld [vmem:[#allocation4 + $0x5d0] sm:$0xff]
        %v473 = vld [vmem:[#allocation4 + $0x5d8] sm:$0xff]
        %v474 = vld [vmem:[#allocation4 + $0x5e0] sm:$0xff]
        %v475 = vld [vmem:[#allocation4 + $0x5e8] sm:$0xff]
        %v476 = vld [vmem:[#allocation4 + $0x5f0] sm:$0xff]
        %v477 = vld [vmem:[#allocation4 + $0x5f8] sm:$0xff]
        %v478 = vld [vmem:[#allocation4 + $0x600] sm:$0xff]
        %v479 = vld [vmem:[#allocation4 + $0x608] sm:$0xff]
        %v480 = vld [vmem:[#allocation4 + $0x610] sm:$0xff]
        %v481 = vld [vmem:[#allocation4 + $0x618] sm:$0xff]
        %v482 = vld [vmem:[#allocation4 + $0x620] sm:$0xff]
        %v483 = vld [vmem:[#allocation4 + $0x628] sm:$0xff]
        %v484 = vld [vmem:[#allocation4 + $0x630] sm:$0xff]
        %v485 = vld [vmem:[#allocation4 + $0x638] sm:$0xff]
        %v486 = vld [vmem:[#allocation4 + $0x640] sm:$0xff]
        %v487 = vld [vmem:[#allocation4 + $0x648] sm:$0xff]
        %v488 = vld [vmem:[#allocation4 + $0x650] sm:$0xff]
        %v489 = vld [vmem:[#allocation4 + $0x658] sm:$0xff]
        %v490 = vld [vmem:[#allocation4 + $0x660] sm:$0xff]
        %v491 = vld [vmem:[#allocation4 + $0x668] sm:$0xff]
        %v492 = vld [vmem:[#allocation4 + $0x670] sm:$0xff]
        %v493 = vld [vmem:[#allocation4 + $0x678] sm:$0xff]
        %v494 = vld [vmem:[#allocation4 + $0x680] sm:$0xff]
        %v495 = vld [vmem:[#allocation4 + $0x688] sm:$0xff]
        %v496 = vld [vmem:[#allocation4 + $0x690] sm:$0xff]
        %v497 = vld [vmem:[#allocation4 + $0x698] sm:$0xff]
        %v498 = vld [vmem:[#allocation4 + $0x6a0] sm:$0xff]
        %v499 = vld [vmem:[#allocation4 + $0x6a8] sm:$0xff]
        %v500 = vld [vmem:[#allocation4 + $0x6b0] sm:$0xff]
        %v501 = vld [vmem:[#allocation4 + $0x6b8] sm:$0xff]
        %v502 = vld [vmem:[#allocation4 + $0x6c0] sm:$0xff]
        %v503 = vld [vmem:[#allocation4 + $0x6c8] sm:$0xff]
        %v504 = vld [vmem:[#allocation4 + $0x6d0] sm:$0xff]
        %v505 = vld [vmem:[#allocation4 + $0x6d8] sm:$0xff]
        %v506 = vld [vmem:[#allocation4 + $0x6e0] sm:$0xff]
        %v507 = vld [vmem:[#allocation4 + $0x6e8] sm:$0xff]
        %v508 = vld [vmem:[#allocation4 + $0x6f0] sm:$0xff]
        %v509 = vld [vmem:[#allocation4 + $0x6f8] sm:$0xff]
        %v510 = vld [vmem:[#allocation4 + $0x700] sm:$0xff]
        %v511 = vld [vmem:[#allocation4 + $0x708] sm:$0xff]
        %v512 = vld [vmem:[#allocation4 + $0x710] sm:$0xff]
        %v513 = vld [vmem:[#allocation4 + $0x718] sm:$0xff]
        %v514 = vld [vmem:[#allocation4 + $0x720] sm:$0xff]
        %v515 = vld [vmem:[#allocation4 + $0x728] sm:$0xff]
        %v516 = vld [vmem:[#allocation4 + $0x730] sm:$0xff]
        %v517 = vld [vmem:[#allocation4 + $0x738] sm:$0xff]
        %v518 = vld [vmem:[#allocation4 + $0x740] sm:$0xff]
        %v519 = vld [vmem:[#allocation4 + $0x748] sm:$0xff]
        %v520 = vld [vmem:[#allocation4 + $0x750] sm:$0xff]
        %v521 = vld [vmem:[#allocation4 + $0x758] sm:$0xff]
        %v522 = vld [vmem:[#allocation4 + $0x760] sm:$0xff]
        %v523 = vld [vmem:[#allocation4 + $0x768] sm:$0xff]
        %v524 = vld [vmem:[#allocation4 + $0x770] sm:$0xff]
        %v525 = vld [vmem:[#allocation4 + $0x778] sm:$0xff]
        %v526 = vld [vmem:[#allocation4 + $0x780] sm:$0xff]
        %v527 = vld [vmem:[#allocation4 + $0x788] sm:$0xff]
        %v528 = vld [vmem:[#allocation4 + $0x790] sm:$0xff]
        %v529 = vld [vmem:[#allocation4 + $0x798] sm:$0xff]
        %v530 = vld [vmem:[#allocation4 + $0x7a0] sm:$0xff]
        %v531 = vld [vmem:[#allocation4 + $0x7a8] sm:$0xff]
        %v532 = vld [vmem:[#allocation4 + $0x7b0] sm:$0xff]
        %v533 = vld [vmem:[#allocation4 + $0x7b8] sm:$0xff]
        %v534 = vld [vmem:[#allocation4 + $0x7c0] sm:$0xff]
        %v535 = vld [vmem:[#allocation4 + $0x7c8] sm:$0xff]
        %v536 = vld [vmem:[#allocation4 + $0x7d0] sm:$0xff]
        %v537 = vld [vmem:[#allocation4 + $0x7d8] sm:$0xff]
        %v538 = vld [vmem:[#allocation4 + $0x7e0] sm:$0xff]
        %v539 = vld [vmem:[#allocation4 + $0x7e8] sm:$0xff]
        %v540 = vld [vmem:[#allocation4 + $0x7f0] sm:$0xff]
        %v541 = vld [vmem:[#allocation4 + $0x7f8] sm:$0xff]
        %v542 = vld [vmem:[#allocation4 + $0x800] sm:$0xff]
        %v543 = vld [vmem:[#allocation4 + $0x808] sm:$0xff]
        %v544 = vld [vmem:[#allocation4 + $0x810] sm:$0xff]
        %v545 = vld [vmem:[#allocation4 + $0x818] sm:$0xff]
        %v546 = vld [vmem:[#allocation4 + $0x820] sm:$0xff]
        %v547 = vld [vmem:[#allocation4 + $0x828] sm:$0xff]
        %v548 = vld [vmem:[#allocation4 + $0x830] sm:$0xff]
        %v549 = vld [vmem:[#allocation4 + $0x838] sm:$0xff]
        %v550 = vld [vmem:[#allocation4 + $0x840] sm:$0xff]
        %v551 = vld [vmem:[#allocation4 + $0x848] sm:$0xff]
        %v552 = vld [vmem:[#allocation4 + $0x850] sm:$0xff]
        %v553 = vld [vmem:[#allocation4 + $0x858] sm:$0xff]
        %v554 = vld [vmem:[#allocation4 + $0x860] sm:$0xff]
        %v555 = vld [vmem:[#allocation4 + $0x868] sm:$0xff]
        %v556 = vld [vmem:[#allocation4 + $0x870] sm:$0xff]
        %v557 = vld [vmem:[#allocation4 + $0x878] sm:$0xff]
        %v558 = vld [vmem:[#allocation4 + $0x880] sm:$0xff]
        %v559 = vld [vmem:[#allocation4 + $0x888] sm:$0xff]
        %v560 = vld [vmem:[#allocation4 + $0x890] sm:$0xff]
        %v561 = vld [vmem:[#allocation4 + $0x898] sm:$0xff]
        %v562 = vld [vmem:[#allocation4 + $0x8a0] sm:$0xff]
        %v563 = vld [vmem:[#allocation4 + $0x8a8] sm:$0xff]
        %v564 = vld [vmem:[#allocation4 + $0x8b0] sm:$0xff]
        %v565 = vld [vmem:[#allocation4 + $0x8b8] sm:$0xff]
        %v566 = vld [vmem:[#allocation4 + $0x8c0] sm:$0xff]
        %v567 = vld [vmem:[#allocation4 + $0x8c8] sm:$0xff]
        %v568 = vld [vmem:[#allocation4 + $0x8d0] sm:$0xff]
        %v569 = vld [vmem:[#allocation4 + $0x8d8] sm:$0xff]
        %v570 = vld [vmem:[#allocation4 + $0x8e0] sm:$0xff]
        %v571 = vld [vmem:[#allocation4 + $0x8e8] sm:$0xff]
        %v572 = vld [vmem:[#allocation4 + $0x8f0] sm:$0xff]
        %v573 = vld [vmem:[#allocation4 + $0x8f8] sm:$0xff]
        %v574 = vld [vmem:[#allocation4 + $0x900] sm:$0xff]
        %v575 = vld [vmem:[#allocation4 + $0x908] sm:$0xff]
        %v576 = vld [vmem:[#allocation4 + $0x910] sm:$0xff]
        %v577 = vld [vmem:[#allocation4 + $0x918] sm:$0xff]
        %v578 = vld [vmem:[#allocation4 + $0x920] sm:$0xff]
        %v579 = vld [vmem:[#allocation4 + $0x928] sm:$0xff]
        %v580 = vld [vmem:[#allocation4 + $0x930] sm:$0xff]
        %v581 = vld [vmem:[#allocation4 + $0x938] sm:$0xff]
        %v582 = vld [vmem:[#allocation4 + $0x940] sm:$0xff]
        %v583 = vld [vmem:[#allocation4 + $0x948] sm:$0xff]
        %v584 = vld [vmem:[#allocation4 + $0x950] sm:$0xff]
        %v585 = vld [vmem:[#allocation4 + $0x958] sm:$0xff]
        %v586 = vld [vmem:[#allocation4 + $0x960] sm:$0xff]
        %v587 = vld [vmem:[#allocation4 + $0x968] sm:$0xff]
        %v588 = vld [vmem:[#allocation4 + $0x970] sm:$0xff]
        %v589 = vld [vmem:[#allocation4 + $0x978] sm:$0xff]
        %v590 = vld [vmem:[#allocation4 + $0x980] sm:$0xff]
        %v591 = vld [vmem:[#allocation4 + $0x988] sm:$0xff]
        %v592 = vld [vmem:[#allocation4 + $0x990] sm:$0xff]
        %v593 = vld [vmem:[#allocation4 + $0x998] sm:$0xff]
        %v594 = vld [vmem:[#allocation4 + $0x9a0] sm:$0xff]
        %v595 = vld [vmem:[#allocation4 + $0x9a8] sm:$0xff]
        %v596 = vld [vmem:[#allocation4 + $0x9b0] sm:$0xff]
        %v597 = vld [vmem:[#allocation4 + $0x9b8] sm:$0xff]
        %v598 = vld [vmem:[#allocation4 + $0x9c0] sm:$0xff]
        %v599 = vld [vmem:[#allocation4 + $0x9c8] sm:$0xff]
        %v600 = vld [vmem:[#allocation4 + $0x9d0] sm:$0xff]
        %v601 = vld [vmem:[#allocation4 + $0x9d8] sm:$0xff]
        %v602 = vld [vmem:[#allocation4 + $0x9e0] sm:$0xff]
        %v603 = vld [vmem:[#allocation4 + $0x9e8] sm:$0xff]
        %v604 = vld [vmem:[#allocation4 + $0x9f0] sm:$0xff]
        %v605 = vld [vmem:[#allocation4 + $0x9f8] sm:$0xff]
        %v606 = vld [vmem:[#allocation4 + $0xa00] sm:$0xff]
        %v607 = vld [vmem:[#allocation4 + $0xa08] sm:$0xff]
        %v608 = vld [vmem:[#allocation4 + $0xa10] sm:$0xff]
        %v609 = vld [vmem:[#allocation4 + $0xa18] sm:$0xff]
        %v610 = vld [vmem:[#allocation4 + $0xa20] sm:$0xff]
        %v611 = vld [vmem:[#allocation4 + $0xa28] sm:$0xff]
        %v612 = vld [vmem:[#allocation4 + $0xa30] sm:$0xff]
        %v613 = vld [vmem:[#allocation4 + $0xa38] sm:$0xff]
        %v614 = vld [vmem:[#allocation4 + $0xa40] sm:$0xff]
        %v615 = vld [vmem:[#allocation4 + $0xa48] sm:$0xff]
        %v616 = vld [vmem:[#allocation4 + $0xa50] sm:$0xff]
        %v617 = vld [vmem:[#allocation4 + $0xa58] sm:$0xff]
        %v618 = vld [vmem:[#allocation4 + $0xa60] sm:$0xff]
        %v619 = vld [vmem:[#allocation4 + $0xa68] sm:$0xff]
        %v620 = vld [vmem:[#allocation4 + $0xa70] sm:$0xff]
        %v621 = vld [vmem:[#allocation4 + $0xa78] sm:$0xff]
        %v622 = vld [vmem:[#allocation4 + $0xa80] sm:$0xff]
        %v623 = vld [vmem:[#allocation4 + $0xa88] sm:$0xff]
        %v624 = vld [vmem:[#allocation4 + $0xa90] sm:$0xff]
        %v625 = vld [vmem:[#allocation4 + $0xa98] sm:$0xff]
        %v626 = vld [vmem:[#allocation4 + $0xaa0] sm:$0xff]
        %v627 = vld [vmem:[#allocation4 + $0xaa8] sm:$0xff]
        %v628 = vld [vmem:[#allocation4 + $0xab0] sm:$0xff]
        %v629 = vld [vmem:[#allocation4 + $0xab8] sm:$0xff]
        %v630 = vld [vmem:[#allocation4 + $0xac0] sm:$0xff]
        %v631 = vld [vmem:[#allocation4 + $0xac8] sm:$0xff]
        %v632 = vld [vmem:[#allocation4 + $0xad0] sm:$0xff]
        %v633 = vld [vmem:[#allocation4 + $0xad8] sm:$0xff]
        %v634 = vld [vmem:[#allocation4 + $0xae0] sm:$0xff]
        %v635 = vld [vmem:[#allocation4 + $0xae8] sm:$0xff]
        %v636 = vld [vmem:[#allocation4 + $0xaf0] sm:$0xff]
        %v637 = vld [vmem:[#allocation4 + $0xaf8] sm:$0xff]
        %v638 = vld [vmem:[#allocation4 + $0xb00] sm:$0xff]
        %v639 = vld [vmem:[#allocation4 + $0xb08] sm:$0xff]
        %v640 = vld [vmem:[#allocation4 + $0xb10] sm:$0xff]
        %v641 = vld [vmem:[#allocation4 + $0xb18] sm:$0xff]
        %v642 = vld [vmem:[#allocation4 + $0xb20] sm:$0xff]
        %v643 = vld [vmem:[#allocation4 + $0xb28] sm:$0xff]
        %v644 = vld [vmem:[#allocation4 + $0xb30] sm:$0xff]
        %v645 = vld [vmem:[#allocation4 + $0xb38] sm:$0xff]
        %v646 = vld [vmem:[#allocation4 + $0xb40] sm:$0xff]
        %v647 = vld [vmem:[#allocation4 + $0xb48] sm:$0xff]
        %v648 = vld [vmem:[#allocation4 + $0xb50] sm:$0xff]
        %v649 = vld [vmem:[#allocation4 + $0xb58] sm:$0xff]
        %v650 = vld [vmem:[#allocation4 + $0xb60] sm:$0xff]
        %v651 = vld [vmem:[#allocation4 + $0xb68] sm:$0xff]
        %v652 = vld [vmem:[#allocation4 + $0xb70] sm:$0xff]
        %v653 = vld [vmem:[#allocation4 + $0xb78] sm:$0xff]
        %v654 = vld [vmem:[#allocation4 + $0xb80] sm:$0xff]
        %v655 = vld [vmem:[#allocation4 + $0xb88] sm:$0xff]
        %v656 = vld [vmem:[#allocation4 + $0xb90] sm:$0xff]
        %v657 = vld [vmem:[#allocation4 + $0xb98] sm:$0xff]
        %v658 = vld [vmem:[#allocation4 + $0xba0] sm:$0xff]
        %v659 = vld [vmem:[#allocation4 + $0xba8] sm:$0xff]
        %v660 = vld [vmem:[#allocation4 + $0xbb0] sm:$0xff]
        %v661 = vld [vmem:[#allocation4 + $0xbb8] sm:$0xff]
        %v662 = vld [vmem:[#allocation4 + $0xbc0] sm:$0xff]
        %v663 = vld [vmem:[#allocation4 + $0xbc8] sm:$0xff]
        %v664 = vld [vmem:[#allocation4 + $0xbd0] sm:$0xff]
        %v665 = vld [vmem:[#allocation4 + $0xbd8] sm:$0xff]
        %v666 = vld [vmem:[#allocation4 + $0xbe0] sm:$0xff]
        %v667 = vld [vmem:[#allocation4 + $0xbe8] sm:$0xff]
        %v668 = vld [vmem:[#allocation4 + $0xbf0] sm:$0xff]
        %v669 = vld [vmem:[#allocation4 + $0xbf8] sm:$0xff]
        %v670 = vld [vmem:[#allocation4 + $0xc00] sm:$0xff]
        %v671 = vld [vmem:[#allocation4 + $0xc08] sm:$0xff]
        %v672 = vld [vmem:[#allocation4 + $0xc10] sm:$0xff]
        %v673 = vld [vmem:[#allocation4 + $0xc18] sm:$0xff]
        %v674 = vld [vmem:[#allocation4 + $0xc20] sm:$0xff]
        %v675 = vld [vmem:[#allocation4 + $0xc28] sm:$0xff]
        %v676 = vld [vmem:[#allocation4 + $0xc30] sm:$0xff]
        %v677 = vld [vmem:[#allocation4 + $0xc38] sm:$0xff]
        %v678 = vld [vmem:[#allocation4 + $0xc40] sm:$0xff]
        %v679 = vld [vmem:[#allocation4 + $0xc48] sm:$0xff]
        %v680 = vld [vmem:[#allocation4 + $0xc50] sm:$0xff]
        %v681 = vld [vmem:[#allocation4 + $0xc58] sm:$0xff]
        %v682 = vld [vmem:[#allocation4 + $0xc60] sm:$0xff]
        %v683 = vld [vmem:[#allocation4 + $0xc68] sm:$0xff]
        %v684 = vld [vmem:[#allocation4 + $0xc70] sm:$0xff]
        %v685 = vld [vmem:[#allocation4 + $0xc78] sm:$0xff]
        %v686 = vld [vmem:[#allocation4 + $0xc80] sm:$0xff]
        %v687 = vld [vmem:[#allocation4 + $0xc88] sm:$0xff]
        %v688 = vld [vmem:[#allocation4 + $0xc90] sm:$0xff]
        %v689 = vld [vmem:[#allocation4 + $0xc98] sm:$0xff]
        %v690 = vld [vmem:[#allocation4 + $0xca0] sm:$0xff]
        %v691 = vld [vmem:[#allocation4 + $0xca8] sm:$0xff]
        %v692 = vld [vmem:[#allocation4 + $0xcb0] sm:$0xff]
        %v693 = vld [vmem:[#allocation4 + $0xcb8] sm:$0xff]
        %v694 = vld [vmem:[#allocation4 + $0xcc0] sm:$0xff]
        %v695 = vld [vmem:[#allocation4 + $0xcc8] sm:$0xff]
        %v696 = vld [vmem:[#allocation4 + $0xcd0] sm:$0xff]
        %v697 = vld [vmem:[#allocation4 + $0xcd8] sm:$0xff]
        %v698 = vld [vmem:[#allocation4 + $0xce0] sm:$0xff]
        %v699 = vld [vmem:[#allocation4 + $0xce8] sm:$0xff]
        %v700 = vld [vmem:[#allocation4 + $0xcf0] sm:$0xff]
        %v701 = vld [vmem:[#allocation4 + $0xcf8] sm:$0xff]
        %v702 = vld [vmem:[#allocation4 + $0xd00] sm:$0xff]
        %v703 = vld [vmem:[#allocation4 + $0xd08] sm:$0xff]
        %v704 = vld [vmem:[#allocation4 + $0xd10] sm:$0xff]
        %v705 = vld [vmem:[#allocation4 + $0xd18] sm:$0xff]
        %v706 = vld [vmem:[#allocation4 + $0xd20] sm:$0xff]
        %v707 = vld [vmem:[#allocation4 + $0xd28] sm:$0xff]
        %v708 = vld [vmem:[#allocation4 + $0xd30] sm:$0xff]
        %v709 = vld [vmem:[#allocation4 + $0xd38] sm:$0xff]
        %v710 = vld [vmem:[#allocation4 + $0xd40] sm:$0xff]
        %v711 = vld [vmem:[#allocation4 + $0xd48] sm:$0xff]
        %v712 = vld [vmem:[#allocation4 + $0xd50] sm:$0xff]
        %v713 = vld [vmem:[#allocation4 + $0xd58] sm:$0xff]
        %v714 = vld [vmem:[#allocation4 + $0xd60] sm:$0xff]
        %v715 = vld [vmem:[#allocation4 + $0xd68] sm:$0xff]
        %v716 = vld [vmem:[#allocation4 + $0xd70] sm:$0xff]
        %v717 = vld [vmem:[#allocation4 + $0xd78] sm:$0xff]
        %v718 = vld [vmem:[#allocation4 + $0xd80] sm:$0xff]
        %v719 = vld [vmem:[#allocation4 + $0xd88] sm:$0xff]
        %v720 = vld [vmem:[#allocation4 + $0xd90] sm:$0xff]
        %v721 = vld [vmem:[#allocation4 + $0xd98] sm:$0xff]
        %v722 = vld [vmem:[#allocation4 + $0xda0] sm:$0xff]
        %v723 = vld [vmem:[#allocation4 + $0xda8] sm:$0xff]
        %v724 = vld [vmem:[#allocation4 + $0xdb0] sm:$0xff]
        %v725 = vld [vmem:[#allocation4 + $0xdb8] sm:$0xff]
        %v726 = vld [vmem:[#allocation4 + $0xdc0] sm:$0xff]
        %v727 = vld [vmem:[#allocation4 + $0xdc8] sm:$0xff]
        %v728 = vld [vmem:[#allocation4 + $0xdd0] sm:$0xff]
        %v729 = vld [vmem:[#allocation4 + $0xdd8] sm:$0xff]
        %v730 = vld [vmem:[#allocation4 + $0xde0] sm:$0xff]
        %v731 = vld [vmem:[#allocation4 + $0xde8] sm:$0xff]
        %v732 = vld [vmem:[#allocation4 + $0xdf0] sm:$0xff]
        %v733 = vld [vmem:[#allocation4 + $0xdf8] sm:$0xff]
        %v734 = vld [vmem:[#allocation4 + $0xe00] sm:$0xff]
        %v735 = vld [vmem:[#allocation4 + $0xe08] sm:$0xff]
        %v736 = vld [vmem:[#allocation4 + $0xe10] sm:$0xff]
        %v737 = vld [vmem:[#allocation4 + $0xe18] sm:$0xff]
        %v738 = vld [vmem:[#allocation4 + $0xe20] sm:$0xff]
        %v739 = vld [vmem:[#allocation4 + $0xe28] sm:$0xff]
        %v740 = vld [vmem:[#allocation4 + $0xe30] sm:$0xff]
        %v741 = vld [vmem:[#allocation4 + $0xe38] sm:$0xff]
        %v742 = vld [vmem:[#allocation4 + $0xe40] sm:$0xff]
        %v743 = vld [vmem:[#allocation4 + $0xe48] sm:$0xff]
        %v744 = vld [vmem:[#allocation4 + $0xe50] sm:$0xff]
        %v745 = vld [vmem:[#allocation4 + $0xe58] sm:$0xff]
        %v746 = vld [vmem:[#allocation4 + $0xe60] sm:$0xff]
        %v747 = vld [vmem:[#allocation4 + $0xe68] sm:$0xff]
        %v748 = vld [vmem:[#allocation4 + $0xe70] sm:$0xff]
        %v749 = vld [vmem:[#allocation4 + $0xe78] sm:$0xff]
        %v750 = vld [vmem:[#allocation4 + $0xe80] sm:$0xff]
        %v751 = vld [vmem:[#allocation4 + $0xe88] sm:$0xff]
        %v752 = vld [vmem:[#allocation4 + $0xe90] sm:$0xff]
        %v753 = vld [vmem:[#allocation4 + $0xe98] sm:$0xff]
        %v754 = vld [vmem:[#allocation4 + $0xea0] sm:$0xff]
        %v755 = vld [vmem:[#allocation4 + $0xea8] sm:$0xff]
        %v756 = vld [vmem:[#allocation4 + $0xeb0] sm:$0xff]
        %v757 = vld [vmem:[#allocation4 + $0xeb8] sm:$0xff]
        %v758 = vld [vmem:[#allocation4 + $0xec0] sm:$0xff]
        %v759 = vld [vmem:[#allocation4 + $0xec8] sm:$0xff]
        %v760 = vld [vmem:[#allocation4 + $0xed0] sm:$0xff]
        %v761 = vld [vmem:[#allocation4 + $0xed8] sm:$0xff]
        %v762 = vld [vmem:[#allocation4 + $0xee0] sm:$0xff]
        %v763 = vld [vmem:[#allocation4 + $0xee8] sm:$0xff]
        %v764 = vld [vmem:[#allocation4 + $0xef0] sm:$0xff]
        %v765 = vld [vmem:[#allocation4 + $0xef8] sm:$0xff]
        %v766 = vld [vmem:[#allocation4 + $0xf00] sm:$0xff]
        %v767 = vld [vmem:[#allocation4 + $0xf08] sm:$0xff]
        %v768 = vld [vmem:[#allocation4 + $0xf10] sm:$0xff]
        %v769 = vld [vmem:[#allocation4 + $0xf18] sm:$0xff]
        %v770 = vld [vmem:[#allocation4 + $0xf20] sm:$0xff]
        %v771 = vld [vmem:[#allocation4 + $0xf28] sm:$0xff]
        %v772 = vld [vmem:[#allocation4 + $0xf30] sm:$0xff]
        %v773 = vld [vmem:[#allocation4 + $0xf38] sm:$0xff]
        %v774 = vld [vmem:[#allocation4 + $0xf40] sm:$0xff]
        %v775 = vld [vmem:[#allocation4 + $0xf48] sm:$0xff]
        %v776 = vld [vmem:[#allocation4 + $0xf50] sm:$0xff]
        %v777 = vld [vmem:[#allocation4 + $0xf58] sm:$0xff]
        %v778 = vld [vmem:[#allocation4 + $0xf60] sm:$0xff]
        %v779 = vld [vmem:[#allocation4 + $0xf68] sm:$0xff]
        %v780 = vld [vmem:[#allocation4 + $0xf70] sm:$0xff]
        %v781 = vld [vmem:[#allocation4 + $0xf78] sm:$0xff]
        %v782 = vld [vmem:[#allocation4 + $0xf80] sm:$0xff]
        %v783 = vld [vmem:[#allocation4 + $0xf88] sm:$0xff]
        %v784 = vld [vmem:[#allocation4 + $0xf90] sm:$0xff]
        %v785 = vld [vmem:[#allocation4 + $0xf98] sm:$0xff]
        %v786 = vld [vmem:[#allocation4 + $0xfa0] sm:$0xff]
        %v787 = vld [vmem:[#allocation4 + $0xfa8] sm:$0xff]
        %v788 = vld [vmem:[#allocation4 + $0xfb0] sm:$0xff]
        %v789 = vld [vmem:[#allocation4 + $0xfb8] sm:$0xff]
        %v790 = vld [vmem:[#allocation4 + $0xfc0] sm:$0xff]
        %v791 = vld [vmem:[#allocation4 + $0xfc8] sm:$0xff]
        %v792 = vld [vmem:[#allocation4 + $0xfd0] sm:$0xff]
        %v793 = vld [vmem:[#allocation4 + $0xfd8] sm:$0xff]
        %v794 = vld [vmem:[#allocation4 + $0xfe0] sm:$0xff]
        %v795 = vld [vmem:[#allocation4 + $0xfe8] sm:$0xff]
        %v796 = vld [vmem:[#allocation4 + $0xff0] sm:$0xff]
        %v797 = vld [vmem:[#allocation4 + $0xff8] sm:$0xff]
        %v806 = vunpack.c.l.b16 %v278
        %v807 = vunpack.c.h.b16 %v278
        %v808 = vunpack.c.l.b16 %v279
        %v809 = vunpack.c.h.b16 %v279
        %v810 = vunpack.c.l.b16 %v280
        %v811 = vunpack.c.h.b16 %v280
        %v812 = vunpack.c.l.b16 %v281
        %v813 = vunpack.c.h.b16 %v281
        %v814 = vunpack.c.l.b16 %v282
        %v815 = vunpack.c.h.b16 %v282
        %v816 = vunpack.c.l.b16 %v283
        %v817 = vunpack.c.h.b16 %v283
        %v818 = vunpack.c.l.b16 %v284
        %v819 = vunpack.c.h.b16 %v284
        %v820 = vunpack.c.l.b16 %v285
        %v821 = vunpack.c.h.b16 %v285
        %v822 = vpack.c.b16 %v814, %v806
        %v823 = vpack.c.b16 %v815, %v807
        %v824 = vpack.c.b16 %v816, %v808
        %v825 = vpack.c.b16 %v817, %v809
        %v826 = vpack.c.b16 %v818, %v810
        %v827 = vpack.c.b16 %v819, %v811
        %v828 = vpack.c.b16 %v820, %v812
        %v829 = vpack.c.b16 %v821, %v813
        %v1350 = vunpack.c.l.b16 %v286
        %v1351 = vunpack.c.h.b16 %v286
        %v1352 = vunpack.c.l.b16 %v287
        %v1353 = vunpack.c.h.b16 %v287
        %v1354 = vunpack.c.l.b16 %v288
        %v1355 = vunpack.c.h.b16 %v288
        %v1356 = vunpack.c.l.b16 %v289
        %v1357 = vunpack.c.h.b16 %v289
        %v1358 = vunpack.c.l.b16 %v290
        %v1359 = vunpack.c.h.b16 %v290
        %v1360 = vunpack.c.l.b16 %v291
        %v1361 = vunpack.c.h.b16 %v291
        %v1362 = vunpack.c.l.b16 %v292
        %v1363 = vunpack.c.h.b16 %v292
        %v1364 = vunpack.c.l.b16 %v293
        %v1365 = vunpack.c.h.b16 %v293
        %v1366 = vunpack.c.l.b16 %v294
        %v1367 = vunpack.c.h.b16 %v294
        %v1368 = vunpack.c.l.b16 %v295
        %v1369 = vunpack.c.h.b16 %v295
        %v1370 = vunpack.c.l.b16 %v296
        %v1371 = vunpack.c.h.b16 %v296
        %v1372 = vunpack.c.l.b16 %v297
        %v1373 = vunpack.c.h.b16 %v297
        %v1374 = vunpack.c.l.b16 %v298
        %v1375 = vunpack.c.h.b16 %v298
        %v1376 = vunpack.c.l.b16 %v299
        %v1377 = vunpack.c.h.b16 %v299
        %v1378 = vunpack.c.l.b16 %v300
        %v1379 = vunpack.c.h.b16 %v300
        %v1380 = vunpack.c.l.b16 %v301
        %v1381 = vunpack.c.h.b16 %v301
        %v1382 = vunpack.c.l.b16 %v302
        %v1383 = vunpack.c.h.b16 %v302
        %v1384 = vunpack.c.l.b16 %v303
        %v1385 = vunpack.c.h.b16 %v303
        %v1386 = vunpack.c.l.b16 %v304
        %v1387 = vunpack.c.h.b16 %v304
        %v1388 = vunpack.c.l.b16 %v305
        %v1389 = vunpack.c.h.b16 %v305
        %v1390 = vunpack.c.l.b16 %v306
        %v1391 = vunpack.c.h.b16 %v306
        %v1392 = vunpack.c.l.b16 %v307
        %v1393 = vunpack.c.h.b16 %v307
        %v1394 = vunpack.c.l.b16 %v308
        %v1395 = vunpack.c.h.b16 %v308
        %v1396 = vunpack.c.l.b16 %v309
        %v1397 = vunpack.c.h.b16 %v309
        %v1398 = vunpack.c.l.b16 %v310
        %v1399 = vunpack.c.h.b16 %v310
        %v1400 = vunpack.c.l.b16 %v311
        %v1401 = vunpack.c.h.b16 %v311
        %v1402 = vunpack.c.l.b16 %v312
        %v1403 = vunpack.c.h.b16 %v312
        %v1404 = vunpack.c.l.b16 %v313
        %v1405 = vunpack.c.h.b16 %v313
        %v1406 = vunpack.c.l.b16 %v314
        %v1407 = vunpack.c.h.b16 %v314
        %v1408 = vunpack.c.l.b16 %v315
        %v1409 = vunpack.c.h.b16 %v315
        %v1410 = vunpack.c.l.b16 %v316
        %v1411 = vunpack.c.h.b16 %v316
        %v1412 = vunpack.c.l.b16 %v317
        %v1413 = vunpack.c.h.b16 %v317
        %v1414 = vunpack.c.l.b16 %v318
        %v1415 = vunpack.c.h.b16 %v318
        %v1416 = vunpack.c.l.b16 %v319
        %v1417 = vunpack.c.h.b16 %v319
        %v1418 = vunpack.c.l.b16 %v320
        %v1419 = vunpack.c.h.b16 %v320
        %v1420 = vunpack.c.l.b16 %v321
        %v1421 = vunpack.c.h.b16 %v321
        %v1422 = vunpack.c.l.b16 %v322
        %v1423 = vunpack.c.h.b16 %v322
        %v1424 = vunpack.c.l.b16 %v323
        %v1425 = vunpack.c.h.b16 %v323
        %v1426 = vunpack.c.l.b16 %v324
        %v1427 = vunpack.c.h.b16 %v324
        %v1428 = vunpack.c.l.b16 %v325
        %v1429 = vunpack.c.h.b16 %v325
        %v1430 = vunpack.c.l.b16 %v326
        %v1431 = vunpack.c.h.b16 %v326
        %v1432 = vunpack.c.l.b16 %v327
        %v1433 = vunpack.c.h.b16 %v327
        %v1434 = vunpack.c.l.b16 %v328
        %v1435 = vunpack.c.h.b16 %v328
        %v1436 = vunpack.c.l.b16 %v329
        %v1437 = vunpack.c.h.b16 %v329
        %v1438 = vunpack.c.l.b16 %v330
        %v1439 = vunpack.c.h.b16 %v330
        %v1440 = vunpack.c.l.b16 %v331
        %v1441 = vunpack.c.h.b16 %v331
        %v1442 = vunpack.c.l.b16 %v332
        %v1443 = vunpack.c.h.b16 %v332
        %v1444 = vunpack.c.l.b16 %v333
        %v1445 = vunpack.c.h.b16 %v333
        %v1446 = vunpack.c.l.b16 %v334
        %v1447 = vunpack.c.h.b16 %v334
        %v1448 = vunpack.c.l.b16 %v335
        %v1449 = vunpack.c.h.b16 %v335
        %v1450 = vunpack.c.l.b16 %v336
        %v1451 = vunpack.c.h.b16 %v336
        %v1452 = vunpack.c.l.b16 %v337
        %v1453 = vunpack.c.h.b16 %v337
        %v1454 = vunpack.c.l.b16 %v338
        %v1455 = vunpack.c.h.b16 %v338
        %v1456 = vunpack.c.l.b16 %v339
        %v1457 = vunpack.c.h.b16 %v339
        %v1458 = vunpack.c.l.b16 %v340
        %v1459 = vunpack.c.h.b16 %v340
        %v1460 = vunpack.c.l.b16 %v341
        %v1461 = vunpack.c.h.b16 %v341
        %v1462 = vunpack.c.l.b16 %v342
        %v1463 = vunpack.c.h.b16 %v342
        %v1464 = vunpack.c.l.b16 %v343
        %v1465 = vunpack.c.h.b16 %v343
        %v1466 = vunpack.c.l.b16 %v344
        %v1467 = vunpack.c.h.b16 %v344
        %v1468 = vunpack.c.l.b16 %v345
        %v1469 = vunpack.c.h.b16 %v345
        %v1470 = vunpack.c.l.b16 %v346
        %v1471 = vunpack.c.h.b16 %v346
        %v1472 = vunpack.c.l.b16 %v347
        %v1473 = vunpack.c.h.b16 %v347
        %v1474 = vunpack.c.l.b16 %v348
        %v1475 = vunpack.c.h.b16 %v348
        %v1476 = vunpack.c.l.b16 %v349
        %v1477 = vunpack.c.h.b16 %v349
        %v1478 = vunpack.c.l.b16 %v350
        %v1479 = vunpack.c.h.b16 %v350
        %v1480 = vunpack.c.l.b16 %v351
        %v1481 = vunpack.c.h.b16 %v351
        %v1482 = vunpack.c.l.b16 %v352
        %v1483 = vunpack.c.h.b16 %v352
        %v1484 = vunpack.c.l.b16 %v353
        %v1485 = vunpack.c.h.b16 %v353
        %v1486 = vunpack.c.l.b16 %v354
        %v1487 = vunpack.c.h.b16 %v354
        %v1488 = vunpack.c.l.b16 %v355
        %v1489 = vunpack.c.h.b16 %v355
        %v1490 = vunpack.c.l.b16 %v356
        %v1491 = vunpack.c.h.b16 %v356
        %v1492 = vunpack.c.l.b16 %v357
        %v1493 = vunpack.c.h.b16 %v357
        %v1494 = vunpack.c.l.b16 %v358
        %v1495 = vunpack.c.h.b16 %v358
        %v1496 = vunpack.c.l.b16 %v359
        %v1497 = vunpack.c.h.b16 %v359
        %v1498 = vunpack.c.l.b16 %v360
        %v1499 = vunpack.c.h.b16 %v360
        %v1500 = vunpack.c.l.b16 %v361
        %v1501 = vunpack.c.h.b16 %v361
        %v1502 = vunpack.c.l.b16 %v362
        %v1503 = vunpack.c.h.b16 %v362
        %v1504 = vunpack.c.l.b16 %v363
        %v1505 = vunpack.c.h.b16 %v363
        %v1506 = vunpack.c.l.b16 %v364
        %v1507 = vunpack.c.h.b16 %v364
        %v1508 = vunpack.c.l.b16 %v365
        %v1509 = vunpack.c.h.b16 %v365
        %v1510 = vunpack.c.l.b16 %v366
        %v1511 = vunpack.c.h.b16 %v366
        %v1512 = vunpack.c.l.b16 %v367
        %v1513 = vunpack.c.h.b16 %v367
        %v1514 = vunpack.c.l.b16 %v368
        %v1515 = vunpack.c.h.b16 %v368
        %v1516 = vunpack.c.l.b16 %v369
        %v1517 = vunpack.c.h.b16 %v369
        %v1518 = vunpack.c.l.b16 %v370
        %v1519 = vunpack.c.h.b16 %v370
        %v1520 = vunpack.c.l.b16 %v371
        %v1521 = vunpack.c.h.b16 %v371
        %v1522 = vunpack.c.l.b16 %v372
        %v1523 = vunpack.c.h.b16 %v372
        %v1524 = vunpack.c.l.b16 %v373
        %v1525 = vunpack.c.h.b16 %v373
        %v1526 = vunpack.c.l.b16 %v374
        %v1527 = vunpack.c.h.b16 %v374
        %v1528 = vunpack.c.l.b16 %v375
        %v1529 = vunpack.c.h.b16 %v375
        %v1530 = vunpack.c.l.b16 %v376
        %v1531 = vunpack.c.h.b16 %v376
        %v1532 = vunpack.c.l.b16 %v377
        %v1533 = vunpack.c.h.b16 %v377
        %v1534 = vunpack.c.l.b16 %v378
        %v1535 = vunpack.c.h.b16 %v378
        %v1536 = vunpack.c.l.b16 %v379
        %v1537 = vunpack.c.h.b16 %v379
        %v1538 = vunpack.c.l.b16 %v380
        %v1539 = vunpack.c.h.b16 %v380
        %v1540 = vunpack.c.l.b16 %v381
        %v1541 = vunpack.c.h.b16 %v381
        %v1542 = vunpack.c.l.b16 %v382
        %v1543 = vunpack.c.h.b16 %v382
        %v1544 = vunpack.c.l.b16 %v383
        %v1545 = vunpack.c.h.b16 %v383
        %v1546 = vunpack.c.l.b16 %v384
        %v1547 = vunpack.c.h.b16 %v384
        %v1548 = vunpack.c.l.b16 %v385
        %v1549 = vunpack.c.h.b16 %v385
        %v1550 = vunpack.c.l.b16 %v386
        %v1551 = vunpack.c.h.b16 %v386
        %v1552 = vunpack.c.l.b16 %v387
        %v1553 = vunpack.c.h.b16 %v387
        %v1554 = vunpack.c.l.b16 %v388
        %v1555 = vunpack.c.h.b16 %v388
        %v1556 = vunpack.c.l.b16 %v389
        %v1557 = vunpack.c.h.b16 %v389
        %v1558 = vunpack.c.l.b16 %v390
        %v1559 = vunpack.c.h.b16 %v390
        %v1560 = vunpack.c.l.b16 %v391
        %v1561 = vunpack.c.h.b16 %v391
        %v1562 = vunpack.c.l.b16 %v392
        %v1563 = vunpack.c.h.b16 %v392
        %v1564 = vunpack.c.l.b16 %v393
        %v1565 = vunpack.c.h.b16 %v393
        %v1566 = vunpack.c.l.b16 %v394
        %v1567 = vunpack.c.h.b16 %v394
        %v1568 = vunpack.c.l.b16 %v395
        %v1569 = vunpack.c.h.b16 %v395
        %v1570 = vunpack.c.l.b16 %v396
        %v1571 = vunpack.c.h.b16 %v396
        %v1572 = vunpack.c.l.b16 %v397
        %v1573 = vunpack.c.h.b16 %v397
        %v1574 = vunpack.c.l.b16 %v398
        %v1575 = vunpack.c.h.b16 %v398
        %v1576 = vunpack.c.l.b16 %v399
        %v1577 = vunpack.c.h.b16 %v399
        %v1578 = vunpack.c.l.b16 %v400
        %v1579 = vunpack.c.h.b16 %v400
        %v1580 = vunpack.c.l.b16 %v401
        %v1581 = vunpack.c.h.b16 %v401
        %v1582 = vunpack.c.l.b16 %v402
        %v1583 = vunpack.c.h.b16 %v402
        %v1584 = vunpack.c.l.b16 %v403
        %v1585 = vunpack.c.h.b16 %v403
        %v1586 = vunpack.c.l.b16 %v404
        %v1587 = vunpack.c.h.b16 %v404
        %v1588 = vunpack.c.l.b16 %v405
        %v1589 = vunpack.c.h.b16 %v405
        %v1590 = vunpack.c.l.b16 %v406
        %v1591 = vunpack.c.h.b16 %v406
        %v1592 = vunpack.c.l.b16 %v407
        %v1593 = vunpack.c.h.b16 %v407
        %v1594 = vunpack.c.l.b16 %v408
        %v1595 = vunpack.c.h.b16 %v408
        %v1596 = vunpack.c.l.b16 %v409
        %v1597 = vunpack.c.h.b16 %v409
        %v1598 = vunpack.c.l.b16 %v410
        %v1599 = vunpack.c.h.b16 %v410
        %v1600 = vunpack.c.l.b16 %v411
        %v1601 = vunpack.c.h.b16 %v411
        %v1602 = vunpack.c.l.b16 %v412
        %v1603 = vunpack.c.h.b16 %v412
        %v1604 = vunpack.c.l.b16 %v413
        %v1605 = vunpack.c.h.b16 %v413
        %v1606 = vunpack.c.l.b16 %v414
        %v1607 = vunpack.c.h.b16 %v414
        %v1608 = vunpack.c.l.b16 %v415
        %v1609 = vunpack.c.h.b16 %v415
        %v1610 = vunpack.c.l.b16 %v416
        %v1611 = vunpack.c.h.b16 %v416
        %v1612 = vunpack.c.l.b16 %v417
        %v1613 = vunpack.c.h.b16 %v417
        %v1614 = vunpack.c.l.b16 %v418
        %v1615 = vunpack.c.h.b16 %v418
        %v1616 = vunpack.c.l.b16 %v419
        %v1617 = vunpack.c.h.b16 %v419
        %v1618 = vunpack.c.l.b16 %v420
        %v1619 = vunpack.c.h.b16 %v420
        %v1620 = vunpack.c.l.b16 %v421
        %v1621 = vunpack.c.h.b16 %v421
        %v1622 = vunpack.c.l.b16 %v422
        %v1623 = vunpack.c.h.b16 %v422
        %v1624 = vunpack.c.l.b16 %v423
        %v1625 = vunpack.c.h.b16 %v423
        %v1626 = vunpack.c.l.b16 %v424
        %v1627 = vunpack.c.h.b16 %v424
        %v1628 = vunpack.c.l.b16 %v425
        %v1629 = vunpack.c.h.b16 %v425
        %v1630 = vunpack.c.l.b16 %v426
        %v1631 = vunpack.c.h.b16 %v426
        %v1632 = vunpack.c.l.b16 %v427
        %v1633 = vunpack.c.h.b16 %v427
        %v1634 = vunpack.c.l.b16 %v428
        %v1635 = vunpack.c.h.b16 %v428
        %v1636 = vunpack.c.l.b16 %v429
        %v1637 = vunpack.c.h.b16 %v429
        %v1638 = vunpack.c.l.b16 %v430
        %v1639 = vunpack.c.h.b16 %v430
        %v1640 = vunpack.c.l.b16 %v431
        %v1641 = vunpack.c.h.b16 %v431
        %v1642 = vunpack.c.l.b16 %v432
        %v1643 = vunpack.c.h.b16 %v432
        %v1644 = vunpack.c.l.b16 %v433
        %v1645 = vunpack.c.h.b16 %v433
        %v1646 = vunpack.c.l.b16 %v434
        %v1647 = vunpack.c.h.b16 %v434
        %v1648 = vunpack.c.l.b16 %v435
        %v1649 = vunpack.c.h.b16 %v435
        %v1650 = vunpack.c.l.b16 %v436
        %v1651 = vunpack.c.h.b16 %v436
        %v1652 = vunpack.c.l.b16 %v437
        %v1653 = vunpack.c.h.b16 %v437
        %v1654 = vunpack.c.l.b16 %v438
        %v1655 = vunpack.c.h.b16 %v438
        %v1656 = vunpack.c.l.b16 %v439
        %v1657 = vunpack.c.h.b16 %v439
        %v1658 = vunpack.c.l.b16 %v440
        %v1659 = vunpack.c.h.b16 %v440
        %v1660 = vunpack.c.l.b16 %v441
        %v1661 = vunpack.c.h.b16 %v441
        %v1662 = vunpack.c.l.b16 %v442
        %v1663 = vunpack.c.h.b16 %v442
        %v1664 = vunpack.c.l.b16 %v443
        %v1665 = vunpack.c.h.b16 %v443
        %v1666 = vunpack.c.l.b16 %v444
        %v1667 = vunpack.c.h.b16 %v444
        %v1668 = vunpack.c.l.b16 %v445
        %v1669 = vunpack.c.h.b16 %v445
        %v1670 = vunpack.c.l.b16 %v446
        %v1671 = vunpack.c.h.b16 %v446
        %v1672 = vunpack.c.l.b16 %v447
        %v1673 = vunpack.c.h.b16 %v447
        %v1674 = vunpack.c.l.b16 %v448
        %v1675 = vunpack.c.h.b16 %v448
        %v1676 = vunpack.c.l.b16 %v449
        %v1677 = vunpack.c.h.b16 %v449
        %v1678 = vunpack.c.l.b16 %v450
        %v1679 = vunpack.c.h.b16 %v450
        %v1680 = vunpack.c.l.b16 %v451
        %v1681 = vunpack.c.h.b16 %v451
        %v1682 = vunpack.c.l.b16 %v452
        %v1683 = vunpack.c.h.b16 %v452
        %v1684 = vunpack.c.l.b16 %v453
        %v1685 = vunpack.c.h.b16 %v453
        %v1686 = vunpack.c.l.b16 %v454
        %v1687 = vunpack.c.h.b16 %v454
        %v1688 = vunpack.c.l.b16 %v455
        %v1689 = vunpack.c.h.b16 %v455
        %v1690 = vunpack.c.l.b16 %v456
        %v1691 = vunpack.c.h.b16 %v456
        %v1692 = vunpack.c.l.b16 %v457
        %v1693 = vunpack.c.h.b16 %v457
        %v1694 = vunpack.c.l.b16 %v458
        %v1695 = vunpack.c.h.b16 %v458
        %v1696 = vunpack.c.l.b16 %v459
        %v1697 = vunpack.c.h.b16 %v459
        %v1698 = vunpack.c.l.b16 %v460
        %v1699 = vunpack.c.h.b16 %v460
        %v1700 = vunpack.c.l.b16 %v461
        %v1701 = vunpack.c.h.b16 %v461
        %v1702 = vunpack.c.l.b16 %v462
        %v1703 = vunpack.c.h.b16 %v462
        %v1704 = vunpack.c.l.b16 %v463
        %v1705 = vunpack.c.h.b16 %v463
        %v1706 = vunpack.c.l.b16 %v464
        %v1707 = vunpack.c.h.b16 %v464
        %v1708 = vunpack.c.l.b16 %v465
        %v1709 = vunpack.c.h.b16 %v465
        %v1710 = vunpack.c.l.b16 %v466
        %v1711 = vunpack.c.h.b16 %v466
        %v1712 = vunpack.c.l.b16 %v467
        %v1713 = vunpack.c.h.b16 %v467
        %v1714 = vunpack.c.l.b16 %v468
        %v1715 = vunpack.c.h.b16 %v468
        %v1716 = vunpack.c.l.b16 %v469
        %v1717 = vunpack.c.h.b16 %v469
        %v1718 = vunpack.c.l.b16 %v470
        %v1719 = vunpack.c.h.b16 %v470
        %v1720 = vunpack.c.l.b16 %v471
        %v1721 = vunpack.c.h.b16 %v471
        %v1722 = vunpack.c.l.b16 %v472
        %v1723 = vunpack.c.h.b16 %v472
        %v1724 = vunpack.c.l.b16 %v473
        %v1725 = vunpack.c.h.b16 %v473
        %v1726 = vunpack.c.l.b16 %v474
        %v1727 = vunpack.c.h.b16 %v474
        %v1728 = vunpack.c.l.b16 %v475
        %v1729 = vunpack.c.h.b16 %v475
        %v1730 = vunpack.c.l.b16 %v476
        %v1731 = vunpack.c.h.b16 %v476
        %v1732 = vunpack.c.l.b16 %v477
        %v1733 = vunpack.c.h.b16 %v477
        %v1734 = vunpack.c.l.b16 %v478
        %v1735 = vunpack.c.h.b16 %v478
        %v1736 = vunpack.c.l.b16 %v479
        %v1737 = vunpack.c.h.b16 %v479
        %v1738 = vunpack.c.l.b16 %v480
        %v1739 = vunpack.c.h.b16 %v480
        %v1740 = vunpack.c.l.b16 %v481
        %v1741 = vunpack.c.h.b16 %v481
        %v1742 = vunpack.c.l.b16 %v482
        %v1743 = vunpack.c.h.b16 %v482
        %v1744 = vunpack.c.l.b16 %v483
        %v1745 = vunpack.c.h.b16 %v483
        %v1746 = vunpack.c.l.b16 %v484
        %v1747 = vunpack.c.h.b16 %v484
        %v1748 = vunpack.c.l.b16 %v485
        %v1749 = vunpack.c.h.b16 %v485
        %v1750 = vunpack.c.l.b16 %v486
        %v1751 = vunpack.c.h.b16 %v486
        %v1752 = vunpack.c.l.b16 %v487
        %v1753 = vunpack.c.h.b16 %v487
        %v1754 = vunpack.c.l.b16 %v488
        %v1755 = vunpack.c.h.b16 %v488
        %v1756 = vunpack.c.l.b16 %v489
        %v1757 = vunpack.c.h.b16 %v489
        %v1758 = vunpack.c.l.b16 %v490
        %v1759 = vunpack.c.h.b16 %v490
        %v1760 = vunpack.c.l.b16 %v491
        %v1761 = vunpack.c.h.b16 %v491
        %v1762 = vunpack.c.l.b16 %v492
        %v1763 = vunpack.c.h.b16 %v492
        %v1764 = vunpack.c.l.b16 %v493
        %v1765 = vunpack.c.h.b16 %v493
        %v1766 = vunpack.c.l.b16 %v494
        %v1767 = vunpack.c.h.b16 %v494
        %v1768 = vunpack.c.l.b16 %v495
        %v1769 = vunpack.c.h.b16 %v495
        %v1770 = vunpack.c.l.b16 %v496
        %v1771 = vunpack.c.h.b16 %v496
        %v1772 = vunpack.c.l.b16 %v497
        %v1773 = vunpack.c.h.b16 %v497
        %v1774 = vunpack.c.l.b16 %v498
        %v1775 = vunpack.c.h.b16 %v498
        %v1776 = vunpack.c.l.b16 %v499
        %v1777 = vunpack.c.h.b16 %v499
        %v1778 = vunpack.c.l.b16 %v500
        %v1779 = vunpack.c.h.b16 %v500
        %v1780 = vunpack.c.l.b16 %v501
        %v1781 = vunpack.c.h.b16 %v501
        %v1782 = vunpack.c.l.b16 %v502
        %v1783 = vunpack.c.h.b16 %v502
        %v1784 = vunpack.c.l.b16 %v503
        %v1785 = vunpack.c.h.b16 %v503
        %v1786 = vunpack.c.l.b16 %v504
        %v1787 = vunpack.c.h.b16 %v504
        %v1788 = vunpack.c.l.b16 %v505
        %v1789 = vunpack.c.h.b16 %v505
        %v1790 = vunpack.c.l.b16 %v506
        %v1791 = vunpack.c.h.b16 %v506
        %v1792 = vunpack.c.l.b16 %v507
        %v1793 = vunpack.c.h.b16 %v507
        %v1794 = vunpack.c.l.b16 %v508
        %v1795 = vunpack.c.h.b16 %v508
        %v1796 = vunpack.c.l.b16 %v509
        %v1797 = vunpack.c.h.b16 %v509
        %v1798 = vunpack.c.l.b16 %v510
        %v1799 = vunpack.c.h.b16 %v510
        %v1800 = vunpack.c.l.b16 %v511
        %v1801 = vunpack.c.h.b16 %v511
        %v1802 = vunpack.c.l.b16 %v512
        %v1803 = vunpack.c.h.b16 %v512
        %v1804 = vunpack.c.l.b16 %v513
        %v1805 = vunpack.c.h.b16 %v513
        %v1806 = vunpack.c.l.b16 %v514
        %v1807 = vunpack.c.h.b16 %v514
        %v1808 = vunpack.c.l.b16 %v515
        %v1809 = vunpack.c.h.b16 %v515
        %v1810 = vunpack.c.l.b16 %v516
        %v1811 = vunpack.c.h.b16 %v516
        %v1812 = vunpack.c.l.b16 %v517
        %v1813 = vunpack.c.h.b16 %v517
        %v1814 = vunpack.c.l.b16 %v518
        %v1815 = vunpack.c.h.b16 %v518
        %v1816 = vunpack.c.l.b16 %v519
        %v1817 = vunpack.c.h.b16 %v519
        %v1818 = vunpack.c.l.b16 %v520
        %v1819 = vunpack.c.h.b16 %v520
        %v1820 = vunpack.c.l.b16 %v521
        %v1821 = vunpack.c.h.b16 %v521
        %v1822 = vunpack.c.l.b16 %v522
        %v1823 = vunpack.c.h.b16 %v522
        %v1824 = vunpack.c.l.b16 %v523
        %v1825 = vunpack.c.h.b16 %v523
        %v1826 = vunpack.c.l.b16 %v524
        %v1827 = vunpack.c.h.b16 %v524
        %v1828 = vunpack.c.l.b16 %v525
        %v1829 = vunpack.c.h.b16 %v525
        %v1830 = vunpack.c.l.b16 %v526
        %v1831 = vunpack.c.h.b16 %v526
        %v1832 = vunpack.c.l.b16 %v527
        %v1833 = vunpack.c.h.b16 %v527
        %v1834 = vunpack.c.l.b16 %v528
        %v1835 = vunpack.c.h.b16 %v528
        %v1836 = vunpack.c.l.b16 %v529
        %v1837 = vunpack.c.h.b16 %v529
        %v1838 = vunpack.c.l.b16 %v530
        %v1839 = vunpack.c.h.b16 %v530
        %v1840 = vunpack.c.l.b16 %v531
        %v1841 = vunpack.c.h.b16 %v531
        %v1842 = vunpack.c.l.b16 %v532
        %v1843 = vunpack.c.h.b16 %v532
        %v1844 = vunpack.c.l.b16 %v533
        %v1845 = vunpack.c.h.b16 %v533
        %v1846 = vunpack.c.l.b16 %v534
        %v1847 = vunpack.c.h.b16 %v534
        %v1848 = vunpack.c.l.b16 %v535
        %v1849 = vunpack.c.h.b16 %v535
        %v1850 = vunpack.c.l.b16 %v536
        %v1851 = vunpack.c.h.b16 %v536
        %v1852 = vunpack.c.l.b16 %v537
        %v1853 = vunpack.c.h.b16 %v537
        %v1854 = vunpack.c.l.b16 %v538
        %v1855 = vunpack.c.h.b16 %v538
        %v1856 = vunpack.c.l.b16 %v539
        %v1857 = vunpack.c.h.b16 %v539
        %v1858 = vunpack.c.l.b16 %v540
        %v1859 = vunpack.c.h.b16 %v540
        %v1860 = vunpack.c.l.b16 %v541
        %v1861 = vunpack.c.h.b16 %v541
        %v1862 = vunpack.c.l.b16 %v542
        %v1863 = vunpack.c.h.b16 %v542
        %v1864 = vunpack.c.l.b16 %v543
        %v1865 = vunpack.c.h.b16 %v543
        %v1866 = vunpack.c.l.b16 %v544
        %v1867 = vunpack.c.h.b16 %v544
        %v1868 = vunpack.c.l.b16 %v545
        %v1869 = vunpack.c.h.b16 %v545
        %v1870 = vunpack.c.l.b16 %v546
        %v1871 = vunpack.c.h.b16 %v546
        %v1872 = vunpack.c.l.b16 %v547
        %v1873 = vunpack.c.h.b16 %v547
        %v1874 = vunpack.c.l.b16 %v548
        %v1875 = vunpack.c.h.b16 %v548
        %v1876 = vunpack.c.l.b16 %v549
        %v1877 = vunpack.c.h.b16 %v549
        %v1878 = vunpack.c.l.b16 %v550
        %v1879 = vunpack.c.h.b16 %v550
        %v1880 = vunpack.c.l.b16 %v551
        %v1881 = vunpack.c.h.b16 %v551
        %v1882 = vunpack.c.l.b16 %v552
        %v1883 = vunpack.c.h.b16 %v552
        %v1884 = vunpack.c.l.b16 %v553
        %v1885 = vunpack.c.h.b16 %v553
        %v1886 = vunpack.c.l.b16 %v554
        %v1887 = vunpack.c.h.b16 %v554
        %v1888 = vunpack.c.l.b16 %v555
        %v1889 = vunpack.c.h.b16 %v555
        %v1890 = vunpack.c.l.b16 %v556
        %v1891 = vunpack.c.h.b16 %v556
        %v1892 = vunpack.c.l.b16 %v557
        %v1893 = vunpack.c.h.b16 %v557
        %v1894 = vunpack.c.l.b16 %v558
        %v1895 = vunpack.c.h.b16 %v558
        %v1896 = vunpack.c.l.b16 %v559
        %v1897 = vunpack.c.h.b16 %v559
        %v1898 = vunpack.c.l.b16 %v560
        %v1899 = vunpack.c.h.b16 %v560
        %v1900 = vunpack.c.l.b16 %v561
        %v1901 = vunpack.c.h.b16 %v561
        %v1902 = vunpack.c.l.b16 %v562
        %v1903 = vunpack.c.h.b16 %v562
        %v1904 = vunpack.c.l.b16 %v563
        %v1905 = vunpack.c.h.b16 %v563
        %v1906 = vunpack.c.l.b16 %v564
        %v1907 = vunpack.c.h.b16 %v564
        %v1908 = vunpack.c.l.b16 %v565
        %v1909 = vunpack.c.h.b16 %v565
        %v1910 = vunpack.c.l.b16 %v566
        %v1911 = vunpack.c.h.b16 %v566
        %v1912 = vunpack.c.l.b16 %v567
        %v1913 = vunpack.c.h.b16 %v567
        %v1914 = vunpack.c.l.b16 %v568
        %v1915 = vunpack.c.h.b16 %v568
        %v1916 = vunpack.c.l.b16 %v569
        %v1917 = vunpack.c.h.b16 %v569
        %v1918 = vunpack.c.l.b16 %v570
        %v1919 = vunpack.c.h.b16 %v570
        %v1920 = vunpack.c.l.b16 %v571
        %v1921 = vunpack.c.h.b16 %v571
        %v1922 = vunpack.c.l.b16 %v572
        %v1923 = vunpack.c.h.b16 %v572
        %v1924 = vunpack.c.l.b16 %v573
        %v1925 = vunpack.c.h.b16 %v573
        %v1926 = vunpack.c.l.b16 %v574
        %v1927 = vunpack.c.h.b16 %v574
        %v1928 = vunpack.c.l.b16 %v575
        %v1929 = vunpack.c.h.b16 %v575
        %v1930 = vunpack.c.l.b16 %v576
        %v1931 = vunpack.c.h.b16 %v576
        %v1932 = vunpack.c.l.b16 %v577
        %v1933 = vunpack.c.h.b16 %v577
        %v1934 = vunpack.c.l.b16 %v578
        %v1935 = vunpack.c.h.b16 %v578
        %v1936 = vunpack.c.l.b16 %v579
        %v1937 = vunpack.c.h.b16 %v579
        %v1938 = vunpack.c.l.b16 %v580
        %v1939 = vunpack.c.h.b16 %v580
        %v1940 = vunpack.c.l.b16 %v581
        %v1941 = vunpack.c.h.b16 %v581
        %v1942 = vunpack.c.l.b16 %v582
        %v1943 = vunpack.c.h.b16 %v582
        %v1944 = vunpack.c.l.b16 %v583
        %v1945 = vunpack.c.h.b16 %v583
        %v1946 = vunpack.c.l.b16 %v584
        %v1947 = vunpack.c.h.b16 %v584
        %v1948 = vunpack.c.l.b16 %v585
        %v1949 = vunpack.c.h.b16 %v585
        %v1950 = vunpack.c.l.b16 %v586
        %v1951 = vunpack.c.h.b16 %v586
        %v1952 = vunpack.c.l.b16 %v587
        %v1953 = vunpack.c.h.b16 %v587
        %v1954 = vunpack.c.l.b16 %v588
        %v1955 = vunpack.c.h.b16 %v588
        %v1956 = vunpack.c.l.b16 %v589
        %v1957 = vunpack.c.h.b16 %v589
        %v1958 = vunpack.c.l.b16 %v590
        %v1959 = vunpack.c.h.b16 %v590
        %v1960 = vunpack.c.l.b16 %v591
        %v1961 = vunpack.c.h.b16 %v591
        %v1962 = vunpack.c.l.b16 %v592
        %v1963 = vunpack.c.h.b16 %v592
        %v1964 = vunpack.c.l.b16 %v593
        %v1965 = vunpack.c.h.b16 %v593
        %v1966 = vunpack.c.l.b16 %v594
        %v1967 = vunpack.c.h.b16 %v594
        %v1968 = vunpack.c.l.b16 %v595
        %v1969 = vunpack.c.h.b16 %v595
        %v1970 = vunpack.c.l.b16 %v596
        %v1971 = vunpack.c.h.b16 %v596
        %v1972 = vunpack.c.l.b16 %v597
        %v1973 = vunpack.c.h.b16 %v597
        %v1974 = vunpack.c.l.b16 %v598
        %v1975 = vunpack.c.h.b16 %v598
        %v1976 = vunpack.c.l.b16 %v599
        %v1977 = vunpack.c.h.b16 %v599
        %v1978 = vunpack.c.l.b16 %v600
        %v1979 = vunpack.c.h.b16 %v600
        %v1980 = vunpack.c.l.b16 %v601
        %v1981 = vunpack.c.h.b16 %v601
        %v1982 = vunpack.c.l.b16 %v602
        %v1983 = vunpack.c.h.b16 %v602
        %v1984 = vunpack.c.l.b16 %v603
        %v1985 = vunpack.c.h.b16 %v603
        %v1986 = vunpack.c.l.b16 %v604
        %v1987 = vunpack.c.h.b16 %v604
        %v1988 = vunpack.c.l.b16 %v605
        %v1989 = vunpack.c.h.b16 %v605
        %v1990 = vunpack.c.l.b16 %v606
        %v1991 = vunpack.c.h.b16 %v606
        %v1992 = vunpack.c.l.b16 %v607
        %v1993 = vunpack.c.h.b16 %v607
        %v1994 = vunpack.c.l.b16 %v608
        %v1995 = vunpack.c.h.b16 %v608
        %v1996 = vunpack.c.l.b16 %v609
        %v1997 = vunpack.c.h.b16 %v609
        %v1998 = vunpack.c.l.b16 %v610
        %v1999 = vunpack.c.h.b16 %v610
        %v2000 = vunpack.c.l.b16 %v611
        %v2001 = vunpack.c.h.b16 %v611
        %v2002 = vunpack.c.l.b16 %v612
        %v2003 = vunpack.c.h.b16 %v612
        %v2004 = vunpack.c.l.b16 %v613
        %v2005 = vunpack.c.h.b16 %v613
        %v2006 = vunpack.c.l.b16 %v614
        %v2007 = vunpack.c.h.b16 %v614
        %v2008 = vunpack.c.l.b16 %v615
        %v2009 = vunpack.c.h.b16 %v615
        %v2010 = vunpack.c.l.b16 %v616
        %v2011 = vunpack.c.h.b16 %v616
        %v2012 = vunpack.c.l.b16 %v617
        %v2013 = vunpack.c.h.b16 %v617
        %v2014 = vunpack.c.l.b16 %v618
        %v2015 = vunpack.c.h.b16 %v618
        %v2016 = vunpack.c.l.b16 %v619
        %v2017 = vunpack.c.h.b16 %v619
        %v2018 = vunpack.c.l.b16 %v620
        %v2019 = vunpack.c.h.b16 %v620
        %v2020 = vunpack.c.l.b16 %v621
        %v2021 = vunpack.c.h.b16 %v621
        %v2022 = vunpack.c.l.b16 %v622
        %v2023 = vunpack.c.h.b16 %v622
        %v2024 = vunpack.c.l.b16 %v623
        %v2025 = vunpack.c.h.b16 %v623
        %v2026 = vunpack.c.l.b16 %v624
        %v2027 = vunpack.c.h.b16 %v624
        %v2028 = vunpack.c.l.b16 %v625
        %v2029 = vunpack.c.h.b16 %v625
        %v2030 = vunpack.c.l.b16 %v626
        %v2031 = vunpack.c.h.b16 %v626
        %v2032 = vunpack.c.l.b16 %v627
        %v2033 = vunpack.c.h.b16 %v627
        %v2034 = vunpack.c.l.b16 %v628
        %v2035 = vunpack.c.h.b16 %v628
        %v2036 = vunpack.c.l.b16 %v629
        %v2037 = vunpack.c.h.b16 %v629
        %v2038 = vunpack.c.l.b16 %v630
        %v2039 = vunpack.c.h.b16 %v630
        %v2040 = vunpack.c.l.b16 %v631
        %v2041 = vunpack.c.h.b16 %v631
        %v2042 = vunpack.c.l.b16 %v632
        %v2043 = vunpack.c.h.b16 %v632
        %v2044 = vunpack.c.l.b16 %v633
        %v2045 = vunpack.c.h.b16 %v633
        %v2046 = vunpack.c.l.b16 %v634
        %v2047 = vunpack.c.h.b16 %v634
        %v2048 = vunpack.c.l.b16 %v635
        %v2049 = vunpack.c.h.b16 %v635
        %v2050 = vunpack.c.l.b16 %v636
        %v2051 = vunpack.c.h.b16 %v636
        %v2052 = vunpack.c.l.b16 %v637
        %v2053 = vunpack.c.h.b16 %v637
        %v2054 = vunpack.c.l.b16 %v638
        %v2055 = vunpack.c.h.b16 %v638
        %v2056 = vunpack.c.l.b16 %v639
        %v2057 = vunpack.c.h.b16 %v639
        %v2058 = vunpack.c.l.b16 %v640
        %v2059 = vunpack.c.h.b16 %v640
        %v2060 = vunpack.c.l.b16 %v641
        %v2061 = vunpack.c.h.b16 %v641
        %v2062 = vunpack.c.l.b16 %v642
        %v2063 = vunpack.c.h.b16 %v642
        %v2064 = vunpack.c.l.b16 %v643
        %v2065 = vunpack.c.h.b16 %v643
        %v2066 = vunpack.c.l.b16 %v644
        %v2067 = vunpack.c.h.b16 %v644
        %v2068 = vunpack.c.l.b16 %v645
        %v2069 = vunpack.c.h.b16 %v645
        %v2070 = vunpack.c.l.b16 %v646
        %v2071 = vunpack.c.h.b16 %v646
        %v2072 = vunpack.c.l.b16 %v647
        %v2073 = vunpack.c.h.b16 %v647
        %v2074 = vunpack.c.l.b16 %v648
        %v2075 = vunpack.c.h.b16 %v648
        %v2076 = vunpack.c.l.b16 %v649
        %v2077 = vunpack.c.h.b16 %v649
        %v2078 = vunpack.c.l.b16 %v650
        %v2079 = vunpack.c.h.b16 %v650
        %v2080 = vunpack.c.l.b16 %v651
        %v2081 = vunpack.c.h.b16 %v651
        %v2082 = vunpack.c.l.b16 %v652
        %v2083 = vunpack.c.h.b16 %v652
        %v2084 = vunpack.c.l.b16 %v653
        %v2085 = vunpack.c.h.b16 %v653
        %v2086 = vunpack.c.l.b16 %v654
        %v2087 = vunpack.c.h.b16 %v654
        %v2088 = vunpack.c.l.b16 %v655
        %v2089 = vunpack.c.h.b16 %v655
        %v2090 = vunpack.c.l.b16 %v656
        %v2091 = vunpack.c.h.b16 %v656
        %v2092 = vunpack.c.l.b16 %v657
        %v2093 = vunpack.c.h.b16 %v657
        %v2094 = vunpack.c.l.b16 %v658
        %v2095 = vunpack.c.h.b16 %v658
        %v2096 = vunpack.c.l.b16 %v659
        %v2097 = vunpack.c.h.b16 %v659
        %v2098 = vunpack.c.l.b16 %v660
        %v2099 = vunpack.c.h.b16 %v660
        %v2100 = vunpack.c.l.b16 %v661
        %v2101 = vunpack.c.h.b16 %v661
        %v2102 = vunpack.c.l.b16 %v662
        %v2103 = vunpack.c.h.b16 %v662
        %v2104 = vunpack.c.l.b16 %v663
        %v2105 = vunpack.c.h.b16 %v663
        %v2106 = vunpack.c.l.b16 %v664
        %v2107 = vunpack.c.h.b16 %v664
        %v2108 = vunpack.c.l.b16 %v665
        %v2109 = vunpack.c.h.b16 %v665
        %v2110 = vunpack.c.l.b16 %v666
        %v2111 = vunpack.c.h.b16 %v666
        %v2112 = vunpack.c.l.b16 %v667
        %v2113 = vunpack.c.h.b16 %v667
        %v2114 = vunpack.c.l.b16 %v668
        %v2115 = vunpack.c.h.b16 %v668
        %v2116 = vunpack.c.l.b16 %v669
        %v2117 = vunpack.c.h.b16 %v669
        %v2118 = vunpack.c.l.b16 %v670
        %v2119 = vunpack.c.h.b16 %v670
        %v2120 = vunpack.c.l.b16 %v671
        %v2121 = vunpack.c.h.b16 %v671
        %v2122 = vunpack.c.l.b16 %v672
        %v2123 = vunpack.c.h.b16 %v672
        %v2124 = vunpack.c.l.b16 %v673
        %v2125 = vunpack.c.h.b16 %v673
        %v2126 = vunpack.c.l.b16 %v674
        %v2127 = vunpack.c.h.b16 %v674
        %v2128 = vunpack.c.l.b16 %v675
        %v2129 = vunpack.c.h.b16 %v675
        %v2130 = vunpack.c.l.b16 %v676
        %v2131 = vunpack.c.h.b16 %v676
        %v2132 = vunpack.c.l.b16 %v677
        %v2133 = vunpack.c.h.b16 %v677
        %v2134 = vunpack.c.l.b16 %v678
        %v2135 = vunpack.c.h.b16 %v678
        %v2136 = vunpack.c.l.b16 %v679
        %v2137 = vunpack.c.h.b16 %v679
        %v2138 = vunpack.c.l.b16 %v680
        %v2139 = vunpack.c.h.b16 %v680
        %v2140 = vunpack.c.l.b16 %v681
        %v2141 = vunpack.c.h.b16 %v681
        %v2142 = vunpack.c.l.b16 %v682
        %v2143 = vunpack.c.h.b16 %v682
        %v2144 = vunpack.c.l.b16 %v683
        %v2145 = vunpack.c.h.b16 %v683
        %v2146 = vunpack.c.l.b16 %v684
        %v2147 = vunpack.c.h.b16 %v684
        %v2148 = vunpack.c.l.b16 %v685
        %v2149 = vunpack.c.h.b16 %v685
        %v2150 = vunpack.c.l.b16 %v686
        %v2151 = vunpack.c.h.b16 %v686
        %v2152 = vunpack.c.l.b16 %v687
        %v2153 = vunpack.c.h.b16 %v687
        %v2154 = vunpack.c.l.b16 %v688
        %v2155 = vunpack.c.h.b16 %v688
        %v2156 = vunpack.c.l.b16 %v689
        %v2157 = vunpack.c.h.b16 %v689
        %v2158 = vunpack.c.l.b16 %v690
        %v2159 = vunpack.c.h.b16 %v690
        %v2160 = vunpack.c.l.b16 %v691
        %v2161 = vunpack.c.h.b16 %v691
        %v2162 = vunpack.c.l.b16 %v692
        %v2163 = vunpack.c.h.b16 %v692
        %v2164 = vunpack.c.l.b16 %v693
        %v2165 = vunpack.c.h.b16 %v693
        %v2166 = vunpack.c.l.b16 %v694
        %v2167 = vunpack.c.h.b16 %v694
        %v2168 = vunpack.c.l.b16 %v695
        %v2169 = vunpack.c.h.b16 %v695
        %v2170 = vunpack.c.l.b16 %v696
        %v2171 = vunpack.c.h.b16 %v696
        %v2172 = vunpack.c.l.b16 %v697
        %v2173 = vunpack.c.h.b16 %v697
        %v2174 = vunpack.c.l.b16 %v698
        %v2175 = vunpack.c.h.b16 %v698
        %v2176 = vunpack.c.l.b16 %v699
        %v2177 = vunpack.c.h.b16 %v699
        %v2178 = vunpack.c.l.b16 %v700
        %v2179 = vunpack.c.h.b16 %v700
        %v2180 = vunpack.c.l.b16 %v701
        %v2181 = vunpack.c.h.b16 %v701
        %v2182 = vunpack.c.l.b16 %v702
        %v2183 = vunpack.c.h.b16 %v702
        %v2184 = vunpack.c.l.b16 %v703
        %v2185 = vunpack.c.h.b16 %v703
        %v2186 = vunpack.c.l.b16 %v704
        %v2187 = vunpack.c.h.b16 %v704
        %v2188 = vunpack.c.l.b16 %v705
        %v2189 = vunpack.c.h.b16 %v705
        %v2190 = vunpack.c.l.b16 %v706
        %v2191 = vunpack.c.h.b16 %v706
        %v2192 = vunpack.c.l.b16 %v707
        %v2193 = vunpack.c.h.b16 %v707
        %v2194 = vunpack.c.l.b16 %v708
        %v2195 = vunpack.c.h.b16 %v708
        %v2196 = vunpack.c.l.b16 %v709
        %v2197 = vunpack.c.h.b16 %v709
        %v2198 = vunpack.c.l.b16 %v710
        %v2199 = vunpack.c.h.b16 %v710
        %v2200 = vunpack.c.l.b16 %v711
        %v2201 = vunpack.c.h.b16 %v711
        %v2202 = vunpack.c.l.b16 %v712
        %v2203 = vunpack.c.h.b16 %v712
        %v2204 = vunpack.c.l.b16 %v713
        %v2205 = vunpack.c.h.b16 %v713
        %v2206 = vunpack.c.l.b16 %v714
        %v2207 = vunpack.c.h.b16 %v714
        %v2208 = vunpack.c.l.b16 %v715
        %v2209 = vunpack.c.h.b16 %v715
        %v2210 = vunpack.c.l.b16 %v716
        %v2211 = vunpack.c.h.b16 %v716
        %v2212 = vunpack.c.l.b16 %v717
        %v2213 = vunpack.c.h.b16 %v717
        %v2214 = vunpack.c.l.b16 %v718
        %v2215 = vunpack.c.h.b16 %v718
        %v2216 = vunpack.c.l.b16 %v719
        %v2217 = vunpack.c.h.b16 %v719
        %v2218 = vunpack.c.l.b16 %v720
        %v2219 = vunpack.c.h.b16 %v720
        %v2220 = vunpack.c.l.b16 %v721
        %v2221 = vunpack.c.h.b16 %v721
        %v2222 = vunpack.c.l.b16 %v722
        %v2223 = vunpack.c.h.b16 %v722
        %v2224 = vunpack.c.l.b16 %v723
        %v2225 = vunpack.c.h.b16 %v723
        %v2226 = vunpack.c.l.b16 %v724
        %v2227 = vunpack.c.h.b16 %v724
        %v2228 = vunpack.c.l.b16 %v725
        %v2229 = vunpack.c.h.b16 %v725
        %v2230 = vunpack.c.l.b16 %v726
        %v2231 = vunpack.c.h.b16 %v726
        %v2232 = vunpack.c.l.b16 %v727
        %v2233 = vunpack.c.h.b16 %v727
        %v2234 = vunpack.c.l.b16 %v728
        %v2235 = vunpack.c.h.b16 %v728
        %v2236 = vunpack.c.l.b16 %v729
        %v2237 = vunpack.c.h.b16 %v729
        %v2238 = vunpack.c.l.b16 %v730
        %v2239 = vunpack.c.h.b16 %v730
        %v2240 = vunpack.c.l.b16 %v731
        %v2241 = vunpack.c.h.b16 %v731
        %v2242 = vunpack.c.l.b16 %v732
        %v2243 = vunpack.c.h.b16 %v732
        %v2244 = vunpack.c.l.b16 %v733
        %v2245 = vunpack.c.h.b16 %v733
        %v2246 = vunpack.c.l.b16 %v734
        %v2247 = vunpack.c.h.b16 %v734
        %v2248 = vunpack.c.l.b16 %v735
        %v2249 = vunpack.c.h.b16 %v735
        %v2250 = vunpack.c.l.b16 %v736
        %v2251 = vunpack.c.h.b16 %v736
        %v2252 = vunpack.c.l.b16 %v737
        %v2253 = vunpack.c.h.b16 %v737
        %v2254 = vunpack.c.l.b16 %v738
        %v2255 = vunpack.c.h.b16 %v738
        %v2256 = vunpack.c.l.b16 %v739
        %v2257 = vunpack.c.h.b16 %v739
        %v2258 = vunpack.c.l.b16 %v740
        %v2259 = vunpack.c.h.b16 %v740
        %v2260 = vunpack.c.l.b16 %v741
        %v2261 = vunpack.c.h.b16 %v741
        %v2262 = vunpack.c.l.b16 %v742
        %v2263 = vunpack.c.h.b16 %v742
        %v2264 = vunpack.c.l.b16 %v743
        %v2265 = vunpack.c.h.b16 %v743
        %v2266 = vunpack.c.l.b16 %v744
        %v2267 = vunpack.c.h.b16 %v744
        %v2268 = vunpack.c.l.b16 %v745
        %v2269 = vunpack.c.h.b16 %v745
        %v2270 = vunpack.c.l.b16 %v746
        %v2271 = vunpack.c.h.b16 %v746
        %v2272 = vunpack.c.l.b16 %v747
        %v2273 = vunpack.c.h.b16 %v747
        %v2274 = vunpack.c.l.b16 %v748
        %v2275 = vunpack.c.h.b16 %v748
        %v2276 = vunpack.c.l.b16 %v749
        %v2277 = vunpack.c.h.b16 %v749
        %v2278 = vunpack.c.l.b16 %v750
        %v2279 = vunpack.c.h.b16 %v750
        %v2280 = vunpack.c.l.b16 %v751
        %v2281 = vunpack.c.h.b16 %v751
        %v2282 = vunpack.c.l.b16 %v752
        %v2283 = vunpack.c.h.b16 %v752
        %v2284 = vunpack.c.l.b16 %v753
        %v2285 = vunpack.c.h.b16 %v753
        %v2286 = vunpack.c.l.b16 %v754
        %v2287 = vunpack.c.h.b16 %v754
        %v2288 = vunpack.c.l.b16 %v755
        %v2289 = vunpack.c.h.b16 %v755
        %v2290 = vunpack.c.l.b16 %v756
        %v2291 = vunpack.c.h.b16 %v756
        %v2292 = vunpack.c.l.b16 %v757
        %v2293 = vunpack.c.h.b16 %v757
        %v2294 = vunpack.c.l.b16 %v758
        %v2295 = vunpack.c.h.b16 %v758
        %v2296 = vunpack.c.l.b16 %v759
        %v2297 = vunpack.c.h.b16 %v759
        %v2298 = vunpack.c.l.b16 %v760
        %v2299 = vunpack.c.h.b16 %v760
        %v2300 = vunpack.c.l.b16 %v761
        %v2301 = vunpack.c.h.b16 %v761
        %v2302 = vunpack.c.l.b16 %v762
        %v2303 = vunpack.c.h.b16 %v762
        %v2304 = vunpack.c.l.b16 %v763
        %v2305 = vunpack.c.h.b16 %v763
        %v2306 = vunpack.c.l.b16 %v764
        %v2307 = vunpack.c.h.b16 %v764
        %v2308 = vunpack.c.l.b16 %v765
        %v2309 = vunpack.c.h.b16 %v765
        %v2310 = vunpack.c.l.b16 %v766
        %v2311 = vunpack.c.h.b16 %v766
        %v2312 = vunpack.c.l.b16 %v767
        %v2313 = vunpack.c.h.b16 %v767
        %v2314 = vunpack.c.l.b16 %v768
        %v2315 = vunpack.c.h.b16 %v768
        %v2316 = vunpack.c.l.b16 %v769
        %v2317 = vunpack.c.h.b16 %v769
        %v2318 = vunpack.c.l.b16 %v770
        %v2319 = vunpack.c.h.b16 %v770
        %v2320 = vunpack.c.l.b16 %v771
        %v2321 = vunpack.c.h.b16 %v771
        %v2322 = vunpack.c.l.b16 %v772
        %v2323 = vunpack.c.h.b16 %v772
        %v2324 = vunpack.c.l.b16 %v773
        %v2325 = vunpack.c.h.b16 %v773
        %v2326 = vunpack.c.l.b16 %v774
        %v2327 = vunpack.c.h.b16 %v774
        %v2328 = vunpack.c.l.b16 %v775
        %v2329 = vunpack.c.h.b16 %v775
        %v2330 = vunpack.c.l.b16 %v776
        %v2331 = vunpack.c.h.b16 %v776
        %v2332 = vunpack.c.l.b16 %v777
        %v2333 = vunpack.c.h.b16 %v777
        %v2334 = vunpack.c.l.b16 %v778
        %v2335 = vunpack.c.h.b16 %v778
        %v2336 = vunpack.c.l.b16 %v779
        %v2337 = vunpack.c.h.b16 %v779
        %v2338 = vunpack.c.l.b16 %v780
        %v2339 = vunpack.c.h.b16 %v780
        %v2340 = vunpack.c.l.b16 %v781
        %v2341 = vunpack.c.h.b16 %v781
        %v2342 = vunpack.c.l.b16 %v782
        %v2343 = vunpack.c.h.b16 %v782
        %v2344 = vunpack.c.l.b16 %v783
        %v2345 = vunpack.c.h.b16 %v783
        %v2346 = vunpack.c.l.b16 %v784
        %v2347 = vunpack.c.h.b16 %v784
        %v2348 = vunpack.c.l.b16 %v785
        %v2349 = vunpack.c.h.b16 %v785
        %v2350 = vunpack.c.l.b16 %v786
        %v2351 = vunpack.c.h.b16 %v786
        %v2352 = vunpack.c.l.b16 %v787
        %v2353 = vunpack.c.h.b16 %v787
        %v2354 = vunpack.c.l.b16 %v788
        %v2355 = vunpack.c.h.b16 %v788
        %v2356 = vunpack.c.l.b16 %v789
        %v2357 = vunpack.c.h.b16 %v789
        %v2358 = vunpack.c.l.b16 %v790
        %v2359 = vunpack.c.h.b16 %v790
        %v2360 = vunpack.c.l.b16 %v791
        %v2361 = vunpack.c.h.b16 %v791
        %v2362 = vunpack.c.l.b16 %v792
        %v2363 = vunpack.c.h.b16 %v792
        %v2364 = vunpack.c.l.b16 %v793
        %v2365 = vunpack.c.h.b16 %v793
        %v2366 = vunpack.c.l.b16 %v794
        %v2367 = vunpack.c.h.b16 %v794
        %v2368 = vunpack.c.l.b16 %v795
        %v2369 = vunpack.c.h.b16 %v795
        %v2370 = vunpack.c.l.b16 %v796
        %v2371 = vunpack.c.h.b16 %v796
        %v2372 = vunpack.c.l.b16 %v797
        %v2373 = vunpack.c.h.b16 %v797
        %v2374 = vpack.c.b16 %v1358, %v1350
        %v2375 = vpack.c.b16 %v1359, %v1351
        %v2376 = vpack.c.b16 %v1360, %v1352
        %v2377 = vpack.c.b16 %v1361, %v1353
        %v2378 = vpack.c.b16 %v1362, %v1354
        %v2379 = vpack.c.b16 %v1363, %v1355
        %v2380 = vpack.c.b16 %v1364, %v1356
        %v2381 = vpack.c.b16 %v1365, %v1357
        %v2382 = vpack.c.b16 %v1374, %v1366
        %v2383 = vpack.c.b16 %v1375, %v1367
        %v2384 = vpack.c.b16 %v1376, %v1368
        %v2385 = vpack.c.b16 %v1377, %v1369
        %v2386 = vpack.c.b16 %v1378, %v1370
        %v2387 = vpack.c.b16 %v1379, %v1371
        %v2388 = vpack.c.b16 %v1380, %v1372
        %v2389 = vpack.c.b16 %v1381, %v1373
        %v2390 = vpack.c.b16 %v1390, %v1382
        %v2391 = vpack.c.b16 %v1391, %v1383
        %v2392 = vpack.c.b16 %v1392, %v1384
        %v2393 = vpack.c.b16 %v1393, %v1385
        %v2394 = vpack.c.b16 %v1394, %v1386
        %v2395 = vpack.c.b16 %v1395, %v1387
        %v2396 = vpack.c.b16 %v1396, %v1388
        %v2397 = vpack.c.b16 %v1397, %v1389
        %v2398 = vpack.c.b16 %v1406, %v1398
        %v2399 = vpack.c.b16 %v1407, %v1399
        %v2400 = vpack.c.b16 %v1408, %v1400
        %v2401 = vpack.c.b16 %v1409, %v1401
        %v2402 = vpack.c.b16 %v1410, %v1402
        %v2403 = vpack.c.b16 %v1411, %v1403
        %v2404 = vpack.c.b16 %v1412, %v1404
        %v2405 = vpack.c.b16 %v1413, %v1405
        %v2406 = vpack.c.b16 %v1422, %v1414
        %v2407 = vpack.c.b16 %v1423, %v1415
        %v2408 = vpack.c.b16 %v1424, %v1416
        %v2409 = vpack.c.b16 %v1425, %v1417
        %v2410 = vpack.c.b16 %v1426, %v1418
        %v2411 = vpack.c.b16 %v1427, %v1419
        %v2412 = vpack.c.b16 %v1428, %v1420
        %v2413 = vpack.c.b16 %v1429, %v1421
        %v2414 = vpack.c.b16 %v1438, %v1430
        %v2415 = vpack.c.b16 %v1439, %v1431
        %v2416 = vpack.c.b16 %v1440, %v1432
        %v2417 = vpack.c.b16 %v1441, %v1433
        %v2418 = vpack.c.b16 %v1442, %v1434
        %v2419 = vpack.c.b16 %v1443, %v1435
        %v2420 = vpack.c.b16 %v1444, %v1436
        %v2421 = vpack.c.b16 %v1445, %v1437
        %v2422 = vpack.c.b16 %v1454, %v1446
        %v2423 = vpack.c.b16 %v1455, %v1447
        %v2424 = vpack.c.b16 %v1456, %v1448
        %v2425 = vpack.c.b16 %v1457, %v1449
        %v2426 = vpack.c.b16 %v1458, %v1450
        %v2427 = vpack.c.b16 %v1459, %v1451
        %v2428 = vpack.c.b16 %v1460, %v1452
        %v2429 = vpack.c.b16 %v1461, %v1453
        %v2430 = vpack.c.b16 %v1470, %v1462
        %v2431 = vpack.c.b16 %v1471, %v1463
        %v2432 = vpack.c.b16 %v1472, %v1464
        %v2433 = vpack.c.b16 %v1473, %v1465
        %v2434 = vpack.c.b16 %v1474, %v1466
        %v2435 = vpack.c.b16 %v1475, %v1467
        %v2436 = vpack.c.b16 %v1476, %v1468
        %v2437 = vpack.c.b16 %v1477, %v1469
        %v2438 = vpack.c.b16 %v1486, %v1478
        %v2439 = vpack.c.b16 %v1487, %v1479
        %v2440 = vpack.c.b16 %v1488, %v1480
        %v2441 = vpack.c.b16 %v1489, %v1481
        %v2442 = vpack.c.b16 %v1490, %v1482
        %v2443 = vpack.c.b16 %v1491, %v1483
        %v2444 = vpack.c.b16 %v1492, %v1484
        %v2445 = vpack.c.b16 %v1493, %v1485
        %v2446 = vpack.c.b16 %v1502, %v1494
        %v2447 = vpack.c.b16 %v1503, %v1495
        %v2448 = vpack.c.b16 %v1504, %v1496
        %v2449 = vpack.c.b16 %v1505, %v1497
        %v2450 = vpack.c.b16 %v1506, %v1498
        %v2451 = vpack.c.b16 %v1507, %v1499
        %v2452 = vpack.c.b16 %v1508, %v1500
        %v2453 = vpack.c.b16 %v1509, %v1501
        %v2454 = vpack.c.b16 %v1518, %v1510
        %v2455 = vpack.c.b16 %v1519, %v1511
        %v2456 = vpack.c.b16 %v1520, %v1512
        %v2457 = vpack.c.b16 %v1521, %v1513
        %v2458 = vpack.c.b16 %v1522, %v1514
        %v2459 = vpack.c.b16 %v1523, %v1515
        %v2460 = vpack.c.b16 %v1524, %v1516
        %v2461 = vpack.c.b16 %v1525, %v1517
        %v2462 = vpack.c.b16 %v1534, %v1526
        %v2463 = vpack.c.b16 %v1535, %v1527
        %v2464 = vpack.c.b16 %v1536, %v1528
        %v2465 = vpack.c.b16 %v1537, %v1529
        %v2466 = vpack.c.b16 %v1538, %v1530
        %v2467 = vpack.c.b16 %v1539, %v1531
        %v2468 = vpack.c.b16 %v1540, %v1532
        %v2469 = vpack.c.b16 %v1541, %v1533
        %v2470 = vpack.c.b16 %v1550, %v1542
        %v2471 = vpack.c.b16 %v1551, %v1543
        %v2472 = vpack.c.b16 %v1552, %v1544
        %v2473 = vpack.c.b16 %v1553, %v1545
        %v2474 = vpack.c.b16 %v1554, %v1546
        %v2475 = vpack.c.b16 %v1555, %v1547
        %v2476 = vpack.c.b16 %v1556, %v1548
        %v2477 = vpack.c.b16 %v1557, %v1549
        %v2478 = vpack.c.b16 %v1566, %v1558
        %v2479 = vpack.c.b16 %v1567, %v1559
        %v2480 = vpack.c.b16 %v1568, %v1560
        %v2481 = vpack.c.b16 %v1569, %v1561
        %v2482 = vpack.c.b16 %v1570, %v1562
        %v2483 = vpack.c.b16 %v1571, %v1563
        %v2484 = vpack.c.b16 %v1572, %v1564
        %v2485 = vpack.c.b16 %v1573, %v1565
        %v2486 = vpack.c.b16 %v1582, %v1574
        %v2487 = vpack.c.b16 %v1583, %v1575
        %v2488 = vpack.c.b16 %v1584, %v1576
        %v2489 = vpack.c.b16 %v1585, %v1577
        %v2490 = vpack.c.b16 %v1586, %v1578
        %v2491 = vpack.c.b16 %v1587, %v1579
        %v2492 = vpack.c.b16 %v1588, %v1580
        %v2493 = vpack.c.b16 %v1589, %v1581
        %v2494 = vpack.c.b16 %v1598, %v1590
        %v2495 = vpack.c.b16 %v1599, %v1591
        %v2496 = vpack.c.b16 %v1600, %v1592
        %v2497 = vpack.c.b16 %v1601, %v1593
        %v2498 = vpack.c.b16 %v1602, %v1594
        %v2499 = vpack.c.b16 %v1603, %v1595
        %v2500 = vpack.c.b16 %v1604, %v1596
        %v2501 = vpack.c.b16 %v1605, %v1597
        %v2502 = vpack.c.b16 %v1614, %v1606
        %v2503 = vpack.c.b16 %v1615, %v1607
        %v2504 = vpack.c.b16 %v1616, %v1608
        %v2505 = vpack.c.b16 %v1617, %v1609
        %v2506 = vpack.c.b16 %v1618, %v1610
        %v2507 = vpack.c.b16 %v1619, %v1611
        %v2508 = vpack.c.b16 %v1620, %v1612
        %v2509 = vpack.c.b16 %v1621, %v1613
        %v2510 = vpack.c.b16 %v1630, %v1622
        %v2511 = vpack.c.b16 %v1631, %v1623
        %v2512 = vpack.c.b16 %v1632, %v1624
        %v2513 = vpack.c.b16 %v1633, %v1625
        %v2514 = vpack.c.b16 %v1634, %v1626
        %v2515 = vpack.c.b16 %v1635, %v1627
        %v2516 = vpack.c.b16 %v1636, %v1628
        %v2517 = vpack.c.b16 %v1637, %v1629
        %v2518 = vpack.c.b16 %v1646, %v1638
        %v2519 = vpack.c.b16 %v1647, %v1639
        %v2520 = vpack.c.b16 %v1648, %v1640
        %v2521 = vpack.c.b16 %v1649, %v1641
        %v2522 = vpack.c.b16 %v1650, %v1642
        %v2523 = vpack.c.b16 %v1651, %v1643
        %v2524 = vpack.c.b16 %v1652, %v1644
        %v2525 = vpack.c.b16 %v1653, %v1645
        %v2526 = vpack.c.b16 %v1662, %v1654
        %v2527 = vpack.c.b16 %v1663, %v1655
        %v2528 = vpack.c.b16 %v1664, %v1656
        %v2529 = vpack.c.b16 %v1665, %v1657
        %v2530 = vpack.c.b16 %v1666, %v1658
        %v2531 = vpack.c.b16 %v1667, %v1659
        %v2532 = vpack.c.b16 %v1668, %v1660
        %v2533 = vpack.c.b16 %v1669, %v1661
        %v2534 = vpack.c.b16 %v1678, %v1670
        %v2535 = vpack.c.b16 %v1679, %v1671
        %v2536 = vpack.c.b16 %v1680, %v1672
        %v2537 = vpack.c.b16 %v1681, %v1673
        %v2538 = vpack.c.b16 %v1682, %v1674
        %v2539 = vpack.c.b16 %v1683, %v1675
        %v2540 = vpack.c.b16 %v1684, %v1676
        %v2541 = vpack.c.b16 %v1685, %v1677
        %v2542 = vpack.c.b16 %v1694, %v1686
        %v2543 = vpack.c.b16 %v1695, %v1687
        %v2544 = vpack.c.b16 %v1696, %v1688
        %v2545 = vpack.c.b16 %v1697, %v1689
        %v2546 = vpack.c.b16 %v1698, %v1690
        %v2547 = vpack.c.b16 %v1699, %v1691
        %v2548 = vpack.c.b16 %v1700, %v1692
        %v2549 = vpack.c.b16 %v1701, %v1693
        %v2550 = vpack.c.b16 %v1710, %v1702
        %v2551 = vpack.c.b16 %v1711, %v1703
        %v2552 = vpack.c.b16 %v1712, %v1704
        %v2553 = vpack.c.b16 %v1713, %v1705
        %v2554 = vpack.c.b16 %v1714, %v1706
        %v2555 = vpack.c.b16 %v1715, %v1707
        %v2556 = vpack.c.b16 %v1716, %v1708
        %v2557 = vpack.c.b16 %v1717, %v1709
        %v2558 = vpack.c.b16 %v1726, %v1718
        %v2559 = vpack.c.b16 %v1727, %v1719
        %v2560 = vpack.c.b16 %v1728, %v1720
        %v2561 = vpack.c.b16 %v1729, %v1721
        %v2562 = vpack.c.b16 %v1730, %v1722
        %v2563 = vpack.c.b16 %v1731, %v1723
        %v2564 = vpack.c.b16 %v1732, %v1724
        %v2565 = vpack.c.b16 %v1733, %v1725
        %v2566 = vpack.c.b16 %v1742, %v1734
        %v2567 = vpack.c.b16 %v1743, %v1735
        %v2568 = vpack.c.b16 %v1744, %v1736
        %v2569 = vpack.c.b16 %v1745, %v1737
        %v2570 = vpack.c.b16 %v1746, %v1738
        %v2571 = vpack.c.b16 %v1747, %v1739
        %v2572 = vpack.c.b16 %v1748, %v1740
        %v2573 = vpack.c.b16 %v1749, %v1741
        %v2574 = vpack.c.b16 %v1758, %v1750
        %v2575 = vpack.c.b16 %v1759, %v1751
        %v2576 = vpack.c.b16 %v1760, %v1752
        %v2577 = vpack.c.b16 %v1761, %v1753
        %v2578 = vpack.c.b16 %v1762, %v1754
        %v2579 = vpack.c.b16 %v1763, %v1755
        %v2580 = vpack.c.b16 %v1764, %v1756
        %v2581 = vpack.c.b16 %v1765, %v1757
        %v2582 = vpack.c.b16 %v1774, %v1766
        %v2583 = vpack.c.b16 %v1775, %v1767
        %v2584 = vpack.c.b16 %v1776, %v1768
        %v2585 = vpack.c.b16 %v1777, %v1769
        %v2586 = vpack.c.b16 %v1778, %v1770
        %v2587 = vpack.c.b16 %v1779, %v1771
        %v2588 = vpack.c.b16 %v1780, %v1772
        %v2589 = vpack.c.b16 %v1781, %v1773
        %v2590 = vpack.c.b16 %v1790, %v1782
        %v2591 = vpack.c.b16 %v1791, %v1783
        %v2592 = vpack.c.b16 %v1792, %v1784
        %v2593 = vpack.c.b16 %v1793, %v1785
        %v2594 = vpack.c.b16 %v1794, %v1786
        %v2595 = vpack.c.b16 %v1795, %v1787
        %v2596 = vpack.c.b16 %v1796, %v1788
        %v2597 = vpack.c.b16 %v1797, %v1789
        %v2598 = vpack.c.b16 %v1806, %v1798
        %v2599 = vpack.c.b16 %v1807, %v1799
        %v2600 = vpack.c.b16 %v1808, %v1800
        %v2601 = vpack.c.b16 %v1809, %v1801
        %v2602 = vpack.c.b16 %v1810, %v1802
        %v2603 = vpack.c.b16 %v1811, %v1803
        %v2604 = vpack.c.b16 %v1812, %v1804
        %v2605 = vpack.c.b16 %v1813, %v1805
        %v2606 = vpack.c.b16 %v1822, %v1814
        %v2607 = vpack.c.b16 %v1823, %v1815
        %v2608 = vpack.c.b16 %v1824, %v1816
        %v2609 = vpack.c.b16 %v1825, %v1817
        %v2610 = vpack.c.b16 %v1826, %v1818
        %v2611 = vpack.c.b16 %v1827, %v1819
        %v2612 = vpack.c.b16 %v1828, %v1820
        %v2613 = vpack.c.b16 %v1829, %v1821
        %v2614 = vpack.c.b16 %v1838, %v1830
        %v2615 = vpack.c.b16 %v1839, %v1831
        %v2616 = vpack.c.b16 %v1840, %v1832
        %v2617 = vpack.c.b16 %v1841, %v1833
        %v2618 = vpack.c.b16 %v1842, %v1834
        %v2619 = vpack.c.b16 %v1843, %v1835
        %v2620 = vpack.c.b16 %v1844, %v1836
        %v2621 = vpack.c.b16 %v1845, %v1837
        %v2622 = vpack.c.b16 %v1854, %v1846
        %v2623 = vpack.c.b16 %v1855, %v1847
        %v2624 = vpack.c.b16 %v1856, %v1848
        %v2625 = vpack.c.b16 %v1857, %v1849
        %v2626 = vpack.c.b16 %v1858, %v1850
        %v2627 = vpack.c.b16 %v1859, %v1851
        %v2628 = vpack.c.b16 %v1860, %v1852
        %v2629 = vpack.c.b16 %v1861, %v1853
        %v2630 = vpack.c.b16 %v1870, %v1862
        %v2631 = vpack.c.b16 %v1871, %v1863
        %v2632 = vpack.c.b16 %v1872, %v1864
        %v2633 = vpack.c.b16 %v1873, %v1865
        %v2634 = vpack.c.b16 %v1874, %v1866
        %v2635 = vpack.c.b16 %v1875, %v1867
        %v2636 = vpack.c.b16 %v1876, %v1868
        %v2637 = vpack.c.b16 %v1877, %v1869
        %v2638 = vpack.c.b16 %v1886, %v1878
        %v2639 = vpack.c.b16 %v1887, %v1879
        %v2640 = vpack.c.b16 %v1888, %v1880
        %v2641 = vpack.c.b16 %v1889, %v1881
        %v2642 = vpack.c.b16 %v1890, %v1882
        %v2643 = vpack.c.b16 %v1891, %v1883
        %v2644 = vpack.c.b16 %v1892, %v1884
        %v2645 = vpack.c.b16 %v1893, %v1885
        %v2646 = vpack.c.b16 %v1902, %v1894
        %v2647 = vpack.c.b16 %v1903, %v1895
        %v2648 = vpack.c.b16 %v1904, %v1896
        %v2649 = vpack.c.b16 %v1905, %v1897
        %v2650 = vpack.c.b16 %v1906, %v1898
        %v2651 = vpack.c.b16 %v1907, %v1899
        %v2652 = vpack.c.b16 %v1908, %v1900
        %v2653 = vpack.c.b16 %v1909, %v1901
        %v2654 = vpack.c.b16 %v1918, %v1910
        %v2655 = vpack.c.b16 %v1919, %v1911
        %v2656 = vpack.c.b16 %v1920, %v1912
        %v2657 = vpack.c.b16 %v1921, %v1913
        %v2658 = vpack.c.b16 %v1922, %v1914
        %v2659 = vpack.c.b16 %v1923, %v1915
        %v2660 = vpack.c.b16 %v1924, %v1916
        %v2661 = vpack.c.b16 %v1925, %v1917
        %v2662 = vpack.c.b16 %v1934, %v1926
        %v2663 = vpack.c.b16 %v1935, %v1927
        %v2664 = vpack.c.b16 %v1936, %v1928
        %v2665 = vpack.c.b16 %v1937, %v1929
        %v2666 = vpack.c.b16 %v1938, %v1930
        %v2667 = vpack.c.b16 %v1939, %v1931
        %v2668 = vpack.c.b16 %v1940, %v1932
        %v2669 = vpack.c.b16 %v1941, %v1933
        %v2670 = vpack.c.b16 %v1950, %v1942
        %v2671 = vpack.c.b16 %v1951, %v1943
        %v2672 = vpack.c.b16 %v1952, %v1944
        %v2673 = vpack.c.b16 %v1953, %v1945
        %v2674 = vpack.c.b16 %v1954, %v1946
        %v2675 = vpack.c.b16 %v1955, %v1947
        %v2676 = vpack.c.b16 %v1956, %v1948
        %v2677 = vpack.c.b16 %v1957, %v1949
        %v2678 = vpack.c.b16 %v1966, %v1958
        %v2679 = vpack.c.b16 %v1967, %v1959
        %v2680 = vpack.c.b16 %v1968, %v1960
        %v2681 = vpack.c.b16 %v1969, %v1961
        %v2682 = vpack.c.b16 %v1970, %v1962
        %v2683 = vpack.c.b16 %v1971, %v1963
        %v2684 = vpack.c.b16 %v1972, %v1964
        %v2685 = vpack.c.b16 %v1973, %v1965
        %v2686 = vpack.c.b16 %v1982, %v1974
        %v2687 = vpack.c.b16 %v1983, %v1975
        %v2688 = vpack.c.b16 %v1984, %v1976
        %v2689 = vpack.c.b16 %v1985, %v1977
        %v2690 = vpack.c.b16 %v1986, %v1978
        %v2691 = vpack.c.b16 %v1987, %v1979
        %v2692 = vpack.c.b16 %v1988, %v1980
        %v2693 = vpack.c.b16 %v1989, %v1981
        %v2694 = vpack.c.b16 %v1998, %v1990
        %v2695 = vpack.c.b16 %v1999, %v1991
        %v2696 = vpack.c.b16 %v2000, %v1992
        %v2697 = vpack.c.b16 %v2001, %v1993
        %v2698 = vpack.c.b16 %v2002, %v1994
        %v2699 = vpack.c.b16 %v2003, %v1995
        %v2700 = vpack.c.b16 %v2004, %v1996
        %v2701 = vpack.c.b16 %v2005, %v1997
        %v2702 = vpack.c.b16 %v2014, %v2006
        %v2703 = vpack.c.b16 %v2015, %v2007
        %v2704 = vpack.c.b16 %v2016, %v2008
        %v2705 = vpack.c.b16 %v2017, %v2009
        %v2706 = vpack.c.b16 %v2018, %v2010
        %v2707 = vpack.c.b16 %v2019, %v2011
        %v2708 = vpack.c.b16 %v2020, %v2012
        %v2709 = vpack.c.b16 %v2021, %v2013
        %v2710 = vpack.c.b16 %v2030, %v2022
        %v2711 = vpack.c.b16 %v2031, %v2023
        %v2712 = vpack.c.b16 %v2032, %v2024
        %v2713 = vpack.c.b16 %v2033, %v2025
        %v2714 = vpack.c.b16 %v2034, %v2026
        %v2715 = vpack.c.b16 %v2035, %v2027
        %v2716 = vpack.c.b16 %v2036, %v2028
        %v2717 = vpack.c.b16 %v2037, %v2029
        %v2718 = vpack.c.b16 %v2046, %v2038
        %v2719 = vpack.c.b16 %v2047, %v2039
        %v2720 = vpack.c.b16 %v2048, %v2040
        %v2721 = vpack.c.b16 %v2049, %v2041
        %v2722 = vpack.c.b16 %v2050, %v2042
        %v2723 = vpack.c.b16 %v2051, %v2043
        %v2724 = vpack.c.b16 %v2052, %v2044
        %v2725 = vpack.c.b16 %v2053, %v2045
        %v2726 = vpack.c.b16 %v2062, %v2054
        %v2727 = vpack.c.b16 %v2063, %v2055
        %v2728 = vpack.c.b16 %v2064, %v2056
        %v2729 = vpack.c.b16 %v2065, %v2057
        %v2730 = vpack.c.b16 %v2066, %v2058
        %v2731 = vpack.c.b16 %v2067, %v2059
        %v2732 = vpack.c.b16 %v2068, %v2060
        %v2733 = vpack.c.b16 %v2069, %v2061
        %v2734 = vpack.c.b16 %v2078, %v2070
        %v2735 = vpack.c.b16 %v2079, %v2071
        %v2736 = vpack.c.b16 %v2080, %v2072
        %v2737 = vpack.c.b16 %v2081, %v2073
        %v2738 = vpack.c.b16 %v2082, %v2074
        %v2739 = vpack.c.b16 %v2083, %v2075
        %v2740 = vpack.c.b16 %v2084, %v2076
        %v2741 = vpack.c.b16 %v2085, %v2077
        %v2742 = vpack.c.b16 %v2094, %v2086
        %v2743 = vpack.c.b16 %v2095, %v2087
        %v2744 = vpack.c.b16 %v2096, %v2088
        %v2745 = vpack.c.b16 %v2097, %v2089
        %v2746 = vpack.c.b16 %v2098, %v2090
        %v2747 = vpack.c.b16 %v2099, %v2091
        %v2748 = vpack.c.b16 %v2100, %v2092
        %v2749 = vpack.c.b16 %v2101, %v2093
        %v2750 = vpack.c.b16 %v2110, %v2102
        %v2751 = vpack.c.b16 %v2111, %v2103
        %v2752 = vpack.c.b16 %v2112, %v2104
        %v2753 = vpack.c.b16 %v2113, %v2105
        %v2754 = vpack.c.b16 %v2114, %v2106
        %v2755 = vpack.c.b16 %v2115, %v2107
        %v2756 = vpack.c.b16 %v2116, %v2108
        %v2757 = vpack.c.b16 %v2117, %v2109
        %v2758 = vpack.c.b16 %v2126, %v2118
        %v2759 = vpack.c.b16 %v2127, %v2119
        %v2760 = vpack.c.b16 %v2128, %v2120
        %v2761 = vpack.c.b16 %v2129, %v2121
        %v2762 = vpack.c.b16 %v2130, %v2122
        %v2763 = vpack.c.b16 %v2131, %v2123
        %v2764 = vpack.c.b16 %v2132, %v2124
        %v2765 = vpack.c.b16 %v2133, %v2125
        %v2766 = vpack.c.b16 %v2142, %v2134
        %v2767 = vpack.c.b16 %v2143, %v2135
        %v2768 = vpack.c.b16 %v2144, %v2136
        %v2769 = vpack.c.b16 %v2145, %v2137
        %v2770 = vpack.c.b16 %v2146, %v2138
        %v2771 = vpack.c.b16 %v2147, %v2139
        %v2772 = vpack.c.b16 %v2148, %v2140
        %v2773 = vpack.c.b16 %v2149, %v2141
        %v2774 = vpack.c.b16 %v2158, %v2150
        %v2775 = vpack.c.b16 %v2159, %v2151
        %v2776 = vpack.c.b16 %v2160, %v2152
        %v2777 = vpack.c.b16 %v2161, %v2153
        %v2778 = vpack.c.b16 %v2162, %v2154
        %v2779 = vpack.c.b16 %v2163, %v2155
        %v2780 = vpack.c.b16 %v2164, %v2156
        %v2781 = vpack.c.b16 %v2165, %v2157
        %v2782 = vpack.c.b16 %v2174, %v2166
        %v2783 = vpack.c.b16 %v2175, %v2167
        %v2784 = vpack.c.b16 %v2176, %v2168
        %v2785 = vpack.c.b16 %v2177, %v2169
        %v2786 = vpack.c.b16 %v2178, %v2170
        %v2787 = vpack.c.b16 %v2179, %v2171
        %v2788 = vpack.c.b16 %v2180, %v2172
        %v2789 = vpack.c.b16 %v2181, %v2173
        %v2790 = vpack.c.b16 %v2190, %v2182
        %v2791 = vpack.c.b16 %v2191, %v2183
        %v2792 = vpack.c.b16 %v2192, %v2184
        %v2793 = vpack.c.b16 %v2193, %v2185
        %v2794 = vpack.c.b16 %v2194, %v2186
        %v2795 = vpack.c.b16 %v2195, %v2187
        %v2796 = vpack.c.b16 %v2196, %v2188
        %v2797 = vpack.c.b16 %v2197, %v2189
        %v2798 = vpack.c.b16 %v2206, %v2198
        %v2799 = vpack.c.b16 %v2207, %v2199
        %v2800 = vpack.c.b16 %v2208, %v2200
        %v2801 = vpack.c.b16 %v2209, %v2201
        %v2802 = vpack.c.b16 %v2210, %v2202
        %v2803 = vpack.c.b16 %v2211, %v2203
        %v2804 = vpack.c.b16 %v2212, %v2204
        %v2805 = vpack.c.b16 %v2213, %v2205
        %v2806 = vpack.c.b16 %v2222, %v2214
        %v2807 = vpack.c.b16 %v2223, %v2215
        %v2808 = vpack.c.b16 %v2224, %v2216
        %v2809 = vpack.c.b16 %v2225, %v2217
        %v2810 = vpack.c.b16 %v2226, %v2218
        %v2811 = vpack.c.b16 %v2227, %v2219
        %v2812 = vpack.c.b16 %v2228, %v2220
        %v2813 = vpack.c.b16 %v2229, %v2221
        %v2814 = vpack.c.b16 %v2238, %v2230
        %v2815 = vpack.c.b16 %v2239, %v2231
        %v2816 = vpack.c.b16 %v2240, %v2232
        %v2817 = vpack.c.b16 %v2241, %v2233
        %v2818 = vpack.c.b16 %v2242, %v2234
        %v2819 = vpack.c.b16 %v2243, %v2235
        %v2820 = vpack.c.b16 %v2244, %v2236
        %v2821 = vpack.c.b16 %v2245, %v2237
        %v2822 = vpack.c.b16 %v2254, %v2246
        %v2823 = vpack.c.b16 %v2255, %v2247
        %v2824 = vpack.c.b16 %v2256, %v2248
        %v2825 = vpack.c.b16 %v2257, %v2249
        %v2826 = vpack.c.b16 %v2258, %v2250
        %v2827 = vpack.c.b16 %v2259, %v2251
        %v2828 = vpack.c.b16 %v2260, %v2252
        %v2829 = vpack.c.b16 %v2261, %v2253
        %v2830 = vpack.c.b16 %v2270, %v2262
        %v2831 = vpack.c.b16 %v2271, %v2263
        %v2832 = vpack.c.b16 %v2272, %v2264
        %v2833 = vpack.c.b16 %v2273, %v2265
        %v2834 = vpack.c.b16 %v2274, %v2266
        %v2835 = vpack.c.b16 %v2275, %v2267
        %v2836 = vpack.c.b16 %v2276, %v2268
        %v2837 = vpack.c.b16 %v2277, %v2269
        %v2838 = vpack.c.b16 %v2286, %v2278
        %v2839 = vpack.c.b16 %v2287, %v2279
        %v2840 = vpack.c.b16 %v2288, %v2280
        %v2841 = vpack.c.b16 %v2289, %v2281
        %v2842 = vpack.c.b16 %v2290, %v2282
        %v2843 = vpack.c.b16 %v2291, %v2283
        %v2844 = vpack.c.b16 %v2292, %v2284
        %v2845 = vpack.c.b16 %v2293, %v2285
        %v2846 = vpack.c.b16 %v2302, %v2294
        %v2847 = vpack.c.b16 %v2303, %v2295
        %v2848 = vpack.c.b16 %v2304, %v2296
        %v2849 = vpack.c.b16 %v2305, %v2297
        %v2850 = vpack.c.b16 %v2306, %v2298
        %v2851 = vpack.c.b16 %v2307, %v2299
        %v2852 = vpack.c.b16 %v2308, %v2300
        %v2853 = vpack.c.b16 %v2309, %v2301
        %v2854 = vpack.c.b16 %v2318, %v2310
        %v2855 = vpack.c.b16 %v2319, %v2311
        %v2856 = vpack.c.b16 %v2320, %v2312
        %v2857 = vpack.c.b16 %v2321, %v2313
        %v2858 = vpack.c.b16 %v2322, %v2314
        %v2859 = vpack.c.b16 %v2323, %v2315
        %v2860 = vpack.c.b16 %v2324, %v2316
        %v2861 = vpack.c.b16 %v2325, %v2317
        %v2862 = vpack.c.b16 %v2334, %v2326
        %v2863 = vpack.c.b16 %v2335, %v2327
        %v2864 = vpack.c.b16 %v2336, %v2328
        %v2865 = vpack.c.b16 %v2337, %v2329
        %v2866 = vpack.c.b16 %v2338, %v2330
        %v2867 = vpack.c.b16 %v2339, %v2331
        %v2868 = vpack.c.b16 %v2340, %v2332
        %v2869 = vpack.c.b16 %v2341, %v2333
        %v2870 = vpack.c.b16 %v2350, %v2342
        %v2871 = vpack.c.b16 %v2351, %v2343
        %v2872 = vpack.c.b16 %v2352, %v2344
        %v2873 = vpack.c.b16 %v2353, %v2345
        %v2874 = vpack.c.b16 %v2354, %v2346
        %v2875 = vpack.c.b16 %v2355, %v2347
        %v2876 = vpack.c.b16 %v2356, %v2348
        %v2877 = vpack.c.b16 %v2357, %v2349
        %v2878 = vpack.c.b16 %v2366, %v2358
        %v2879 = vpack.c.b16 %v2367, %v2359
        %v2880 = vpack.c.b16 %v2368, %v2360
        %v2881 = vpack.c.b16 %v2369, %v2361
        %v2882 = vpack.c.b16 %v2370, %v2362
        %v2883 = vpack.c.b16 %v2371, %v2363
        %v2884 = vpack.c.b16 %v2372, %v2364
        %v2885 = vpack.c.b16 %v2373, %v2365
        %3398 = vmatprep.subr.bf16.mxu0 %v2431
        %3399 = vmatpush1.bf16.msra.mxu0 %v2430
        %3400 = vmatprep.subr.bf16.mxu0 %v2423
        %3401 = vmatpush1.bf16.msra.mxu0 %v2422
        %3402 = vmatprep.subr.bf16.mxu0 %v2415
        %3403 = vmatpush1.bf16.msra.mxu0 %v2414
        %3404 = vmatprep.subr.bf16.mxu0 %v2407
        %3405 = vmatpush1.bf16.msra.mxu0 %v2406
        %3406 = vmatprep.subr.bf16.mxu0 %v2399
        %3407 = vmatpush1.bf16.msra.mxu0 %v2398
        %3408 = vmatprep.subr.bf16.mxu0 %v2391
        %3409 = vmatpush1.bf16.msra.mxu0 %v2390
        %3410 = vmatprep.subr.bf16.mxu0 %v2383
        %3411 = vmatpush1.bf16.msra.mxu0 %v2382
        %3412 = vmatprep.subr.bf16.mxu0 %v2375
        %3413 = vmatpush1.bf16.msra.mxu0 %v2374
        %3414 = vmatprep.subr.bf16.mxu0 %v2495
        %3415 = vmatpush2.bf16.msra.mxu0 %v2494
        %3416 = vmatprep.subr.bf16.mxu0 %v2487
        %3417 = vmatpush2.bf16.msra.mxu0 %v2486
        %3418 = vmatprep.subr.bf16.mxu0 %v2479
        %3419 = vmatpush2.bf16.msra.mxu0 %v2478
        %3420 = vmatprep.subr.bf16.mxu0 %v2471
        %3421 = vmatpush2.bf16.msra.mxu0 %v2470
        %3422 = vmatprep.subr.bf16.mxu0 %v2463
        %3423 = vmatpush2.bf16.msra.mxu0 %v2462
        %3424 = vmatprep.subr.bf16.mxu0 %v2455
        %3425 = vmatpush2.bf16.msra.mxu0 %v2454
        %3426 = vmatprep.subr.bf16.mxu0 %v2447
        %3427 = vmatpush2.bf16.msra.mxu0 %v2446
        %3428 = vmatprep.subr.bf16.mxu0 %v2439
        %3429 = vmatpush2.bf16.msra.mxu0 %v2438
        %3430 = vmatprep.mubr.bf16.mxu0 %v823
        %3431 = vmatmul.mubr.bf16.gmra.mxu0 %v822
        %v3432 = vpop.f32.mrf.mxu0
        %v3433 = vadd.f32 0.0, %v3432
        %v3434 = vpop.f32.mrf.mxu0
        %v3435 = vadd.f32 0.0, %v3434
        %v3436 = vpop.f32.mrf.mxu0
        %v3437 = vadd.f32 0.0, %v3436
        %v3438 = vpop.f32.mrf.mxu0
        %v3439 = vadd.f32 0.0, %v3438
        %3440 = vdwg.mxu0
        %3441 = vmatprep.subr.bf16.mxu0 %v2559
        %3442 = vmatpush1.bf16.msra.mxu0 %v2558
        %3443 = vmatprep.subr.bf16.mxu0 %v2551
        %3444 = vmatpush1.bf16.msra.mxu0 %v2550
        %3445 = vmatprep.subr.bf16.mxu0 %v2543
        %3446 = vmatpush1.bf16.msra.mxu0 %v2542
        %3447 = vmatprep.subr.bf16.mxu0 %v2535
        %3448 = vmatpush1.bf16.msra.mxu0 %v2534
        %3449 = vmatprep.subr.bf16.mxu0 %v2527
        %3450 = vmatpush1.bf16.msra.mxu0 %v2526
        %3451 = vmatprep.subr.bf16.mxu0 %v2519
        %3452 = vmatpush1.bf16.msra.mxu0 %v2518
        %3453 = vmatprep.subr.bf16.mxu0 %v2511
        %3454 = vmatpush1.bf16.msra.mxu0 %v2510
        %3455 = vmatprep.subr.bf16.mxu0 %v2503
        %3456 = vmatpush1.bf16.msra.mxu0 %v2502
        %3457 = vmatprep.subr.bf16.mxu0 %v2623
        %3458 = vmatpush2.bf16.msra.mxu0 %v2622
        %3459 = vmatprep.subr.bf16.mxu0 %v2615
        %3460 = vmatpush2.bf16.msra.mxu0 %v2614
        %3461 = vmatprep.subr.bf16.mxu0 %v2607
        %3462 = vmatpush2.bf16.msra.mxu0 %v2606
        %3463 = vmatprep.subr.bf16.mxu0 %v2599
        %3464 = vmatpush2.bf16.msra.mxu0 %v2598
        %3465 = vmatprep.subr.bf16.mxu0 %v2591
        %3466 = vmatpush2.bf16.msra.mxu0 %v2590
        %3467 = vmatprep.subr.bf16.mxu0 %v2583
        %3468 = vmatpush2.bf16.msra.mxu0 %v2582
        %3469 = vmatprep.subr.bf16.mxu0 %v2575
        %3470 = vmatpush2.bf16.msra.mxu0 %v2574
        %3471 = vmatprep.subr.bf16.mxu0 %v2567
        %3472 = vmatpush2.bf16.msra.mxu0 %v2566
        %3473 = vmatprep.mubr.bf16.mxu0 %v825
        %3474 = vmatmul.mubr.bf16.gmra.mxu0 %v824
        %v3475 = vpop.f32.mrf.mxu0
        %v3476 = vadd.f32 %v3433, %v3475
        %v3477 = vpop.f32.mrf.mxu0
        %v3478 = vadd.f32 %v3435, %v3477
        %v3479 = vpop.f32.mrf.mxu0
        %v3480 = vadd.f32 %v3437, %v3479
        %v3481 = vpop.f32.mrf.mxu0
        %v3482 = vadd.f32 %v3439, %v3481
        %3483 = vdwg.mxu0
        %3484 = vmatprep.subr.bf16.mxu0 %v2687
        %3485 = vmatpush1.bf16.msra.mxu0 %v2686
        %3486 = vmatprep.subr.bf16.mxu0 %v2679
        %3487 = vmatpush1.bf16.msra.mxu0 %v2678
        %3488 = vmatprep.subr.bf16.mxu0 %v2671
        %3489 = vmatpush1.bf16.msra.mxu0 %v2670
        %3490 = vmatprep.subr.bf16.mxu0 %v2663
        %3491 = vmatpush1.bf16.msra.mxu0 %v2662
        %3492 = vmatprep.subr.bf16.mxu0 %v2655
        %3493 = vmatpush1.bf16.msra.mxu0 %v2654
        %3494 = vmatprep.subr.bf16.mxu0 %v2647
        %3495 = vmatpush1.bf16.msra.mxu0 %v2646
        %3496 = vmatprep.subr.bf16.mxu0 %v2639
        %3497 = vmatpush1.bf16.msra.mxu0 %v2638
        %3498 = vmatprep.subr.bf16.mxu0 %v2631
        %3499 = vmatpush1.bf16.msra.mxu0 %v2630
        %3500 = vmatprep.subr.bf16.mxu0 %v2751
        %3501 = vmatpush2.bf16.msra.mxu0 %v2750
        %3502 = vmatprep.subr.bf16.mxu0 %v2743
        %3503 = vmatpush2.bf16.msra.mxu0 %v2742
        %3504 = vmatprep.subr.bf16.mxu0 %v2735
        %3505 = vmatpush2.bf16.msra.mxu0 %v2734
        %3506 = vmatprep.subr.bf16.mxu0 %v2727
        %3507 = vmatpush2.bf16.msra.mxu0 %v2726
        %3508 = vmatprep.subr.bf16.mxu0 %v2719
        %3509 = vmatpush2.bf16.msra.mxu0 %v2718
        %3510 = vmatprep.subr.bf16.mxu0 %v2711
        %3511 = vmatpush2.bf16.msra.mxu0 %v2710
        %3512 = vmatprep.subr.bf16.mxu0 %v2703
        %3513 = vmatpush2.bf16.msra.mxu0 %v2702
        %3514 = vmatprep.subr.bf16.mxu0 %v2695
        %3515 = vmatpush2.bf16.msra.mxu0 %v2694
        %3516 = vmatprep.mubr.bf16.mxu0 %v827
        %3517 = vmatmul.mubr.bf16.gmra.mxu0 %v826
        %v3518 = vpop.f32.mrf.mxu0
        %v3519 = vadd.f32 %v3476, %v3518
        %v3520 = vpop.f32.mrf.mxu0
        %v3521 = vadd.f32 %v3478, %v3520
        %v3522 = vpop.f32.mrf.mxu0
        %v3523 = vadd.f32 %v3480, %v3522
        %v3524 = vpop.f32.mrf.mxu0
        %v3525 = vadd.f32 %v3482, %v3524
        %3526 = vdwg.mxu0
        %3527 = vmatprep.subr.bf16.mxu0 %v2815
        %3528 = vmatpush1.bf16.msra.mxu0 %v2814
        %3529 = vmatprep.subr.bf16.mxu0 %v2807
        %3530 = vmatpush1.bf16.msra.mxu0 %v2806
        %3531 = vmatprep.subr.bf16.mxu0 %v2799
        %3532 = vmatpush1.bf16.msra.mxu0 %v2798
        %3533 = vmatprep.subr.bf16.mxu0 %v2791
        %3534 = vmatpush1.bf16.msra.mxu0 %v2790
        %3535 = vmatprep.subr.bf16.mxu0 %v2783
        %3536 = vmatpush1.bf16.msra.mxu0 %v2782
        %3537 = vmatprep.subr.bf16.mxu0 %v2775
        %3538 = vmatpush1.bf16.msra.mxu0 %v2774
        %3539 = vmatprep.subr.bf16.mxu0 %v2767
        %3540 = vmatpush1.bf16.msra.mxu0 %v2766
        %3541 = vmatprep.subr.bf16.mxu0 %v2759
        %3542 = vmatpush1.bf16.msra.mxu0 %v2758
        %3543 = vmatprep.subr.bf16.mxu0 %v2879
        %3544 = vmatpush2.bf16.msra.mxu0 %v2878
        %3545 = vmatprep.subr.bf16.mxu0 %v2871
        %3546 = vmatpush2.bf16.msra.mxu0 %v2870
        %3547 = vmatprep.subr.bf16.mxu0 %v2863
        %3548 = vmatpush2.bf16.msra.mxu0 %v2862
        %3549 = vmatprep.subr.bf16.mxu0 %v2855
        %3550 = vmatpush2.bf16.msra.mxu0 %v2854
        %3551 = vmatprep.subr.bf16.mxu0 %v2847
        %3552 = vmatpush2.bf16.msra.mxu0 %v2846
        %3553 = vmatprep.subr.bf16.mxu0 %v2839
        %3554 = vmatpush2.bf16.msra.mxu0 %v2838
        %3555 = vmatprep.subr.bf16.mxu0 %v2831
        %3556 = vmatpush2.bf16.msra.mxu0 %v2830
        %3557 = vmatprep.subr.bf16.mxu0 %v2823
        %3558 = vmatpush2.bf16.msra.mxu0 %v2822
        %3559 = vmatprep.mubr.bf16.mxu0 %v829
        %3560 = vmatmul.mubr.bf16.gmra.mxu0 %v828
        %v3561 = vpop.f32.mrf.mxu0
        %v3562 = vadd.f32 %v3519, %v3561
        %v3563 = vpop.f32.mrf.mxu0
        %v3564 = vadd.f32 %v3521, %v3563
        %v3565 = vpop.f32.mrf.mxu0
        %v3566 = vadd.f32 %v3523, %v3565
        %v3567 = vpop.f32.mrf.mxu0
        %v3568 = vadd.f32 %v3525, %v3567
        %3569 = vdwg.mxu0
        %3570 = vmatprep.subr.bf16.mxu0 %v2433
        %3571 = vmatpush1.bf16.msra.mxu0 %v2432
        %3572 = vmatprep.subr.bf16.mxu0 %v2425
        %3573 = vmatpush1.bf16.msra.mxu0 %v2424
        %3574 = vmatprep.subr.bf16.mxu0 %v2417
        %3575 = vmatpush1.bf16.msra.mxu0 %v2416
        %3576 = vmatprep.subr.bf16.mxu0 %v2409
        %3577 = vmatpush1.bf16.msra.mxu0 %v2408
        %3578 = vmatprep.subr.bf16.mxu0 %v2401
        %3579 = vmatpush1.bf16.msra.mxu0 %v2400
        %3580 = vmatprep.subr.bf16.mxu0 %v2393
        %3581 = vmatpush1.bf16.msra.mxu0 %v2392
        %3582 = vmatprep.subr.bf16.mxu0 %v2385
        %3583 = vmatpush1.bf16.msra.mxu0 %v2384
        %3584 = vmatprep.subr.bf16.mxu0 %v2377
        %3585 = vmatpush1.bf16.msra.mxu0 %v2376
        %3586 = vmatprep.subr.bf16.mxu0 %v2497
        %3587 = vmatpush2.bf16.msra.mxu0 %v2496
        %3588 = vmatprep.subr.bf16.mxu0 %v2489
        %3589 = vmatpush2.bf16.msra.mxu0 %v2488
        %3590 = vmatprep.subr.bf16.mxu0 %v2481
        %3591 = vmatpush2.bf16.msra.mxu0 %v2480
        %3592 = vmatprep.subr.bf16.mxu0 %v2473
        %3593 = vmatpush2.bf16.msra.mxu0 %v2472
        %3594 = vmatprep.subr.bf16.mxu0 %v2465
        %3595 = vmatpush2.bf16.msra.mxu0 %v2464
        %3596 = vmatprep.subr.bf16.mxu0 %v2457
        %3597 = vmatpush2.bf16.msra.mxu0 %v2456
        %3598 = vmatprep.subr.bf16.mxu0 %v2449
        %3599 = vmatpush2.bf16.msra.mxu0 %v2448
        %3600 = vmatprep.subr.bf16.mxu0 %v2441
        %3601 = vmatpush2.bf16.msra.mxu0 %v2440
        %3602 = vmatprep.mubr.bf16.mxu0 %v823
        %3603 = vmatmul.mubr.bf16.gmra.mxu0 %v822
        %v3604 = vpop.f32.mrf.mxu0
        %v3605 = vadd.f32 0.0, %v3604
        %v3606 = vpop.f32.mrf.mxu0
        %v3607 = vadd.f32 0.0, %v3606
        %v3608 = vpop.f32.mrf.mxu0
        %v3609 = vadd.f32 0.0, %v3608
        %v3610 = vpop.f32.mrf.mxu0
        %v3611 = vadd.f32 0.0, %v3610
        %3612 = vdwg.mxu0
        %3613 = vmatprep.subr.bf16.mxu0 %v2561
        %3614 = vmatpush1.bf16.msra.mxu0 %v2560
        %3615 = vmatprep.subr.bf16.mxu0 %v2553
        %3616 = vmatpush1.bf16.msra.mxu0 %v2552
        %3617 = vmatprep.subr.bf16.mxu0 %v2545
        %3618 = vmatpush1.bf16.msra.mxu0 %v2544
        %3619 = vmatprep.subr.bf16.mxu0 %v2537
        %3620 = vmatpush1.bf16.msra.mxu0 %v2536
        %3621 = vmatprep.subr.bf16.mxu0 %v2529
        %3622 = vmatpush1.bf16.msra.mxu0 %v2528
        %3623 = vmatprep.subr.bf16.mxu0 %v2521
        %3624 = vmatpush1.bf16.msra.mxu0 %v2520
        %3625 = vmatprep.subr.bf16.mxu0 %v2513
        %3626 = vmatpush1.bf16.msra.mxu0 %v2512
        %3627 = vmatprep.subr.bf16.mxu0 %v2505
        %3628 = vmatpush1.bf16.msra.mxu0 %v2504
        %3629 = vmatprep.subr.bf16.mxu0 %v2625
        %3630 = vmatpush2.bf16.msra.mxu0 %v2624
        %3631 = vmatprep.subr.bf16.mxu0 %v2617
        %3632 = vmatpush2.bf16.msra.mxu0 %v2616
        %3633 = vmatprep.subr.bf16.mxu0 %v2609
        %3634 = vmatpush2.bf16.msra.mxu0 %v2608
        %3635 = vmatprep.subr.bf16.mxu0 %v2601
        %3636 = vmatpush2.bf16.msra.mxu0 %v2600
        %3637 = vmatprep.subr.bf16.mxu0 %v2593
        %3638 = vmatpush2.bf16.msra.mxu0 %v2592
        %3639 = vmatprep.subr.bf16.mxu0 %v2585
        %3640 = vmatpush2.bf16.msra.mxu0 %v2584
        %3641 = vmatprep.subr.bf16.mxu0 %v2577
        %3642 = vmatpush2.bf16.msra.mxu0 %v2576
        %3643 = vmatprep.subr.bf16.mxu0 %v2569
        %3644 = vmatpush2.bf16.msra.mxu0 %v2568
        %3645 = vmatprep.mubr.bf16.mxu0 %v825
        %3646 = vmatmul.mubr.bf16.gmra.mxu0 %v824
        %v3647 = vpop.f32.mrf.mxu0
        %v3648 = vadd.f32 %v3605, %v3647
        %v3649 = vpop.f32.mrf.mxu0
        %v3650 = vadd.f32 %v3607, %v3649
        %v3651 = vpop.f32.mrf.mxu0
        %v3652 = vadd.f32 %v3609, %v3651
        %v3653 = vpop.f32.mrf.mxu0
        %v3654 = vadd.f32 %v3611, %v3653
        %3655 = vdwg.mxu0
        %3656 = vmatprep.subr.bf16.mxu0 %v2689
        %3657 = vmatpush1.bf16.msra.mxu0 %v2688
        %3658 = vmatprep.subr.bf16.mxu0 %v2681
        %3659 = vmatpush1.bf16.msra.mxu0 %v2680
        %3660 = vmatprep.subr.bf16.mxu0 %v2673
        %3661 = vmatpush1.bf16.msra.mxu0 %v2672
        %3662 = vmatprep.subr.bf16.mxu0 %v2665
        %3663 = vmatpush1.bf16.msra.mxu0 %v2664
        %3664 = vmatprep.subr.bf16.mxu0 %v2657
        %3665 = vmatpush1.bf16.msra.mxu0 %v2656
        %3666 = vmatprep.subr.bf16.mxu0 %v2649
        %3667 = vmatpush1.bf16.msra.mxu0 %v2648
        %3668 = vmatprep.subr.bf16.mxu0 %v2641
        %3669 = vmatpush1.bf16.msra.mxu0 %v2640
        %3670 = vmatprep.subr.bf16.mxu0 %v2633
        %3671 = vmatpush1.bf16.msra.mxu0 %v2632
        %3672 = vmatprep.subr.bf16.mxu0 %v2753
        %3673 = vmatpush2.bf16.msra.mxu0 %v2752
        %3674 = vmatprep.subr.bf16.mxu0 %v2745
        %3675 = vmatpush2.bf16.msra.mxu0 %v2744
        %3676 = vmatprep.subr.bf16.mxu0 %v2737
        %3677 = vmatpush2.bf16.msra.mxu0 %v2736
        %3678 = vmatprep.subr.bf16.mxu0 %v2729
        %3679 = vmatpush2.bf16.msra.mxu0 %v2728
        %3680 = vmatprep.subr.bf16.mxu0 %v2721
        %3681 = vmatpush2.bf16.msra.mxu0 %v2720
        %3682 = vmatprep.subr.bf16.mxu0 %v2713
        %3683 = vmatpush2.bf16.msra.mxu0 %v2712
        %3684 = vmatprep.subr.bf16.mxu0 %v2705
        %3685 = vmatpush2.bf16.msra.mxu0 %v2704
        %3686 = vmatprep.subr.bf16.mxu0 %v2697
        %3687 = vmatpush2.bf16.msra.mxu0 %v2696
        %3688 = vmatprep.mubr.bf16.mxu0 %v827
        %3689 = vmatmul.mubr.bf16.gmra.mxu0 %v826
        %v3690 = vpop.f32.mrf.mxu0
        %v3691 = vadd.f32 %v3648, %v3690
        %v3692 = vpop.f32.mrf.mxu0
        %v3693 = vadd.f32 %v3650, %v3692
        %v3694 = vpop.f32.mrf.mxu0
        %v3695 = vadd.f32 %v3652, %v3694
        %v3696 = vpop.f32.mrf.mxu0
        %v3697 = vadd.f32 %v3654, %v3696
        %3698 = vdwg.mxu0
        %3699 = vmatprep.subr.bf16.mxu0 %v2817
        %3700 = vmatpush1.bf16.msra.mxu0 %v2816
        %3701 = vmatprep.subr.bf16.mxu0 %v2809
        %3702 = vmatpush1.bf16.msra.mxu0 %v2808
        %3703 = vmatprep.subr.bf16.mxu0 %v2801
        %3704 = vmatpush1.bf16.msra.mxu0 %v2800
        %3705 = vmatprep.subr.bf16.mxu0 %v2793
        %3706 = vmatpush1.bf16.msra.mxu0 %v2792
        %3707 = vmatprep.subr.bf16.mxu0 %v2785
        %3708 = vmatpush1.bf16.msra.mxu0 %v2784
        %3709 = vmatprep.subr.bf16.mxu0 %v2777
        %3710 = vmatpush1.bf16.msra.mxu0 %v2776
        %3711 = vmatprep.subr.bf16.mxu0 %v2769
        %3712 = vmatpush1.bf16.msra.mxu0 %v2768
        %3713 = vmatprep.subr.bf16.mxu0 %v2761
        %3714 = vmatpush1.bf16.msra.mxu0 %v2760
        %3715 = vmatprep.subr.bf16.mxu0 %v2881
        %3716 = vmatpush2.bf16.msra.mxu0 %v2880
        %3717 = vmatprep.subr.bf16.mxu0 %v2873
        %3718 = vmatpush2.bf16.msra.mxu0 %v2872
        %3719 = vmatprep.subr.bf16.mxu0 %v2865
        %3720 = vmatpush2.bf16.msra.mxu0 %v2864
        %3721 = vmatprep.subr.bf16.mxu0 %v2857
        %3722 = vmatpush2.bf16.msra.mxu0 %v2856
        %3723 = vmatprep.subr.bf16.mxu0 %v2849
        %3724 = vmatpush2.bf16.msra.mxu0 %v2848
        %3725 = vmatprep.subr.bf16.mxu0 %v2841
        %3726 = vmatpush2.bf16.msra.mxu0 %v2840
        %3727 = vmatprep.subr.bf16.mxu0 %v2833
        %3728 = vmatpush2.bf16.msra.mxu0 %v2832
        %3729 = vmatprep.subr.bf16.mxu0 %v2825
        %3730 = vmatpush2.bf16.msra.mxu0 %v2824
        %3731 = vmatprep.mubr.bf16.mxu0 %v829
        %3732 = vmatmul.mubr.bf16.gmra.mxu0 %v828
        %v3733 = vpop.f32.mrf.mxu0
        %v3734 = vadd.f32 %v3691, %v3733
        %v3735 = vpop.f32.mrf.mxu0
        %v3736 = vadd.f32 %v3693, %v3735
        %v3737 = vpop.f32.mrf.mxu0
        %v3738 = vadd.f32 %v3695, %v3737
        %v3739 = vpop.f32.mrf.mxu0
        %v3740 = vadd.f32 %v3697, %v3739
        %3741 = vdwg.mxu0
        %3742 = vmatprep.subr.bf16.mxu0 %v2435
        %3743 = vmatpush1.bf16.msra.mxu0 %v2434
        %3744 = vmatprep.subr.bf16.mxu0 %v2427
        %3745 = vmatpush1.bf16.msra.mxu0 %v2426
        %3746 = vmatprep.subr.bf16.mxu0 %v2419
        %3747 = vmatpush1.bf16.msra.mxu0 %v2418
        %3748 = vmatprep.subr.bf16.mxu0 %v2411
        %3749 = vmatpush1.bf16.msra.mxu0 %v2410
        %3750 = vmatprep.subr.bf16.mxu0 %v2403
        %3751 = vmatpush1.bf16.msra.mxu0 %v2402
        %3752 = vmatprep.subr.bf16.mxu0 %v2395
        %3753 = vmatpush1.bf16.msra.mxu0 %v2394
        %3754 = vmatprep.subr.bf16.mxu0 %v2387
        %3755 = vmatpush1.bf16.msra.mxu0 %v2386
        %3756 = vmatprep.subr.bf16.mxu0 %v2379
        %3757 = vmatpush1.bf16.msra.mxu0 %v2378
        %3758 = vmatprep.subr.bf16.mxu0 %v2499
        %3759 = vmatpush2.bf16.msra.mxu0 %v2498
        %3760 = vmatprep.subr.bf16.mxu0 %v2491
        %3761 = vmatpush2.bf16.msra.mxu0 %v2490
        %3762 = vmatprep.subr.bf16.mxu0 %v2483
        %3763 = vmatpush2.bf16.msra.mxu0 %v2482
        %3764 = vmatprep.subr.bf16.mxu0 %v2475
        %3765 = vmatpush2.bf16.msra.mxu0 %v2474
        %3766 = vmatprep.subr.bf16.mxu0 %v2467
        %3767 = vmatpush2.bf16.msra.mxu0 %v2466
        %3768 = vmatprep.subr.bf16.mxu0 %v2459
        %3769 = vmatpush2.bf16.msra.mxu0 %v2458
        %3770 = vmatprep.subr.bf16.mxu0 %v2451
        %3771 = vmatpush2.bf16.msra.mxu0 %v2450
        %3772 = vmatprep.subr.bf16.mxu0 %v2443
        %3773 = vmatpush2.bf16.msra.mxu0 %v2442
        %3774 = vmatprep.mubr.bf16.mxu0 %v823
        %3775 = vmatmul.mubr.bf16.gmra.mxu0 %v822
        %v3776 = vpop.f32.mrf.mxu0
        %v3777 = vadd.f32 0.0, %v3776
        %v3778 = vpop.f32.mrf.mxu0
        %v3779 = vadd.f32 0.0, %v3778
        %v3780 = vpop.f32.mrf.mxu0
        %v3781 = vadd.f32 0.0, %v3780
        %v3782 = vpop.f32.mrf.mxu0
        %v3783 = vadd.f32 0.0, %v3782
        %3784 = vdwg.mxu0
        %3785 = vmatprep.subr.bf16.mxu0 %v2563
        %3786 = vmatpush1.bf16.msra.mxu0 %v2562
        %3787 = vmatprep.subr.bf16.mxu0 %v2555
        %3788 = vmatpush1.bf16.msra.mxu0 %v2554
        %3789 = vmatprep.subr.bf16.mxu0 %v2547
        %3790 = vmatpush1.bf16.msra.mxu0 %v2546
        %3791 = vmatprep.subr.bf16.mxu0 %v2539
        %3792 = vmatpush1.bf16.msra.mxu0 %v2538
        %3793 = vmatprep.subr.bf16.mxu0 %v2531
        %3794 = vmatpush1.bf16.msra.mxu0 %v2530
        %3795 = vmatprep.subr.bf16.mxu0 %v2523
        %3796 = vmatpush1.bf16.msra.mxu0 %v2522
        %3797 = vmatprep.subr.bf16.mxu0 %v2515
        %3798 = vmatpush1.bf16.msra.mxu0 %v2514
        %3799 = vmatprep.subr.bf16.mxu0 %v2507
        %3800 = vmatpush1.bf16.msra.mxu0 %v2506
        %3801 = vmatprep.subr.bf16.mxu0 %v2627
        %3802 = vmatpush2.bf16.msra.mxu0 %v2626
        %3803 = vmatprep.subr.bf16.mxu0 %v2619
        %3804 = vmatpush2.bf16.msra.mxu0 %v2618
        %3805 = vmatprep.subr.bf16.mxu0 %v2611
        %3806 = vmatpush2.bf16.msra.mxu0 %v2610
        %3807 = vmatprep.subr.bf16.mxu0 %v2603
        %3808 = vmatpush2.bf16.msra.mxu0 %v2602
        %3809 = vmatprep.subr.bf16.mxu0 %v2595
        %3810 = vmatpush2.bf16.msra.mxu0 %v2594
        %3811 = vmatprep.subr.bf16.mxu0 %v2587
        %3812 = vmatpush2.bf16.msra.mxu0 %v2586
        %3813 = vmatprep.subr.bf16.mxu0 %v2579
        %3814 = vmatpush2.bf16.msra.mxu0 %v2578
        %3815 = vmatprep.subr.bf16.mxu0 %v2571
        %3816 = vmatpush2.bf16.msra.mxu0 %v2570
        %3817 = vmatprep.mubr.bf16.mxu0 %v825
        %3818 = vmatmul.mubr.bf16.gmra.mxu0 %v824
        %v3819 = vpop.f32.mrf.mxu0
        %v3820 = vadd.f32 %v3777, %v3819
        %v3821 = vpop.f32.mrf.mxu0
        %v3822 = vadd.f32 %v3779, %v3821
        %v3823 = vpop.f32.mrf.mxu0
        %v3824 = vadd.f32 %v3781, %v3823
        %v3825 = vpop.f32.mrf.mxu0
        %v3826 = vadd.f32 %v3783, %v3825
        %3827 = vdwg.mxu0
        %3828 = vmatprep.subr.bf16.mxu0 %v2691
        %3829 = vmatpush1.bf16.msra.mxu0 %v2690
        %3830 = vmatprep.subr.bf16.mxu0 %v2683
        %3831 = vmatpush1.bf16.msra.mxu0 %v2682
        %3832 = vmatprep.subr.bf16.mxu0 %v2675
        %3833 = vmatpush1.bf16.msra.mxu0 %v2674
        %3834 = vmatprep.subr.bf16.mxu0 %v2667
        %3835 = vmatpush1.bf16.msra.mxu0 %v2666
        %3836 = vmatprep.subr.bf16.mxu0 %v2659
        %3837 = vmatpush1.bf16.msra.mxu0 %v2658
        %3838 = vmatprep.subr.bf16.mxu0 %v2651
        %3839 = vmatpush1.bf16.msra.mxu0 %v2650
        %3840 = vmatprep.subr.bf16.mxu0 %v2643
        %3841 = vmatpush1.bf16.msra.mxu0 %v2642
        %3842 = vmatprep.subr.bf16.mxu0 %v2635
        %3843 = vmatpush1.bf16.msra.mxu0 %v2634
        %3844 = vmatprep.subr.bf16.mxu0 %v2755
        %3845 = vmatpush2.bf16.msra.mxu0 %v2754
        %3846 = vmatprep.subr.bf16.mxu0 %v2747
        %3847 = vmatpush2.bf16.msra.mxu0 %v2746
        %3848 = vmatprep.subr.bf16.mxu0 %v2739
        %3849 = vmatpush2.bf16.msra.mxu0 %v2738
        %3850 = vmatprep.subr.bf16.mxu0 %v2731
        %3851 = vmatpush2.bf16.msra.mxu0 %v2730
        %3852 = vmatprep.subr.bf16.mxu0 %v2723
        %3853 = vmatpush2.bf16.msra.mxu0 %v2722
        %3854 = vmatprep.subr.bf16.mxu0 %v2715
        %3855 = vmatpush2.bf16.msra.mxu0 %v2714
        %3856 = vmatprep.subr.bf16.mxu0 %v2707
        %3857 = vmatpush2.bf16.msra.mxu0 %v2706
        %3858 = vmatprep.subr.bf16.mxu0 %v2699
        %3859 = vmatpush2.bf16.msra.mxu0 %v2698
        %3860 = vmatprep.mubr.bf16.mxu0 %v827
        %3861 = vmatmul.mubr.bf16.gmra.mxu0 %v826
        %v3862 = vpop.f32.mrf.mxu0
        %v3863 = vadd.f32 %v3820, %v3862
        %v3864 = vpop.f32.mrf.mxu0
        %v3865 = vadd.f32 %v3822, %v3864
        %v3866 = vpop.f32.mrf.mxu0
        %v3867 = vadd.f32 %v3824, %v3866
        %v3868 = vpop.f32.mrf.mxu0
        %v3869 = vadd.f32 %v3826, %v3868
        %3870 = vdwg.mxu0
        %3871 = vmatprep.subr.bf16.mxu0 %v2819
        %3872 = vmatpush1.bf16.msra.mxu0 %v2818
        %3873 = vmatprep.subr.bf16.mxu0 %v2811
        %3874 = vmatpush1.bf16.msra.mxu0 %v2810
        %3875 = vmatprep.subr.bf16.mxu0 %v2803
        %3876 = vmatpush1.bf16.msra.mxu0 %v2802
        %3877 = vmatprep.subr.bf16.mxu0 %v2795
        %3878 = vmatpush1.bf16.msra.mxu0 %v2794
        %3879 = vmatprep.subr.bf16.mxu0 %v2787
        %3880 = vmatpush1.bf16.msra.mxu0 %v2786
        %3881 = vmatprep.subr.bf16.mxu0 %v2779
        %3882 = vmatpush1.bf16.msra.mxu0 %v2778
        %3883 = vmatprep.subr.bf16.mxu0 %v2771
        %3884 = vmatpush1.bf16.msra.mxu0 %v2770
        %3885 = vmatprep.subr.bf16.mxu0 %v2763
        %3886 = vmatpush1.bf16.msra.mxu0 %v2762
        %3887 = vmatprep.subr.bf16.mxu0 %v2883
        %3888 = vmatpush2.bf16.msra.mxu0 %v2882
        %3889 = vmatprep.subr.bf16.mxu0 %v2875
        %3890 = vmatpush2.bf16.msra.mxu0 %v2874
        %3891 = vmatprep.subr.bf16.mxu0 %v2867
        %3892 = vmatpush2.bf16.msra.mxu0 %v2866
        %3893 = vmatprep.subr.bf16.mxu0 %v2859
        %3894 = vmatpush2.bf16.msra.mxu0 %v2858
        %3895 = vmatprep.subr.bf16.mxu0 %v2851
        %3896 = vmatpush2.bf16.msra.mxu0 %v2850
        %3897 = vmatprep.subr.bf16.mxu0 %v2843
        %3898 = vmatpush2.bf16.msra.mxu0 %v2842
        %3899 = vmatprep.subr.bf16.mxu0 %v2835
        %3900 = vmatpush2.bf16.msra.mxu0 %v2834
        %3901 = vmatprep.subr.bf16.mxu0 %v2827
        %3902 = vmatpush2.bf16.msra.mxu0 %v2826
        %3903 = vmatprep.mubr.bf16.mxu0 %v829
        %3904 = vmatmul.mubr.bf16.gmra.mxu0 %v828
        %v3905 = vpop.f32.mrf.mxu0
        %v3906 = vadd.f32 %v3863, %v3905
        %v3907 = vpop.f32.mrf.mxu0
        %v3908 = vadd.f32 %v3865, %v3907
        %v3909 = vpop.f32.mrf.mxu0
        %v3910 = vadd.f32 %v3867, %v3909
        %v3911 = vpop.f32.mrf.mxu0
        %v3912 = vadd.f32 %v3869, %v3911
        %3913 = vdwg.mxu0
        %3914 = vmatprep.subr.bf16.mxu0 %v2437
        %3915 = vmatpush1.bf16.msra.mxu0 %v2436
        %3916 = vmatprep.subr.bf16.mxu0 %v2429
        %3917 = vmatpush1.bf16.msra.mxu0 %v2428
        %3918 = vmatprep.subr.bf16.mxu0 %v2421
        %3919 = vmatpush1.bf16.msra.mxu0 %v2420
        %3920 = vmatprep.subr.bf16.mxu0 %v2413
        %3921 = vmatpush1.bf16.msra.mxu0 %v2412
        %3922 = vmatprep.subr.bf16.mxu0 %v2405
        %3923 = vmatpush1.bf16.msra.mxu0 %v2404
        %3924 = vmatprep.subr.bf16.mxu0 %v2397
        %3925 = vmatpush1.bf16.msra.mxu0 %v2396
        %3926 = vmatprep.subr.bf16.mxu0 %v2389
        %3927 = vmatpush1.bf16.msra.mxu0 %v2388
        %3928 = vmatprep.subr.bf16.mxu0 %v2381
        %3929 = vmatpush1.bf16.msra.mxu0 %v2380
        %3930 = vmatprep.subr.bf16.mxu0 %v2501
        %3931 = vmatpush2.bf16.msra.mxu0 %v2500
        %3932 = vmatprep.subr.bf16.mxu0 %v2493
        %3933 = vmatpush2.bf16.msra.mxu0 %v2492
        %3934 = vmatprep.subr.bf16.mxu0 %v2485
        %3935 = vmatpush2.bf16.msra.mxu0 %v2484
        %3936 = vmatprep.subr.bf16.mxu0 %v2477
        %3937 = vmatpush2.bf16.msra.mxu0 %v2476
        %3938 = vmatprep.subr.bf16.mxu0 %v2469
        %3939 = vmatpush2.bf16.msra.mxu0 %v2468
        %3940 = vmatprep.subr.bf16.mxu0 %v2461
        %3941 = vmatpush2.bf16.msra.mxu0 %v2460
        %3942 = vmatprep.subr.bf16.mxu0 %v2453
        %3943 = vmatpush2.bf16.msra.mxu0 %v2452
        %3944 = vmatprep.subr.bf16.mxu0 %v2445
        %3945 = vmatpush2.bf16.msra.mxu0 %v2444
        %3946 = vmatprep.mubr.bf16.mxu0 %v823
        %3947 = vmatmul.mubr.bf16.gmra.mxu0 %v822
        %v3948 = vpop.f32.mrf.mxu0
        %v3949 = vadd.f32 0.0, %v3948
        %v3950 = vpop.f32.mrf.mxu0
        %v3951 = vadd.f32 0.0, %v3950
        %v3952 = vpop.f32.mrf.mxu0
        %v3953 = vadd.f32 0.0, %v3952
        %v3954 = vpop.f32.mrf.mxu0
        %v3955 = vadd.f32 0.0, %v3954
        %3956 = vdwg.mxu0
        %3957 = vmatprep.subr.bf16.mxu0 %v2565
        %3958 = vmatpush1.bf16.msra.mxu0 %v2564
        %3959 = vmatprep.subr.bf16.mxu0 %v2557
        %3960 = vmatpush1.bf16.msra.mxu0 %v2556
        %3961 = vmatprep.subr.bf16.mxu0 %v2549
        %3962 = vmatpush1.bf16.msra.mxu0 %v2548
        %3963 = vmatprep.subr.bf16.mxu0 %v2541
        %3964 = vmatpush1.bf16.msra.mxu0 %v2540
        %3965 = vmatprep.subr.bf16.mxu0 %v2533
        %3966 = vmatpush1.bf16.msra.mxu0 %v2532
        %3967 = vmatprep.subr.bf16.mxu0 %v2525
        %3968 = vmatpush1.bf16.msra.mxu0 %v2524
        %3969 = vmatprep.subr.bf16.mxu0 %v2517
        %3970 = vmatpush1.bf16.msra.mxu0 %v2516
        %3971 = vmatprep.subr.bf16.mxu0 %v2509
        %3972 = vmatpush1.bf16.msra.mxu0 %v2508
        %3973 = vmatprep.subr.bf16.mxu0 %v2629
        %3974 = vmatpush2.bf16.msra.mxu0 %v2628
        %3975 = vmatprep.subr.bf16.mxu0 %v2621
        %3976 = vmatpush2.bf16.msra.mxu0 %v2620
        %3977 = vmatprep.subr.bf16.mxu0 %v2613
        %3978 = vmatpush2.bf16.msra.mxu0 %v2612
        %3979 = vmatprep.subr.bf16.mxu0 %v2605
        %3980 = vmatpush2.bf16.msra.mxu0 %v2604
        %3981 = vmatprep.subr.bf16.mxu0 %v2597
        %3982 = vmatpush2.bf16.msra.mxu0 %v2596
        %3983 = vmatprep.subr.bf16.mxu0 %v2589
        %3984 = vmatpush2.bf16.msra.mxu0 %v2588
        %3985 = vmatprep.subr.bf16.mxu0 %v2581
        %3986 = vmatpush2.bf16.msra.mxu0 %v2580
        %3987 = vmatprep.subr.bf16.mxu0 %v2573
        %3988 = vmatpush2.bf16.msra.mxu0 %v2572
        %3989 = vmatprep.mubr.bf16.mxu0 %v825
        %3990 = vmatmul.mubr.bf16.gmra.mxu0 %v824
        %v3991 = vpop.f32.mrf.mxu0
        %v3992 = vadd.f32 %v3949, %v3991
        %v3993 = vpop.f32.mrf.mxu0
        %v3994 = vadd.f32 %v3951, %v3993
        %v3995 = vpop.f32.mrf.mxu0
        %v3996 = vadd.f32 %v3953, %v3995
        %v3997 = vpop.f32.mrf.mxu0
        %v3998 = vadd.f32 %v3955, %v3997
        %3999 = vdwg.mxu0
        %4000 = vmatprep.subr.bf16.mxu0 %v2693
        %4001 = vmatpush1.bf16.msra.mxu0 %v2692
        %4002 = vmatprep.subr.bf16.mxu0 %v2685
        %4003 = vmatpush1.bf16.msra.mxu0 %v2684
        %4004 = vmatprep.subr.bf16.mxu0 %v2677
        %4005 = vmatpush1.bf16.msra.mxu0 %v2676
        %4006 = vmatprep.subr.bf16.mxu0 %v2669
        %4007 = vmatpush1.bf16.msra.mxu0 %v2668
        %4008 = vmatprep.subr.bf16.mxu0 %v2661
        %4009 = vmatpush1.bf16.msra.mxu0 %v2660
        %4010 = vmatprep.subr.bf16.mxu0 %v2653
        %4011 = vmatpush1.bf16.msra.mxu0 %v2652
        %4012 = vmatprep.subr.bf16.mxu0 %v2645
        %4013 = vmatpush1.bf16.msra.mxu0 %v2644
        %4014 = vmatprep.subr.bf16.mxu0 %v2637
        %4015 = vmatpush1.bf16.msra.mxu0 %v2636
        %4016 = vmatprep.subr.bf16.mxu0 %v2757
        %4017 = vmatpush2.bf16.msra.mxu0 %v2756
        %4018 = vmatprep.subr.bf16.mxu0 %v2749
        %4019 = vmatpush2.bf16.msra.mxu0 %v2748
        %4020 = vmatprep.subr.bf16.mxu0 %v2741
        %4021 = vmatpush2.bf16.msra.mxu0 %v2740
        %4022 = vmatprep.subr.bf16.mxu0 %v2733
        %4023 = vmatpush2.bf16.msra.mxu0 %v2732
        %4024 = vmatprep.subr.bf16.mxu0 %v2725
        %4025 = vmatpush2.bf16.msra.mxu0 %v2724
        %4026 = vmatprep.subr.bf16.mxu0 %v2717
        %4027 = vmatpush2.bf16.msra.mxu0 %v2716
        %4028 = vmatprep.subr.bf16.mxu0 %v2709
        %4029 = vmatpush2.bf16.msra.mxu0 %v2708
        %4030 = vmatprep.subr.bf16.mxu0 %v2701
        %4031 = vmatpush2.bf16.msra.mxu0 %v2700
        %4032 = vmatprep.mubr.bf16.mxu0 %v827
        %4033 = vmatmul.mubr.bf16.gmra.mxu0 %v826
        %v4034 = vpop.f32.mrf.mxu0
        %v4035 = vadd.f32 %v3992, %v4034
        %v4036 = vpop.f32.mrf.mxu0
        %v4037 = vadd.f32 %v3994, %v4036
        %v4038 = vpop.f32.mrf.mxu0
        %v4039 = vadd.f32 %v3996, %v4038
        %v4040 = vpop.f32.mrf.mxu0
        %v4041 = vadd.f32 %v3998, %v4040
        %4042 = vdwg.mxu0
        %4043 = vmatprep.subr.bf16.mxu0 %v2821
        %4044 = vmatpush1.bf16.msra.mxu0 %v2820
        %4045 = vmatprep.subr.bf16.mxu0 %v2813
        %4046 = vmatpush1.bf16.msra.mxu0 %v2812
        %4047 = vmatprep.subr.bf16.mxu0 %v2805
        %4048 = vmatpush1.bf16.msra.mxu0 %v2804
        %4049 = vmatprep.subr.bf16.mxu0 %v2797
        %4050 = vmatpush1.bf16.msra.mxu0 %v2796
        %4051 = vmatprep.subr.bf16.mxu0 %v2789
        %4052 = vmatpush1.bf16.msra.mxu0 %v2788
        %4053 = vmatprep.subr.bf16.mxu0 %v2781
        %4054 = vmatpush1.bf16.msra.mxu0 %v2780
        %4055 = vmatprep.subr.bf16.mxu0 %v2773
        %4056 = vmatpush1.bf16.msra.mxu0 %v2772
        %4057 = vmatprep.subr.bf16.mxu0 %v2765
        %4058 = vmatpush1.bf16.msra.mxu0 %v2764
        %4059 = vmatprep.subr.bf16.mxu0 %v2885
        %4060 = vmatpush2.bf16.msra.mxu0 %v2884
        %4061 = vmatprep.subr.bf16.mxu0 %v2877
        %4062 = vmatpush2.bf16.msra.mxu0 %v2876
        %4063 = vmatprep.subr.bf16.mxu0 %v2869
        %4064 = vmatpush2.bf16.msra.mxu0 %v2868
        %4065 = vmatprep.subr.bf16.mxu0 %v2861
        %4066 = vmatpush2.bf16.msra.mxu0 %v2860
        %4067 = vmatprep.subr.bf16.mxu0 %v2853
        %4068 = vmatpush2.bf16.msra.mxu0 %v2852
        %4069 = vmatprep.subr.bf16.mxu0 %v2845
        %4070 = vmatpush2.bf16.msra.mxu0 %v2844
        %4071 = vmatprep.subr.bf16.mxu0 %v2837
        %4072 = vmatpush2.bf16.msra.mxu0 %v2836
        %4073 = vmatprep.subr.bf16.mxu0 %v2829
        %4074 = vmatpush2.bf16.msra.mxu0 %v2828
        %4075 = vmatprep.mubr.bf16.mxu0 %v829
        %4076 = vmatmul.mubr.bf16.gmra.mxu0 %v828
        %v4077 = vpop.f32.mrf.mxu0
        %v4078 = vadd.f32 %v4035, %v4077
        %v4079 = vpop.f32.mrf.mxu0
        %v4080 = vadd.f32 %v4037, %v4079
        %v4081 = vpop.f32.mrf.mxu0
        %v4082 = vadd.f32 %v4039, %v4081
        %v4083 = vpop.f32.mrf.mxu0
        %v4084 = vadd.f32 %v4041, %v4083
        %4085 = vdwg.mxu0
        %v4086 = vmul.f32 %v3562, %v3562
        %v4087 = vmul.f32 %v3564, %v3564
        %v4088 = vmul.f32 %v3734, %v3734
        %v4089 = vmul.f32 %v3736, %v3736
        %v4090 = vmul.f32 %v3566, %v3566
        %v4091 = vmul.f32 %v3568, %v3568
        %v4092 = vmul.f32 %v3738, %v3738
        %v4093 = vmul.f32 %v3740, %v3740
        %v4094 = vmul.f32 %v3906, %v3906
        %v4095 = vmul.f32 %v3908, %v3908
        %v4096 = vmul.f32 %v4078, %v4078
        %v4097 = vmul.f32 %v4080, %v4080
        %v4098 = vmul.f32 %v3910, %v3910
        %v4099 = vmul.f32 %v3912, %v3912
        %v4100 = vmul.f32 %v4082, %v4082
        %v4101 = vmul.f32 %v4084, %v4084
        %v4102 = vadd.f32 %v4086, %v4094
        %v4103 = vadd.f32 %v4087, %v4095
        %v4104 = vadd.f32 %v4088, %v4096
        %v4105 = vadd.f32 %v4089, %v4097
        %v4106 = vadd.f32 %v4090, %v4098
        %v4107 = vadd.f32 %v4091, %v4099
        %v4108 = vadd.f32 %v4092, %v4100
        %v4109 = vadd.f32 %v4093, %v4101
        %v4110 = vpack.c.bf16 %v4106, %v4102
        %v4111 = vpack.c.bf16 %v4107, %v4103
        %v4112 = vpack.c.bf16 %v4108, %v4104
        %v4113 = vpack.c.bf16 %v4109, %v4105
        %v4114 = vld [vmem:[#allocation6] sm:$0xf]
        %v4115 = vld [vmem:[#allocation6 + $0x4] sm:$0xf]
        %v4116 = vld [vmem:[#allocation6 + $0x8] sm:$0xf]
        %v4117 = vld [vmem:[#allocation6 + $0xc] sm:$0xf]
        %v4118 = vld [vmem:[#allocation6 + $0x10] sm:$0xf]
        %v4119 = vld [vmem:[#allocation6 + $0x14] sm:$0xf]
        %v4120 = vld [vmem:[#allocation6 + $0x18] sm:$0xf]
        %v4121 = vld [vmem:[#allocation6 + $0x1c] sm:$0xf]
        %v4122 = vld [vmem:[#allocation6 + $0x20] sm:$0xf]
        %v4123 = vld [vmem:[#allocation6 + $0x24] sm:$0xf]
        %v4124 = vld [vmem:[#allocation6 + $0x28] sm:$0xf]
        %v4125 = vld [vmem:[#allocation6 + $0x2c] sm:$0xf]
        %v4126 = vld [vmem:[#allocation6 + $0x30] sm:$0xf]
        %v4127 = vld [vmem:[#allocation6 + $0x34] sm:$0xf]
        %v4128 = vld [vmem:[#allocation6 + $0x38] sm:$0xf]
        %v4129 = vld [vmem:[#allocation6 + $0x3c] sm:$0xf]
        %v4130 = vld [vmem:[#allocation6 + $0x40] sm:$0xf]
        %v4131 = vld [vmem:[#allocation6 + $0x44] sm:$0xf]
        %v4132 = vld [vmem:[#allocation6 + $0x48] sm:$0xf]
        %v4133 = vld [vmem:[#allocation6 + $0x4c] sm:$0xf]
        %v4134 = vld [vmem:[#allocation6 + $0x50] sm:$0xf]
        %v4135 = vld [vmem:[#allocation6 + $0x54] sm:$0xf]
        %v4136 = vld [vmem:[#allocation6 + $0x58] sm:$0xf]
        %v4137 = vld [vmem:[#allocation6 + $0x5c] sm:$0xf]
        %v4138 = vld [vmem:[#allocation6 + $0x60] sm:$0xf]
        %v4139 = vld [vmem:[#allocation6 + $0x64] sm:$0xf]
        %v4140 = vld [vmem:[#allocation6 + $0x68] sm:$0xf]
        %v4141 = vld [vmem:[#allocation6 + $0x6c] sm:$0xf]
        %v4142 = vld [vmem:[#allocation6 + $0x70] sm:$0xf]
        %v4143 = vld [vmem:[#allocation6 + $0x74] sm:$0xf]
        %v4144 = vld [vmem:[#allocation6 + $0x78] sm:$0xf]
        %v4145 = vld [vmem:[#allocation6 + $0x7c] sm:$0xf]
        %v4146 = vld [vmem:[#allocation6 + $0x80] sm:$0xf]
        %v4147 = vld [vmem:[#allocation6 + $0x84] sm:$0xf]
        %v4148 = vld [vmem:[#allocation6 + $0x88] sm:$0xf]
        %v4149 = vld [vmem:[#allocation6 + $0x8c] sm:$0xf]
        %v4150 = vld [vmem:[#allocation6 + $0x90] sm:$0xf]
        %v4151 = vld [vmem:[#allocation6 + $0x94] sm:$0xf]
        %v4152 = vld [vmem:[#allocation6 + $0x98] sm:$0xf]
        %v4153 = vld [vmem:[#allocation6 + $0x9c] sm:$0xf]
        %v4154 = vld [vmem:[#allocation6 + $0xa0] sm:$0xf]
        %v4155 = vld [vmem:[#allocation6 + $0xa4] sm:$0xf]
        %v4156 = vld [vmem:[#allocation6 + $0xa8] sm:$0xf]
        %v4157 = vld [vmem:[#allocation6 + $0xac] sm:$0xf]
        %v4158 = vld [vmem:[#allocation6 + $0xb0] sm:$0xf]
        %v4159 = vld [vmem:[#allocation6 + $0xb4] sm:$0xf]
        %v4160 = vld [vmem:[#allocation6 + $0xb8] sm:$0xf]
        %v4161 = vld [vmem:[#allocation6 + $0xbc] sm:$0xf]
        %v4162 = vld [vmem:[#allocation6 + $0xc0] sm:$0xf]
        %v4163 = vld [vmem:[#allocation6 + $0xc4] sm:$0xf]
        %v4164 = vld [vmem:[#allocation6 + $0xc8] sm:$0xf]
        %v4165 = vld [vmem:[#allocation6 + $0xcc] sm:$0xf]
        %v4166 = vld [vmem:[#allocation6 + $0xd0] sm:$0xf]
        %v4167 = vld [vmem:[#allocation6 + $0xd4] sm:$0xf]
        %v4168 = vld [vmem:[#allocation6 + $0xd8] sm:$0xf]
        %v4169 = vld [vmem:[#allocation6 + $0xdc] sm:$0xf]
        %v4170 = vld [vmem:[#allocation6 + $0xe0] sm:$0xf]
        %v4171 = vld [vmem:[#allocation6 + $0xe4] sm:$0xf]
        %v4172 = vld [vmem:[#allocation6 + $0xe8] sm:$0xf]
        %v4173 = vld [vmem:[#allocation6 + $0xec] sm:$0xf]
        %v4174 = vld [vmem:[#allocation6 + $0xf0] sm:$0xf]
        %v4175 = vld [vmem:[#allocation6 + $0xf4] sm:$0xf]
        %v4176 = vld [vmem:[#allocation6 + $0xf8] sm:$0xf]
        %v4177 = vld [vmem:[#allocation6 + $0xfc] sm:$0xf]
        %v4242 = vunpack.c.l.b16 %v4114
        %v4243 = vunpack.c.l.b16 %v4115
        %v4244 = vunpack.c.l.b16 %v4116
        %v4245 = vunpack.c.l.b16 %v4117
        %v4246 = vunpack.c.l.b16 %v4118
        %v4247 = vunpack.c.l.b16 %v4119
        %v4248 = vunpack.c.l.b16 %v4120
        %v4249 = vunpack.c.l.b16 %v4121
        %v4250 = vunpack.c.l.b16 %v4122
        %v4251 = vunpack.c.l.b16 %v4123
        %v4252 = vunpack.c.l.b16 %v4124
        %v4253 = vunpack.c.l.b16 %v4125
        %v4254 = vunpack.c.l.b16 %v4126
        %v4255 = vunpack.c.l.b16 %v4127
        %v4256 = vunpack.c.l.b16 %v4128
        %v4257 = vunpack.c.l.b16 %v4129
        %v4258 = vunpack.c.l.b16 %v4130
        %v4259 = vunpack.c.l.b16 %v4131
        %v4260 = vunpack.c.l.b16 %v4132
        %v4261 = vunpack.c.l.b16 %v4133
        %v4262 = vunpack.c.l.b16 %v4134
        %v4263 = vunpack.c.l.b16 %v4135
        %v4264 = vunpack.c.l.b16 %v4136
        %v4265 = vunpack.c.l.b16 %v4137
        %v4266 = vunpack.c.l.b16 %v4138
        %v4267 = vunpack.c.l.b16 %v4139
        %v4268 = vunpack.c.l.b16 %v4140
        %v4269 = vunpack.c.l.b16 %v4141
        %v4270 = vunpack.c.l.b16 %v4142
        %v4271 = vunpack.c.l.b16 %v4143
        %v4272 = vunpack.c.l.b16 %v4144
        %v4273 = vunpack.c.l.b16 %v4145
        %v4274 = vunpack.c.l.b16 %v4146
        %v4275 = vunpack.c.l.b16 %v4147
        %v4276 = vunpack.c.l.b16 %v4148
        %v4277 = vunpack.c.l.b16 %v4149
        %v4278 = vunpack.c.l.b16 %v4150
        %v4279 = vunpack.c.l.b16 %v4151
        %v4280 = vunpack.c.l.b16 %v4152
        %v4281 = vunpack.c.l.b16 %v4153
        %v4282 = vunpack.c.l.b16 %v4154
        %v4283 = vunpack.c.l.b16 %v4155
        %v4284 = vunpack.c.l.b16 %v4156
        %v4285 = vunpack.c.l.b16 %v4157
        %v4286 = vunpack.c.l.b16 %v4158
        %v4287 = vunpack.c.l.b16 %v4159
        %v4288 = vunpack.c.l.b16 %v4160
        %v4289 = vunpack.c.l.b16 %v4161
        %v4290 = vunpack.c.l.b16 %v4162
        %v4291 = vunpack.c.l.b16 %v4163
        %v4292 = vunpack.c.l.b16 %v4164
        %v4293 = vunpack.c.l.b16 %v4165
        %v4294 = vunpack.c.l.b16 %v4166
        %v4295 = vunpack.c.l.b16 %v4167
        %v4296 = vunpack.c.l.b16 %v4168
        %v4297 = vunpack.c.l.b16 %v4169
        %v4298 = vunpack.c.l.b16 %v4170
        %v4299 = vunpack.c.l.b16 %v4171
        %v4300 = vunpack.c.l.b16 %v4172
        %v4301 = vunpack.c.l.b16 %v4173
        %v4302 = vunpack.c.l.b16 %v4174
        %v4303 = vunpack.c.l.b16 %v4175
        %v4304 = vunpack.c.l.b16 %v4176
        %v4305 = vunpack.c.l.b16 %v4177
        %v4306 = vpack.c.b16 %v4243, %v4242
        %v4307 = vpack.c.b16 %v4245, %v4244
        %v4308 = vpack.c.b16 %v4247, %v4246
        %v4309 = vpack.c.b16 %v4249, %v4248
        %v4310 = vpack.c.b16 %v4251, %v4250
        %v4311 = vpack.c.b16 %v4253, %v4252
        %v4312 = vpack.c.b16 %v4255, %v4254
        %v4313 = vpack.c.b16 %v4257, %v4256
        %v4314 = vpack.c.b16 %v4259, %v4258
        %v4315 = vpack.c.b16 %v4261, %v4260
        %v4316 = vpack.c.b16 %v4263, %v4262
        %v4317 = vpack.c.b16 %v4265, %v4264
        %v4318 = vpack.c.b16 %v4267, %v4266
        %v4319 = vpack.c.b16 %v4269, %v4268
        %v4320 = vpack.c.b16 %v4271, %v4270
        %v4321 = vpack.c.b16 %v4273, %v4272
        %v4322 = vpack.c.b16 %v4275, %v4274
        %v4323 = vpack.c.b16 %v4277, %v4276
        %v4324 = vpack.c.b16 %v4279, %v4278
        %v4325 = vpack.c.b16 %v4281, %v4280
        %v4326 = vpack.c.b16 %v4283, %v4282
        %v4327 = vpack.c.b16 %v4285, %v4284
        %v4328 = vpack.c.b16 %v4287, %v4286
        %v4329 = vpack.c.b16 %v4289, %v4288
        %v4330 = vpack.c.b16 %v4291, %v4290
        %v4331 = vpack.c.b16 %v4293, %v4292
        %v4332 = vpack.c.b16 %v4295, %v4294
        %v4333 = vpack.c.b16 %v4297, %v4296
        %v4334 = vpack.c.b16 %v4299, %v4298
        %v4335 = vpack.c.b16 %v4301, %v4300
        %v4336 = vpack.c.b16 %v4303, %v4302
        %v4337 = vpack.c.b16 %v4305, %v4304
        %4370 = vmatprep.subr.bf16.mxu0 0
        %4371 = vmatpush1.bf16.msra.mxu0 %v4313
        %4372 = vmatprep.subr.bf16.mxu0 0
        %4373 = vmatpush1.bf16.msra.mxu0 %v4312
        %4374 = vmatprep.subr.bf16.mxu0 0
        %4375 = vmatpush1.bf16.msra.mxu0 %v4311
        %4376 = vmatprep.subr.bf16.mxu0 0
        %4377 = vmatpush1.bf16.msra.mxu0 %v4310
        %4378 = vmatprep.subr.bf16.mxu0 0
        %4379 = vmatpush1.bf16.msra.mxu0 %v4309
        %4380 = vmatprep.subr.bf16.mxu0 0
        %4381 = vmatpush1.bf16.msra.mxu0 %v4308
        %4382 = vmatprep.subr.bf16.mxu0 0
        %4383 = vmatpush1.bf16.msra.mxu0 %v4307
        %4384 = vmatprep.subr.bf16.mxu0 0
        %4385 = vmatpush1.bf16.msra.mxu0 %v4306
        %4386 = vmatprep.subr.bf16.mxu0 0
        %4387 = vmatpush2.bf16.msra.mxu0 %v4321
        %4388 = vmatprep.subr.bf16.mxu0 0
        %4389 = vmatpush2.bf16.msra.mxu0 %v4320
        %4390 = vmatprep.subr.bf16.mxu0 0
        %4391 = vmatpush2.bf16.msra.mxu0 %v4319
        %4392 = vmatprep.subr.bf16.mxu0 0
        %4393 = vmatpush2.bf16.msra.mxu0 %v4318
        %4394 = vmatprep.subr.bf16.mxu0 0
        %4395 = vmatpush2.bf16.msra.mxu0 %v4317
        %4396 = vmatprep.subr.bf16.mxu0 0
        %4397 = vmatpush2.bf16.msra.mxu0 %v4316
        %4398 = vmatprep.subr.bf16.mxu0 0
        %4399 = vmatpush2.bf16.msra.mxu0 %v4315
        %4400 = vmatprep.subr.bf16.mxu0 0
        %4401 = vmatpush2.bf16.msra.mxu0 %v4314
        %4402 = vmatprep.mubr.bf16.mxu0 %v4111
        %4403 = vmatmul.mubr.bf16.gmra.mxu0 %v4110
        %v4404 = vpop.f32.mrf.mxu0
        %v4405 = vadd.f32 0.0, %v4404
        %v4406 = vpop.f32.mrf.mxu0
        %v4407 = vpop.f32.mrf.mxu0
        %v4408 = vadd.f32 0.0, %v4407
        %v4409 = vpop.f32.mrf.mxu0
        %4410 = vdwg.mxu0
        %4411 = vmatprep.subr.bf16.mxu0 0
        %4412 = vmatpush1.bf16.msra.mxu0 %v4329
        %4413 = vmatprep.subr.bf16.mxu0 0
        %4414 = vmatpush1.bf16.msra.mxu0 %v4328
        %4415 = vmatprep.subr.bf16.mxu0 0
        %4416 = vmatpush1.bf16.msra.mxu0 %v4327
        %4417 = vmatprep.subr.bf16.mxu0 0
        %4418 = vmatpush1.bf16.msra.mxu0 %v4326
        %4419 = vmatprep.subr.bf16.mxu0 0
        %4420 = vmatpush1.bf16.msra.mxu0 %v4325
        %4421 = vmatprep.subr.bf16.mxu0 0
        %4422 = vmatpush1.bf16.msra.mxu0 %v4324
        %4423 = vmatprep.subr.bf16.mxu0 0
        %4424 = vmatpush1.bf16.msra.mxu0 %v4323
        %4425 = vmatprep.subr.bf16.mxu0 0
        %4426 = vmatpush1.bf16.msra.mxu0 %v4322
        %4427 = vmatprep.subr.bf16.mxu0 0
        %4428 = vmatpush2.bf16.msra.mxu0 %v4337
        %4429 = vmatprep.subr.bf16.mxu0 0
        %4430 = vmatpush2.bf16.msra.mxu0 %v4336
        %4431 = vmatprep.subr.bf16.mxu0 0
        %4432 = vmatpush2.bf16.msra.mxu0 %v4335
        %4433 = vmatprep.subr.bf16.mxu0 0
        %4434 = vmatpush2.bf16.msra.mxu0 %v4334
        %4435 = vmatprep.subr.bf16.mxu0 0
        %4436 = vmatpush2.bf16.msra.mxu0 %v4333
        %4437 = vmatprep.subr.bf16.mxu0 0
        %4438 = vmatpush2.bf16.msra.mxu0 %v4332
        %4439 = vmatprep.subr.bf16.mxu0 0
        %4440 = vmatpush2.bf16.msra.mxu0 %v4331
        %4441 = vmatprep.subr.bf16.mxu0 0
        %4442 = vmatpush2.bf16.msra.mxu0 %v4330
        %4443 = vmatprep.mubr.bf16.mxu0 %v4113
        %4444 = vmatmul.mubr.bf16.gmra.mxu0 %v4112
        %v4445 = vpop.f32.mrf.mxu0
        %v4446 = vadd.f32 %v4405, %v4445
        %v4447 = vpop.f32.mrf.mxu0
        %v4448 = vpop.f32.mrf.mxu0
        %v4449 = vadd.f32 %v4408, %v4448
        %v4450 = vpop.f32.mrf.mxu0
        %4451 = vdwg.mxu0
        %v4452 = vmax.f32 %v4446, 1e-10
        %v4453 = vmax.f32 %v4449, 1e-10
        %v4454 = vlog2.pop %v4452
        %v4455 = vmul.f32 %v4454, 0.6931472
        %v4456 = vlog2.pop %v4453
        %v4457 = vmul.f32 %v4456, 0.6931472
        %v4458 = vmul.f32 %v4455, 0.4342945
        %v4459 = vmul.f32 %v4457, 0.4342945
        %v4460 = vmul.f32 %v4458, 10.0
        %v4461 = vmul.f32 %v4459, 10.0
        %v4462 = vld [vmem:[%s4] sm:$0xff]
        %v4463 = vld [vmem:[%s4 + $0x8] sm:$0xff]
        %4464 = vmax.xlane.f32.xlu0 %v4460
        %v4465 = vpop.xlane.xlu0 %4464
        %4466 = vmax.xlane.f32.xlu0 %v4461
        %v4467 = vpop.xlane.xlu0 %4466
        %vm4468 = vcmp.eq.s32.totalorder %v4462, 0
        %vm4469 = vcmp.eq.s32.totalorder %v4463, 0
        %v4470 = vsel %vm4468, %v4465, -inf
        %v4471 = vsel %vm4469, %v4467, -inf
        %vm4472 = vcmask 7168
        %v4473 = vsel %vm4472, %v4470, -inf
        %v4474 = vsel %vm4472, %v4471, -inf
        %v4475 = vmax.f32 %v4473, %v4474
        %4476 = vmax.xlane.f32.xlu0 %v4475
        %v4477 = vpop.xlane.xlu0 %4476
        %v4478 = vrot.slane %v4477, 4
        %v4479 = vmax.f32 %v4477, %v4478
        %v4480 = vrot.slane %v4479, 2
        %v4481 = vmax.f32 %v4479, %v4480
        %v4482 = vrot.slane %v4481, 1
        %v4483 = vmax.f32 %v4481, %v4482
        %s4484 = vtos %v4483
        %s4485 = ssub.f32 %s4484, 80.0
        %v4486 = vstv %s4485
        %v4487 = vsel %vm4468, %v4486, -inf
        %v4488 = vsel %vm4469, %v4486, -inf
        %4490 = vset.pattern.permute.xlu0 0
        %4491 = vperm.xlu0 %4490, %v4487
        %v4492 = vpop.permute.xlu0 %4491
        %4495 = vset.pattern.permute.xlu0 0
        %4496 = vperm.xlu0 %4495, %v4488
        %v4497 = vpop.permute.xlu0 %4496
        %v4499 = vmax.f32 %v4460, %v4492
        %v4500 = vmax.f32 %v4461, %v4497
        %v4501 = vld [vmem:[%s3] sm:$0xff]
        %v4502 = vld [vmem:[%s3 + $0x8] sm:$0xff]
        %v4503 = vld [vmem:[%s3 + $0x10] sm:$0xff]
        %v4504 = vld [vmem:[%s3 + $0x18] sm:$0xff]
        %v4505 = vld [vmem:[%s3 + $0x20] sm:$0xff]
        %v4506 = vld [vmem:[%s3 + $0x28] sm:$0xff]
        %v4507 = vld [vmem:[%s3 + $0x30] sm:$0xff]
        %v4508 = vld [vmem:[%s3 + $0x38] sm:$0xff]
        %v4509 = vld [vmem:[%s3 + $0x40] sm:$0xff]
        %v4510 = vld [vmem:[%s3 + $0x48] sm:$0xff]
        %v4511 = vld [vmem:[%s3 + $0x50] sm:$0xff]
        %v4512 = vld [vmem:[%s3 + $0x58] sm:$0xff]
        %v4513 = vld [vmem:[%s3 + $0x60] sm:$0xff]
        %v4514 = vld [vmem:[%s3 + $0x68] sm:$0xff]
        %v4515 = vld [vmem:[%s3 + $0x70] sm:$0xff]
        %v4516 = vld [vmem:[%s3 + $0x78] sm:$0xff]
        %4517 = vmatprep.subr.mxu0 0.0
        %4518 = vmatpush1.msra.mxu0 %v4516
        %4519 = vmatprep.subr.mxu0 0.0
        %4520 = vmatpush1.msra.mxu0 %v4515
        %4521 = vmatprep.subr.mxu0 0.0
        %4522 = vmatpush1.msra.mxu0 %v4514
        %4523 = vmatprep.subr.mxu0 0.0
        %4524 = vmatpush1.msra.mxu0 %v4513
        %4525 = vmatprep.subr.mxu0 0.0
        %4526 = vmatpush1.msra.mxu0 %v4512
        %4527 = vmatprep.subr.mxu0 0.0
        %4528 = vmatpush1.msra.mxu0 %v4511
        %4529 = vmatprep.subr.mxu0 0.0
        %4530 = vmatpush1.msra.mxu0 %v4510
        %4531 = vmatprep.subr.mxu0 0.0
        %4532 = vmatpush1.msra.mxu0 %v4509
        %4533 = vmatprep.subr.mxu0 0.0
        %4534 = vmatpush1.msra.mxu0 %v4508
        %4535 = vmatprep.subr.mxu0 0.0
        %4536 = vmatpush1.msra.mxu0 %v4507
        %4537 = vmatprep.subr.mxu0 0.0
        %4538 = vmatpush1.msra.mxu0 %v4506
        %4539 = vmatprep.subr.mxu0 0.0
        %4540 = vmatpush1.msra.mxu0 %v4505
        %4541 = vmatprep.subr.mxu0 0.0
        %4542 = vmatpush1.msra.mxu0 %v4504
        %4543 = vmatprep.subr.mxu0 0.0
        %4544 = vmatpush1.msra.mxu0 %v4503
        %4545 = vmatprep.subr.mxu0 0.0
        %4546 = vmatpush1.msra.mxu0 %v4502
        %4547 = vmatprep.subr.mxu0 0.0
        %4548 = vmatpush1.msra.mxu0 %v4501
        %4549 = vmatprep.subr.mxu0 0.0
        %4550 = vmatpush2.msra.mxu0 0.0
        %4551 = vmatprep.subr.mxu0 0.0
        %4552 = vmatpush2.msra.mxu0 0.0
        %4553 = vmatprep.subr.mxu0 0.0
        %4554 = vmatpush2.msra.mxu0 0.0
        %4555 = vmatprep.subr.mxu0 0.0
        %4556 = vmatpush2.msra.mxu0 0.0
        %4557 = vmatprep.subr.mxu0 0.0
        %4558 = vmatpush2.msra.mxu0 0.0
        %4559 = vmatprep.subr.mxu0 0.0
        %4560 = vmatpush2.msra.mxu0 0.0
        %4561 = vmatprep.subr.mxu0 0.0
        %4562 = vmatpush2.msra.mxu0 0.0
        %4563 = vmatprep.subr.mxu0 0.0
        %4564 = vmatpush2.msra.mxu0 0.0
        %4565 = vmatprep.subr.mxu0 0.0
        %4566 = vmatpush2.msra.mxu0 0.0
        %4567 = vmatprep.subr.mxu0 0.0
        %4568 = vmatpush2.msra.mxu0 0.0
        %4569 = vmatprep.subr.mxu0 0.0
        %4570 = vmatpush2.msra.mxu0 0.0
        %4571 = vmatprep.subr.mxu0 0.0
        %4572 = vmatpush2.msra.mxu0 0.0
        %4573 = vmatprep.subr.mxu0 0.0
        %4574 = vmatpush2.msra.mxu0 0.0
        %4575 = vmatprep.subr.mxu0 0.0
        %4576 = vmatpush2.msra.mxu0 0.0
        %4577 = vmatprep.subr.mxu0 0.0
        %4578 = vmatpush2.msra.mxu0 0.0
        %4579 = vmatprep.subr.mxu0 0.0
        %4580 = vmatpush2.msra.mxu0 0.0
        %4581 = vmatprep.mubr.f32.mxu0 0.0
        %4582 = vmatmul.mubr.f32.gmra.mxu0 %v4499
        %v4583 = vpop.f32.mrf.mxu0
        %v4584 = vadd.f32 0.0, %v4583
        %v4585 = vpop.f32.mrf.mxu0
        %4586 = vmatprep.mubr.f32.mxu0 0.0
        %4587 = vmatmul.mubr.f32.gmra.mxu0 %v4500
        %v4588 = vpop.f32.mrf.mxu0
        %v4589 = vadd.f32 0.0, %v4588
        %v4590 = vpop.f32.mrf.mxu0
        %4591 = vdwg.mxu0
        %vm4594 = vcmask 1040384
        %v4595 = vrot.slane %v4584, 7
        %v4596 = vrot.slane %v4589, 7
        %v4597 = vsel %vm4594, %v4595, %v4596
        %v4601 = vsel %vm4594, -inf, %v4595
        %v4602 = vsel %vm4594, %v4596, -inf
        %v4603 = vrot.slane %v4462, 7
        %v4604 = vrot.slane %v4463, 7
        %v4605 = vsel %vm4594, %v4603, %v4604
        %v4606 = vsel %vm4594, 4294967294, %v4603
        %v4607 = vsel %vm4594, %v4604, 4294967294
        %vm4608 = vcmp.eq.s32.totalorder %v4606, %v4462
        %vm4609 = vcmp.eq.s32.totalorder %v4605, %v4463
        %v4610 = vsel %vm4608, 1, 0
        %v4611 = vsel %vm4609, 1, 0
        %4612 = vset.pattern.permute.xlu0 0
        %4613 = vperm.xlu0 %4612, %v4610
        %v4614 = vpop.permute.xlu0 %4613
        %4615 = vset.pattern.permute.xlu0 0
        %4616 = vperm.xlu0 %4615, %v4611
        %v4617 = vpop.permute.xlu0 %4616
        %vm4618 = vcmp.eq.s32.totalorder %v4614, 1
        %vm4619 = vcmp.eq.s32.totalorder %v4617, 1
        %v4620 = vsel %vm4618, %v4601, -inf
        %v4621 = vsel %vm4619, %v4597, -inf
        %v4622 = vmax.f32 %v4584, %v4620
        %v4623 = vmax.f32 %v4589, %v4621
        %vm4624 = vcmask 1041408
        %v4625 = vrot.slane %v4462, 6
        %v4626 = vrot.slane %v4463, 6
        %v4627 = vsel %vm4624, %v4625, %v4626
        %vm4628 = vcmp.eq.s32.totalorder %v4606, %v4625
        %vm4629 = vcmp.eq.s32.totalorder %v4605, %v4627
        %vm4630 = vcmp.eq.s32.totalorder %v4607, %v4626
        %v4631 = vsel %vm4628, 1, 0
        %v4632 = vsel %vm4629, 1, 0
        %v4633 = vsel %vm4630, 1, 0
        %4634 = vset.pattern.permute.xlu0 0
        %4635 = vperm.xlu0 %4634, %v4631
        %v4636 = vpop.permute.xlu0 %4635
        %4637 = vset.pattern.permute.xlu0 0
        %4638 = vperm.xlu0 %4637, %v4632
        %v4639 = vpop.permute.xlu0 %4638
        %4640 = vset.pattern.permute.xlu0 0
        %4641 = vperm.xlu0 %4640, %v4633
        %v4642 = vpop.permute.xlu0 %4641
        %vm4643 = vcmp.eq.s32.totalorder %v4636, 1
        %vm4644 = vcmp.eq.s32.totalorder %v4639, 1
        %vm4645 = vcmp.eq.s32.totalorder %v4642, 1
        %v4646 = vsel %vm4643, %v4601, -inf
        %v4647 = vsel %vm4644, %v4597, -inf
        %v4648 = vsel %vm4645, %v4602, -inf
        %vm4652 = vcmask 1045504
        %v4653 = vrot.slane %v4646, 2
        %v4654 = vrot.slane %v4647, 2
        %v4655 = vsel %vm4652, %v4653, %v4654
        %v4656 = vrot.slane %v4648, 2
        %v4657 = vsel %vm4652, %v4654, %v4656
        %v4660 = vmax.f32 %v4622, %v4655
        %v4661 = vmax.f32 %v4623, %v4657
        %vm4662 = vcmask 105472
        %4663 = vst.msk [vmem:[%s275] sm:$0xff] %vm4662, %v4660
        %4664 = vst.msk [vmem:[%s275 + $0x8] sm:$0xff] %vm4662, %v4661
        %s4665 = smul.u32 2, %s20
        %p4666 = scmp.lt.s32.totalorder %s4665, 3
        %s4667 = scalar_select %p4666, %s4665, 3
        %s4668 = smul.addr %s4667, 8
        %s4669 = scalar_lea.vmem %s5, %s4668
        // Predicated region
        $region53: #{tpu_custom_call.1} parent=39 // pred_check
          %p4670 = pneg %p148
        $region54: #{tpu_custom_call.1} parent=39 // pred_check_branch
          %4672 = sbr.rel (%p4670) target = $region56
        $region55: #{tpu_custom_call.1} parent=39 // pred_region
          %s4673 = smul.u32 2, %s20
        $region56: #{tpu_custom_call.1} parent=39 // pred_fallthru
          _
      $region40: #{tpu_custom_call.1} parent=5 // pred_fallthru
        _
      %p4674 = scmp.le.s32.totalorder 2, %s15
      // Predicated region
      $region57: #{tpu_custom_call.1} parent=5 // pred_check
        %p4675 = pneg %p4674
      $region58: #{tpu_custom_call.1} parent=5 // pred_check_branch
        %4677 = sbr.rel (%p4675) target = $region60
      $region59: #{tpu_custom_call.1} parent=5 // pred_region
        %s4678 = ssub.s32 %s15, 2
        // Predicated region
        $region61: #{tpu_custom_call.1} parent=59 // pred_check
          %p4679 = pneg %p154
        $region62: #{tpu_custom_call.1} parent=59 // pred_check_branch
          %4681 = sbr.rel (%p4679) target = $region64
        $region63: #{tpu_custom_call.1} parent=59 // pred_region
          %s4682 = smul.u32 2, %s21
          %p4683 = scmp.lt.s32.totalorder %s4682, 3
          %s4684 = scalar_select %p4683, %s4682, 3
          %s4685 = smul.addr %s4684, 8
          %s4686 = scalar_lea.vmem %s5, %s4685
        $region64: #{tpu_custom_call.1} parent=59 // pred_fallthru
          _
      $region60: #{tpu_custom_call.1} parent=5 // pred_fallthru
        _
    $region6: #{tpu_custom_call.1} parent=1 // loop_footer
      %s19 = sadd.s32 1, %s15
    $region7: #{tpu_custom_call.1} parent=1 // loop_footer_branch
      %14 = sbr.rel target = $region3
    $region8: #{tpu_custom_call.1} parent=1 // loop_exit
      _
    %4687 = vsyncpa [#allocation3], 1
    %s4688 = scalar_lea.sflag [#allocation3], 1
    %4689 = vsyncpa %s4688, 1
    %4690 = vsyncpa [#allocation5], 1

</llo_original>
